<compile_context>
chip_gen: v7x
topology: tpu7x:2x2x1
jax: 0.10.0
libtpu: 0.0.40
codegen_flags: <defaults>
</compile_context>

<pallas_src>
import jax
import jax.numpy as jnp
from jax.experimental import pallas as pl
from jax.experimental.pallas import tpu as pltpu

NUM_BIGRAMS = 10000
H1 = 512
H2 = 128
OUT = 2
OUT_PAD = 128                       # pad the 2-wide output to a full lane width
_TILE_BYTES = 5120 * 512 * 2        # ~5.25 MB per W1 tile (x2 for double buffering)


def _default_n_grid():
    """Split H1 two ways only on dual-TensorCore parts (v7x); k-only grid elsewhere."""
    try:
        kind = jax.devices()[0].device_kind.lower()
    except Exception:
        return 1
    return 2 if "v7" in kind else 1


def _pick_tiling(n_grid, stream_dtype):
    """tn = H1 / n_grid; tk sized so one W1 tile is ~5.25 MB (multiple of 128)."""
    tn = H1 // n_grid
    itemsize = jnp.dtype(stream_dtype).itemsize
    tk = (_TILE_BYTES // (tn * itemsize)) // 128 * 128
    return tn, max(tk, 128)


def prepare_params(w1, b1, w2, b2, w3, b3, *, stream_dtype=jnp.bfloat16, n_grid=None):
    """One-time weight preparation (hoisted out of the per-call path).

    W1 is transposed to (K, H1), zero-padded along K to a multiple of tk
    (padded rows MUST stay zero for K-padding correctness), cast to
    `stream_dtype`, and re-laid-out as (n_grid, K_pad, tn) so each grid step
    DMAs one contiguous slab.  w3/b3 are padded to 128 output lanes so the
    fused kernel never issues sub-128 masked stores.
    """
    if n_grid is None:
        n_grid = _default_n_grid()
    assert H1 % n_grid == 0
    tn, tk = _pick_tiling(n_grid, stream_dtype)

    K = w1.shape[1]
    k_pad = pl.cdiv(K, tk) * tk
    w1_t = jnp.pad(w1.T.astype(jnp.float32), ((0, k_pad - K), (0, 0)))  # (K_pad, 512)
    w1_tiled = (w1_t.reshape(k_pad, n_grid, tn)
                     .transpose(1, 0, 2)
                     .astype(stream_dtype))                              # (n_grid, K_pad, tn)

    w3_t = jnp.zeros((H2, OUT_PAD), jnp.float32).at[:, :OUT].set(w3.T.astype(jnp.float32))
    b3_p = jnp.zeros((1, OUT_PAD), jnp.float32).at[:, :OUT].set(
        b3.reshape(1, OUT).astype(jnp.float32))

    return {
        "w1": w1_tiled,
        "b1": b1.reshape(1, H1).astype(jnp.float32),
        "w2": w2.T.astype(jnp.float32),              # (512, 128)
        "b2": b2.reshape(1, H2).astype(jnp.float32),
        "w3": w3_t,                                  # (128, 128), cols >= 2 zero
        "b3": b3_p,                                  # (1, 128),   cols >= 2 zero
    }


def _fused_mlp_kernel(x_ref, w1_ref, b1_ref, w2_ref, b2_ref, w3_ref, b3_ref,
                      y_ref, h1_acc):
    """n_grid == 1 path: grid=(k,).  fc1 accumulates in a tiny VMEM scratch;
    fc2 and out (resident weights) are fused into the final k step."""
    k = pl.program_id(0)

    @pl.when(k == 0)
    def _():
        h1_acc[...] = jnp.zeros_like(h1_acc)

    h1_acc[...] += jnp.dot(x_ref[...], w1_ref[...],
                           preferred_element_type=jnp.float32)

    @pl.when(k == pl.num_programs(0) - 1)
    def _():
        h1 = h1_acc[...] + b1_ref[...]
        h2 = jnp.dot(h1, w2_ref[...], preferred_element_type=jnp.float32) + b2_ref[...]
        y_ref[...] = (jnp.dot(h2, w3_ref[...], preferred_element_type=jnp.float32)
                      + b3_ref[...])


def _fc1_kernel(x_ref, w1_ref, b1_ref, h1_ref):
    """n_grid >= 2 path (dual-TC): grid=(n, k).  Accumulate straight into the
    resident f32 output block; add b1 in the final k step.
    NOTE: assumes k is the innermost grid axis — do not reorder the grid."""
    k = pl.program_id(1)

    @pl.when(k == 0)
    def _():
        h1_ref[...] = jnp.zeros_like(h1_ref)

    h1_ref[...] += jnp.dot(x_ref[...], w1_ref[...],
                           preferred_element_type=jnp.float32)

    @pl.when(k == pl.num_programs(1) - 1)
    def _():
        h1_ref[...] += b1_ref[...]


@jax.jit
def simple_mlp_forward(x, params):
    """x: (B, NUM_BIGRAMS) float32; params from prepare_params.  Returns (B, 2) f32."""
    B, K = x.shape
    w1 = params["w1"]
    n_grid, k_pad, tn = w1.shape
    stream_dtype = w1.dtype
    tn_chk, tk = _pick_tiling(n_grid, stream_dtype)
    assert tn_chk == tn and k_pad % tk == 0 and k_pad >= K
    k_grid = k_pad // tk

    # Per-call cost: pad/cast only the tiny activation (B x K_pad <= ~80 KB).
    # NOTE: bf16 default also casts x; use stream_dtype=jnp.float32 in
    # prepare_params if activations need full f32 dynamic range.
    x_p = jnp.pad(x, ((0, 0), (0, k_pad - K))).astype(stream_dtype)

    itemsize = jnp.dtype(stream_dtype).itemsize
    cost = pl.CostEstimate(
        flops=2 * B * (k_pad * H1 + H1 * H2 + H2 * OUT_PAD),
        transcendentals=0,
        bytes_accessed=int((x_p.size + w1.size) * itemsize + (B * H1 + H1) * 4),
    )

    if n_grid == 1:
        # Single-TC config: reduction-only grid, contiguous (tk, 512) W1 tiles,
        # fc2/out fused into the last k step -> a single dispatch.
        y_pad = pl.pallas_call(
            _fused_mlp_kernel,
            out_shape=jax.ShapeDtypeStruct((B, OUT_PAD), jnp.float32),
            grid_spec=pltpu.PrefetchScalarGridSpec(
                num_scalar_prefetch=0,
                grid=(k_grid,),
                in_specs=[
                    pl.BlockSpec((B, tk), lambda k: (0, k)),            # x tile
                    pl.BlockSpec((None, tk, H1), lambda k: (0, k, 0)),  # W1 slab tile
                    pl.BlockSpec((1, H1), lambda k: (0, 0)),            # b1 (resident)
                    pl.BlockSpec((H1, H2), lambda k: (0, 0)),           # w2 (resident)
                    pl.BlockSpec((1, H2), lambda k: (0, 0)),            # b2 (resident)
                    pl.BlockSpec((H2, OUT_PAD), lambda k: (0, 0)),      # w3 (padded)
                    pl.BlockSpec((1, OUT_PAD), lambda k: (0, 0)),       # b3 (padded)
                ],
                out_specs=pl.BlockSpec((B, OUT_PAD), lambda k: (0, 0)),
                scratch_shapes=[pltpu.VMEM((B, H1), jnp.float32)],
            ),
            compiler_params=pltpu.CompilerParams(
                dimension_semantics=("arbitrary",)),
            cost_estimate=cost,
        )(x_p, w1, params["b1"], params["w2"], params["b2"],
          params["w3"], params["b3"])
        return y_pad[:, :OUT]

    # Dual-TC config (v7x): n axis "parallel" across cores; each core streams
    # its own contiguous (K_pad, tn) slab and accumulates into its resident
    # f32 output block.  fc2/out are <0.5% of work -> plain XLA.
    h1 = pl.pallas_call(
        _fc1_kernel,
        out_shape=jax.ShapeDtypeStruct((B, H1), jnp.float32),
        grid_spec=pltpu.PrefetchScalarGridSpec(
            num_scalar_prefetch=0,
            grid=(n_grid, k_grid),
            in_specs=[
                pl.BlockSpec((B, tk), lambda n, k: (0, k)),            # x tile
                pl.BlockSpec((None, tk, tn), lambda n, k: (n, k, 0)),  # W1 slab tile
                pl.BlockSpec((1, tn), lambda n, k: (0, n)),            # b1 slice
            ],
            out_specs=pl.BlockSpec((B, tn), lambda n, k: (0, n)),
        ),
        compiler_params=pltpu.CompilerParams(
            dimension_semantics=("parallel", "arbitrary")),
        cost_estimate=cost,
    )(x_p, w1, params["b1"])

    h2 = jnp.dot(h1, params["w2"], preferred_element_type=jnp.float32) + params["b2"]
    y = (jnp.dot(h2, params["w3"][:, :OUT], preferred_element_type=jnp.float32)
         + params["b3"][:, :OUT])
    return y


def _init_linear(key, out_features, in_features):
    # Deterministic init mimicking torch.nn.Linear: U(-1/sqrt(in), 1/sqrt(in)).
    kw, kb = jax.random.split(key)
    bound = 1.0 / (in_features ** 0.5)
    w = jax.random.uniform(kw, (out_features, in_features), jnp.float32, -bound, bound)
    b = jax.random.uniform(kb, (out_features,), jnp.float32, -bound, bound)
    return w, b


if __name__ == "__main__":
    import numpy as np

    key = jax.random.PRNGKey(0)
    kx, k1, k2, k3 = jax.random.split(key, 4)

    batch = 2
    x = jax.random.normal(kx, (batch, NUM_BIGRAMS), jnp.float32)
    w1, b1 = _init_linear(k1, H1, NUM_BIGRAMS)
    w2, b2 = _init_linear(k2, H2, H1)
    w3, b3 = _init_linear(k3, OUT, H2)

    # Float64 host reference == original PyTorch module semantics.
    xn = np.asarray(x, np.float64)
    h1n = xn @ np.asarray(w1, np.float64).T + np.asarray(b1, np.float64)
    h2n = h1n @ np.asarray(w2, np.float64).T + np.asarray(b2, np.float64)
    y_ref = h2n @ np.asarray(w3, np.float64).T + np.asarray(b3, np.float64)

    # 1) f32-stream path (f32-faithful module numerics), default grid layout.
    params_f32 = prepare_params(w1, b1, w2, b2, w3, b3, stream_dtype=jnp.float32)
    y_f32 = jax.block_until_ready(simple_mlp_forward(x, params_f32))
    assert y_f32.shape == (batch, OUT)
    assert np.allclose(np.asarray(y_f32, np.float64), y_ref, atol=5e-3, rtol=5e-3)

    # 2) Default fast path: bf16 stream, f32 MXU accumulation (half the HBM traffic).
    params_bf16 = prepare_params(w1, b1, w2, b2, w3, b3)
    y_bf16 = jax.block_until_ready(simple_mlp_forward(x, params_bf16))
    assert y_bf16.shape == (batch, OUT)
    assert np.allclose(np.asarray(y_bf16, np.float64), y_ref, atol=3e-2, rtol=3e-2)

    # 3) Dual-TensorCore (v7x-style) layout: 2-way "parallel" H1 split with
    #    contiguous per-core slabs; also runs (serialized) on single-TC chips.
    params_v7 = prepare_params(w1, b1, w2, b2, w3, b3, n_grid=2)
    y_v7 = jax.block_until_ready(simple_mlp_forward(x, params_v7))
    assert y_v7.shape == (batch, OUT)
    assert np.allclose(np.asarray(y_v7, np.float64), y_ref, atol=3e-2, rtol=3e-2)

    print("KERNEL_OK")
</pallas_src>

<mosaic_0001>
module attributes {stable_mosaic.version = 11 : i64} {
  func.func @_fused_mlp_kernel(%arg0: i32, %arg1: memref<2x2560xf32, #tpu.memory_space<vmem>>, %arg2: memref<1x2560x512xf32, #tpu.memory_space<vmem>>, %arg3: memref<1x512xf32, #tpu.memory_space<vmem>>, %arg4: memref<512x128xf32, #tpu.memory_space<vmem>>, %arg5: memref<1x128xf32, #tpu.memory_space<vmem>>, %arg6: memref<128x128xf32, #tpu.memory_space<vmem>>, %arg7: memref<1x128xf32, #tpu.memory_space<vmem>>, %arg8: memref<2x128xf32, #tpu.memory_space<vmem>>, %arg9: memref<2x512xf32, #tpu.memory_space<vmem>>) attributes {dimension_semantics = [#tpu.dimension_semantics<arbitrary>], iteration_bounds = array<i64: 4>, scalar_prefetch = 0 : i64, scratch_operands = 1 : i64, tpu.core_type = #tpu.core_type<tc>, window_params = [{transform_indices = @transform_0, window_bounds = array<i64: 2, 2560>}, {transform_indices = @transform_1, window_bounds = array<i64: 1, 2560, 512>}, {pipeline_mode = #tpu.pipeline_mode<synchronous>, transform_indices = @transform_2, window_bounds = array<i64: 1, 512>}, {pipeline_mode = #tpu.pipeline_mode<synchronous>, transform_indices = @transform_3, window_bounds = array<i64: 512, 128>}, {pipeline_mode = #tpu.pipeline_mode<synchronous>, transform_indices = @transform_4, window_bounds = array<i64: 1, 128>}, {pipeline_mode = #tpu.pipeline_mode<synchronous>, transform_indices = @transform_5, window_bounds = array<i64: 128, 128>}, {pipeline_mode = #tpu.pipeline_mode<synchronous>, transform_indices = @transform_6, window_bounds = array<i64: 1, 128>}, {pipeline_mode = #tpu.pipeline_mode<synchronous>, transform_indices = @transform_7, window_bounds = array<i64: 2, 128>}]} {
    %c0_i32 = arith.constant 0 : i32
    %0 = arith.cmpi eq, %arg0, %c0_i32 : i32
    %1 = arith.extui %0 : i1 to i32
    %c0_i32_0 = arith.constant 0 : i32
    %2 = arith.cmpi ne, %1, %c0_i32_0 : i32
    scf.if %2 {
      %cst_10 = arith.constant 0.000000e+00 : f32
      %13 = vector.broadcast %cst_10 : f32 to vector<2x512xf32>
      %c0_11 = arith.constant 0 : index
      %c0_12 = arith.constant 0 : index
      %14 = vector.load %arg9[%c0_11, %c0_12] : memref<2x512xf32, #tpu.memory_space<vmem>>, vector<2x512xf32>
      tpu.vector_store %arg9[%c0_11, %c0_12], %13 {strides = array<i32>} : memref<2x512xf32, #tpu.memory_space<vmem>>, vector<2x512xf32>,
    } else {
    }
    %c0 = arith.constant 0 : index
    %c0_1 = arith.constant 0 : index
    %3 = vector.load %arg9[%c0, %c0_1] : memref<2x512xf32, #tpu.memory_space<vmem>>, vector<2x512xf32>
    %c0_2 = arith.constant 0 : index
    %c0_3 = arith.constant 0 : index
    %4 = vector.load %arg1[%c0_2, %c0_3] : memref<2x2560xf32, #tpu.memory_space<vmem>>, vector<2x2560xf32>
    %c0_4 = arith.constant 0 : index
    %c0_5 = arith.constant 0 : index
    %c0_6 = arith.constant 0 : index
    %5 = vector.load %arg2[%c0_4, %c0_5, %c0_6] : memref<1x2560x512xf32, #tpu.memory_space<vmem>>, vector<1x2560x512xf32>
    %6 = vector.shape_cast %5 : vector<1x2560x512xf32> to vector<2560x512xf32>
    %cst = arith.constant dense<0.000000e+00> : vector<2x512xf32>
    %7 = tpu.matmul %4, %6, %cst {dimension_numbers = #tpu.dot_dimension_numbers<[1], [0], [0], [1], [0, 0, 1, 1], [], []>} : vector<2x2560xf32>, vector<2560x512xf32>, vector<2x512xf32> -> vector<2x512xf32>
    %8 = arith.addf %3, %7 : vector<2x512xf32>
    %c0_7 = arith.constant 0 : index
    %c0_8 = arith.constant 0 : index
    %9 = vector.load %arg9[%c0_7, %c0_8] : memref<2x512xf32, #tpu.memory_space<vmem>>, vector<2x512xf32>
    tpu.vector_store %arg9[%c0_7, %c0_8], %8 {strides = array<i32>} : memref<2x512xf32, #tpu.memory_space<vmem>>, vector<2x512xf32>,
    %c3_i32 = arith.constant 3 : i32
    %10 = arith.cmpi eq, %arg0, %c3_i32 : i32
    %11 = arith.extui %10 : i1 to i32
    %c0_i32_9 = arith.constant 0 : i32
    %12 = arith.cmpi ne, %11, %c0_i32_9 : i32
    scf.if %12 {
      %c0_10 = arith.constant 0 : index
      %c0_11 = arith.constant 0 : index
      %13 = vector.load %arg9[%c0_10, %c0_11] : memref<2x512xf32, #tpu.memory_space<vmem>>, vector<2x512xf32>
      %c0_12 = arith.constant 0 : index
      %c0_13 = arith.constant 0 : index
      %14 = vector.load %arg3[%c0_12, %c0_13] : memref<1x512xf32, #tpu.memory_space<vmem>>, vector<1x512xf32>
      %15 = vector.broadcast %14 : vector<1x512xf32> to vector<2x512xf32>
      %16 = arith.addf %13, %15 : vector<2x512xf32>
      %c0_14 = arith.constant 0 : index
      %c0_15 = arith.constant 0 : index
      %17 = vector.load %arg4[%c0_14, %c0_15] : memref<512x128xf32, #tpu.memory_space<vmem>>, vector<512x128xf32>
      %cst_16 = arith.constant dense<0.000000e+00> : vector<2x128xf32>
      %18 = tpu.matmul %16, %17, %cst_16 {dimension_numbers = #tpu.dot_dimension_numbers<[1], [0], [0], [1], [0, 0, 1, 1], [], []>} : vector<2x512xf32>, vector<512x128xf32>, vector<2x128xf32> -> vector<2x128xf32>
      %c0_17 = arith.constant 0 : index
      %c0_18 = arith.constant 0 : index
      %19 = vector.load %arg5[%c0_17, %c0_18] : memref<1x128xf32, #tpu.memory_space<vmem>>, vector<1x128xf32>
      %20 = vector.broadcast %19 : vector<1x128xf32> to vector<2x128xf32>
      %21 = arith.addf %18, %20 : vector<2x128xf32>
      %c0_19 = arith.constant 0 : index
      %c0_20 = arith.constant 0 : index
      %22 = vector.load %arg6[%c0_19, %c0_20] : memref<128x128xf32, #tpu.memory_space<vmem>>, vector<128x128xf32>
      %cst_21 = arith.constant dense<0.000000e+00> : vector<2x128xf32>
      %23 = tpu.matmul %21, %22, %cst_21 {dimension_numbers = #tpu.dot_dimension_numbers<[1], [0], [0], [1], [0, 0, 1, 1], [], []>} : vector<2x128xf32>, vector<128x128xf32>, vector<2x128xf32> -> vector<2x128xf32>
      %c0_22 = arith.constant 0 : index
      %c0_23 = arith.constant 0 : index
      %24 = vector.load %arg7[%c0_22, %c0_23] : memref<1x128xf32, #tpu.memory_space<vmem>>, vector<1x128xf32>
      %25 = vector.broadcast %24 : vector<1x128xf32> to vector<2x128xf32>
      %26 = arith.addf %23, %25 : vector<2x128xf32>
      %c0_24 = arith.constant 0 : index
      %c0_25 = arith.constant 0 : index
      %27 = vector.load %arg8[%c0_24, %c0_25] : memref<2x128xf32, #tpu.memory_space<vmem>>, vector<2x128xf32>
      tpu.vector_store %arg8[%c0_24, %c0_25], %26 {strides = array<i32>} : memref<2x128xf32, #tpu.memory_space<vmem>>, vector<2x128xf32>,
    } else {
    }
    return
  }
  func.func @transform_0(%arg0: i32) -> (i32, i32) {
    %c0_i32 = arith.constant 0 : i32
    %c0_i32_0 = arith.constant 0 : i32
    return %c0_i32, %arg0 : i32, i32
  }
  func.func @transform_1(%arg0: i32) -> (i32, i32, i32) {
    %c0_i32 = arith.constant 0 : i32
    %c0_i32_0 = arith.constant 0 : i32
    %c0_i32_1 = arith.constant 0 : i32
    return %c0_i32, %arg0, %c0_i32_0 : i32, i32, i32
  }
  func.func @transform_2(%arg0: i32) -> (i32, i32) {
    %c0_i32 = arith.constant 0 : i32
    %c0_i32_0 = arith.constant 0 : i32
    %c0_i32_1 = arith.constant 0 : i32
    return %c0_i32, %c0_i32_0 : i32, i32
  }
  func.func @transform_3(%arg0: i32) -> (i32, i32) {
    %c0_i32 = arith.constant 0 : i32
    %c0_i32_0 = arith.constant 0 : i32
    %c0_i32_1 = arith.constant 0 : i32
    return %c0_i32, %c0_i32_0 : i32, i32
  }
  func.func @transform_4(%arg0: i32) -> (i32, i32) {
    %c0_i32 = arith.constant 0 : i32
    %c0_i32_0 = arith.constant 0 : i32
    %c0_i32_1 = arith.constant 0 : i32
    return %c0_i32, %c0_i32_0 : i32, i32
  }
  func.func @transform_5(%arg0: i32) -> (i32, i32) {
    %c0_i32 = arith.constant 0 : i32
    %c0_i32_0 = arith.constant 0 : i32
    %c0_i32_1 = arith.constant 0 : i32
    return %c0_i32, %c0_i32_0 : i32, i32
  }
  func.func @transform_6(%arg0: i32) -> (i32, i32) {
    %c0_i32 = arith.constant 0 : i32
    %c0_i32_0 = arith.constant 0 : i32
    %c0_i32_1 = arith.constant 0 : i32
    return %c0_i32, %c0_i32_0 : i32, i32
  }
  func.func @transform_7(%arg0: i32) -> (i32, i32) {
    %c0_i32 = arith.constant 0 : i32
    %c0_i32_0 = arith.constant 0 : i32
    %c0_i32_1 = arith.constant 0 : i32
    return %c0_i32, %c0_i32_0 : i32, i32
  }
}

</mosaic_0001>

<llo_original>
// kernel: simple_mlp_forward.1
$region0: #{simple_mlp_forward.1}
  #allocation0 [shape = 'u32[]', space=smem, size = 0x4, offset = 0x4, fixed_abs, tag = 'smem constant byte address 0x4 - core index']
  #allocation1 [shape = 'u32[144,128]{1,0:T(1,128)}', space=vmem, size = 0x12000, scoped, tag = 'internal scratch']
  #allocation2 [shape = 'f32[2,512]{1,0:T(2,128)}', space=vmem, size = 0x1000, scoped, tag = 'scratch operand']
  %s0 = inlined_call_operand.vmem [shape: f32[2,10240], index: 0, kind: input, shape index: {}]
  %s1 = inlined_call_operand.hbm [shape: f32[1,10240,512], index: 1, kind: input, shape index: {}]
  %s2 = inlined_call_operand.hbm [shape: f32[1,512], index: 2, kind: input, shape index: {}]
  %s3 = inlined_call_operand.hbm [shape: f32[512,128], index: 3, kind: input, shape index: {}]
  %s4 = inlined_call_operand.hbm [shape: f32[1,128], index: 4, kind: input, shape index: {}]
  %s5 = inlined_call_operand.hbm [shape: f32[128,128], index: 5, kind: input, shape index: {}]
  %s6 = inlined_call_operand.hbm [shape: f32[1,128], index: 6, kind: input, shape index: {}]
  %s7 = inlined_call_operand.hbm [shape: f32[2,128], index: 7, kind: output, shape index: {}]
  %s8 = sld [smem:[#allocation0]]
  $region93: #{simple_mlp_forward.1} parent=0
    _
  %s10 = ssub.s32 1, %s8
  %s11 = scalar_select 0, %s10, %s8
  $region1: #{simple_mlp_forward.1} parent=0
    #allocation3 [shape = 'u8[10485760]{0}', space=vmem, size = 0xa00000, scoped, tag = 'input window, operand 1']
    #allocation4 [shape = 's32[2]{0}', space=sflag, size = 0x8, scoped, tag = 'scoped memory for simple_mlp_forward.1']
    #allocation5 [shape = 's32[2]{0}', space=sflag, size = 0x8, scoped, tag = 'scoped memory for simple_mlp_forward.1']
    #allocation6 [shape = 'u8[2048]{0}', space=vmem, size = 0x800, scoped, tag = 'input window, operand 2, single buffered']
    #allocation7 [shape = 's32[1]{0}', space=sflag, size = 0x4, scoped, tag = 'scoped memory for simple_mlp_forward.1']
    #allocation8 [shape = 'u8[262144]{0}', space=vmem, size = 0x40000, scoped, tag = 'input window, operand 3, single buffered']
    #allocation9 [shape = 'u8[512]{0}', space=vmem, size = 0x400, scoped, tag = 'input window, operand 4, single buffered']
    #allocation10 [shape = 's32[1]{0}', space=sflag, size = 0x4, scoped, tag = 'scoped memory for simple_mlp_forward.1']
    #allocation11 [shape = 'u8[65536]{0}', space=vmem, size = 0x10000, scoped, tag = 'input window, operand 5, single buffered']
    #allocation12 [shape = 'u8[512]{0}', space=vmem, size = 0x400, scoped, tag = 'input window, operand 6, single buffered']
    #allocation13 [shape = 's32[1]{0}', space=sflag, size = 0x4, scoped, tag = 'scoped memory for simple_mlp_forward.1']
    #allocation14 [shape = 'u8[1024]{0}', space=vmem, size = 0x400, scoped, tag = 'output window, operand 0, single buffered']
    %12 = vsyncpa [#allocation4], 0
    %s13 = scalar_lea.sflag [#allocation4], 1
    %14 = vsyncpa %s13, 0
    %15 = vsyncpa [#allocation7], 0
    %16 = vsyncpa [#allocation10], 0
    %17 = vsyncpa [#allocation13], 0
    %18 = vsyncpa [#allocation5], 0
    loop: start=0, step=1, limit=6
    $region2: #{simple_mlp_forward.1} parent=1 // loop_pre_header
      _
    $region3: #{simple_mlp_forward.1} parent=1 // loop_header
      %s20 = sphi 0, %s24
      %p21 = scmp.ge.s32.totalorder %s20, 6
      %s30 = sphi 0, %s32
      %s33 = sphi 0, %s30
      %s34 = sphi 0, %s33
      %s50 = sphi 0, %s34
      %s56 = sphi 0, %s58
      %s59 = sphi 0, %s56
      %s60 = sphi 0, %s59
      %s76 = sphi 0, %s60
      %s80 = sphi 0, %s80
      %s82 = sphi 0, %s80
      %s83 = sphi 0, %s82
      %s97 = sphi 0, %s83
      %s101 = sphi 0, %s101
      %s103 = sphi 0, %s101
      %s104 = sphi 0, %s103
      %s118 = sphi 0, %s104
      %s122 = sphi 0, %s122
      %s124 = sphi 0, %s122
      %s125 = sphi 0, %s124
      %s139 = sphi 0, %s125
      %s143 = sphi 0, %s143
      %s145 = sphi 0, %s143
      %s146 = sphi 0, %s145
      %s160 = sphi 0, %s146
      %s164 = sphi 0, %s164
      %s166 = sphi 0, %s164
      %s167 = sphi 0, %s166
      %s181 = sphi 0, %s167
      %s185 = sphi 0, %s185
      %s187 = sphi 0, %s185
      %s188 = sphi 0, %s187
      %s202 = sphi 0, %s188
    $region4: #{simple_mlp_forward.1} parent=1 // loop_header_branch
      %23 = sbr.rel (%p21) target = $region8
    $region5: #{simple_mlp_forward.1} parent=1 // loop_body
      %s25 = ssub.s32 %s20, 1
      %s26 = ssub.s32 %s20, 2
      %s27 = sadd.s32 %s20, 1
      %s28 = ssub.s32 %s20, %s27
      %p29 = scmp.eq.s32.totalorder %s28, 0
      %s31 = sadd.s32 %s30, 1
      %s32 = scalar_select %p29, %s30, %s31
      %p35 = pneg %p29
      %p36 = scmp.eq.s32.totalorder %s20, 3
      %p37 = por %p35, %p36
      %p38 = scmp.ne.s32.totalorder %s30, %s33
      %p39 = scmp.eq.s32.totalorder %s20, 0
      %p40 = por %p38, %p39
      %p41 = scmp.ne.s32.totalorder %s30, %s33
      %p42 = scmp.eq.s32.totalorder %s25, 3
      %p43 = por %p41, %p42
      %p44 = scmp.ne.s32.totalorder %s33, %s34
      %p45 = scmp.eq.s32.totalorder %s25, 0
      %p46 = por %p44, %p45
      %p47 = scmp.ne.s32.totalorder %s33, %s34
      %p48 = scmp.eq.s32.totalorder %s26, 3
      %p49 = por %p47, %p48
      %p51 = scmp.ne.s32.totalorder %s34, %s50
      %p52 = scmp.eq.s32.totalorder %s26, 0
      %p53 = por %p51, %p52
      %s54 = ssub.s32 %s20, %s27
      %p55 = scmp.eq.s32.totalorder %s54, 0
      %s57 = sadd.s32 %s56, 1
      %s58 = scalar_select %p55, %s56, %s57
      %p61 = pneg %p55
      %p62 = scmp.eq.s32.totalorder %s20, 3
      %p63 = por %p61, %p62
      %p64 = scmp.ne.s32.totalorder %s56, %s59
      %p65 = scmp.eq.s32.totalorder %s20, 0
      %p66 = por %p64, %p65
      %p67 = scmp.ne.s32.totalorder %s56, %s59
      %p68 = scmp.eq.s32.totalorder %s25, 3
      %p69 = por %p67, %p68
      %p70 = scmp.ne.s32.totalorder %s59, %s60
      %p71 = scmp.eq.s32.totalorder %s25, 0
      %p72 = por %p70, %p71
      %p73 = scmp.ne.s32.totalorder %s59, %s60
      %p74 = scmp.eq.s32.totalorder %s26, 3
      %p75 = por %p73, %p74
      %p77 = scmp.ne.s32.totalorder %s60, %s76
      %p78 = scmp.eq.s32.totalorder %s26, 0
      %p79 = por %p77, %p78
      %s81 = sadd.s32 %s80, 1
      %p84 = scmp.eq.s32.totalorder %s20, 3
      %p85 = scmp.ne.s32.totalorder %s80, %s82
      %p86 = scmp.eq.s32.totalorder %s20, 0
      %p87 = por %p85, %p86
      %p88 = scmp.ne.s32.totalorder %s80, %s82
      %p89 = scmp.eq.s32.totalorder %s25, 3
      %p90 = por %p88, %p89
      %p91 = scmp.ne.s32.totalorder %s82, %s83
      %p92 = scmp.eq.s32.totalorder %s25, 0
      %p93 = por %p91, %p92
      %p94 = scmp.ne.s32.totalorder %s82, %s83
      %p95 = scmp.eq.s32.totalorder %s26, 3
      %p96 = por %p94, %p95
      %p98 = scmp.ne.s32.totalorder %s83, %s97
      %p99 = scmp.eq.s32.totalorder %s26, 0
      %p100 = por %p98, %p99
      %s102 = sadd.s32 %s101, 1
      %p105 = scmp.eq.s32.totalorder %s20, 3
      %p106 = scmp.ne.s32.totalorder %s101, %s103
      %p107 = scmp.eq.s32.totalorder %s20, 0
      %p108 = por %p106, %p107
      %p109 = scmp.ne.s32.totalorder %s101, %s103
      %p110 = scmp.eq.s32.totalorder %s25, 3
      %p111 = por %p109, %p110
      %p112 = scmp.ne.s32.totalorder %s103, %s104
      %p113 = scmp.eq.s32.totalorder %s25, 0
      %p114 = por %p112, %p113
      %p115 = scmp.ne.s32.totalorder %s103, %s104
      %p116 = scmp.eq.s32.totalorder %s26, 3
      %p117 = por %p115, %p116
      %p119 = scmp.ne.s32.totalorder %s104, %s118
      %p120 = scmp.eq.s32.totalorder %s26, 0
      %p121 = por %p119, %p120
      %s123 = sadd.s32 %s122, 1
      %p126 = scmp.eq.s32.totalorder %s20, 3
      %p127 = scmp.ne.s32.totalorder %s122, %s124
      %p128 = scmp.eq.s32.totalorder %s20, 0
      %p129 = por %p127, %p128
      %p130 = scmp.ne.s32.totalorder %s122, %s124
      %p131 = scmp.eq.s32.totalorder %s25, 3
      %p132 = por %p130, %p131
      %p133 = scmp.ne.s32.totalorder %s124, %s125
      %p134 = scmp.eq.s32.totalorder %s25, 0
      %p135 = por %p133, %p134
      %p136 = scmp.ne.s32.totalorder %s124, %s125
      %p137 = scmp.eq.s32.totalorder %s26, 3
      %p138 = por %p136, %p137
      %p140 = scmp.ne.s32.totalorder %s125, %s139
      %p141 = scmp.eq.s32.totalorder %s26, 0
      %p142 = por %p140, %p141
      %s144 = sadd.s32 %s143, 1
      %p147 = scmp.eq.s32.totalorder %s20, 3
      %p148 = scmp.ne.s32.totalorder %s143, %s145
      %p149 = scmp.eq.s32.totalorder %s20, 0
      %p150 = por %p148, %p149
      %p151 = scmp.ne.s32.totalorder %s143, %s145
      %p152 = scmp.eq.s32.totalorder %s25, 3
      %p153 = por %p151, %p152
      %p154 = scmp.ne.s32.totalorder %s145, %s146
      %p155 = scmp.eq.s32.totalorder %s25, 0
      %p156 = por %p154, %p155
      %p157 = scmp.ne.s32.totalorder %s145, %s146
      %p158 = scmp.eq.s32.totalorder %s26, 3
      %p159 = por %p157, %p158
      %p161 = scmp.ne.s32.totalorder %s146, %s160
      %p162 = scmp.eq.s32.totalorder %s26, 0
      %p163 = por %p161, %p162
      %s165 = sadd.s32 %s164, 1
      %p168 = scmp.eq.s32.totalorder %s20, 3
      %p169 = scmp.ne.s32.totalorder %s164, %s166
      %p170 = scmp.eq.s32.totalorder %s20, 0
      %p171 = por %p169, %p170
      %p172 = scmp.ne.s32.totalorder %s164, %s166
      %p173 = scmp.eq.s32.totalorder %s25, 3
      %p174 = por %p172, %p173
      %p175 = scmp.ne.s32.totalorder %s166, %s167
      %p176 = scmp.eq.s32.totalorder %s25, 0
      %p177 = por %p175, %p176
      %p178 = scmp.ne.s32.totalorder %s166, %s167
      %p179 = scmp.eq.s32.totalorder %s26, 3
      %p180 = por %p178, %p179
      %p182 = scmp.ne.s32.totalorder %s167, %s181
      %p183 = scmp.eq.s32.totalorder %s26, 0
      %p184 = por %p182, %p183
      %s186 = sadd.s32 %s185, 1
      %p189 = scmp.eq.s32.totalorder %s20, 3
      %p190 = scmp.ne.s32.totalorder %s185, %s187
      %p191 = scmp.eq.s32.totalorder %s20, 0
      %p192 = por %p190, %p191
      %p193 = scmp.ne.s32.totalorder %s185, %s187
      %p194 = scmp.eq.s32.totalorder %s25, 3
      %p195 = por %p193, %p194
      %p196 = scmp.ne.s32.totalorder %s187, %s188
      %p197 = scmp.eq.s32.totalorder %s25, 0
      %p198 = por %p196, %p197
      %p199 = scmp.ne.s32.totalorder %s187, %s188
      %p200 = scmp.eq.s32.totalorder %s26, 3
      %p201 = por %p199, %p200
      %p203 = scmp.ne.s32.totalorder %s188, %s202
      %p204 = scmp.eq.s32.totalorder %s26, 0
      %p205 = por %p203, %p204
      %p206 = scmp.le.s32.totalorder 1, %s20
      %p207 = scmp.lt.s32.totalorder %s20, 5
      %p208 = pnand %p206, %p207
      %p209 = pneg %p208
      // Predicated region
      $region9: #{simple_mlp_forward.1} parent=5 // pred_check
        _
      $region10: #{simple_mlp_forward.1} parent=5 // pred_check_branch
        %211 = sbr.rel (%p208) target = $region12
      $region11: #{simple_mlp_forward.1} parent=5 // pred_region
        %s212 = ssub.s32 %s20, 1
        // Predicated region
        $region13: #{simple_mlp_forward.1} parent=11 // pred_check
          %p213 = pneg %p93
        $region14: #{simple_mlp_forward.1} parent=11 // pred_check_branch
          %215 = sbr.rel (%p213) target = $region16
        $region15: #{simple_mlp_forward.1} parent=11 // pred_region
          %s217 = ssub.s32 64, 64
          %218 = vsyncadd [#allocation7], %s217
          %s220 = sshll.u32 [#allocation6], 4
          %s221 = int_to_ptr.vmem [resolvable:$true] %s220
          %223 = dma.hbm_to_vmem [thread:$0]  %s2, 64, %s221, [#allocation7]
        $region16: #{simple_mlp_forward.1} parent=11 // pred_fallthru
          _
        // Predicated region
        $region17: #{simple_mlp_forward.1} parent=11 // pred_check
          %p224 = pneg %p114
        $region18: #{simple_mlp_forward.1} parent=11 // pred_check_branch
          %226 = sbr.rel (%p224) target = $region20
        $region19: #{simple_mlp_forward.1} parent=11 // pred_region
          %s228 = ssub.s32 8192, 8192
          %229 = vsyncadd [#allocation7], %s228
          %s230 = sshll.u32 [#allocation8], 4
          %s231 = int_to_ptr.vmem [resolvable:$true] %s230
          %236 = dma.hbm_to_vmem [thread:$0]  %s3, 8192, %s231, [#allocation7], 128, 128, 8
        $region20: #{simple_mlp_forward.1} parent=11 // pred_fallthru
          _
        // Predicated region
        $region21: #{simple_mlp_forward.1} parent=11 // pred_check
          %p237 = pneg %p135
        $region22: #{simple_mlp_forward.1} parent=11 // pred_check_branch
          %239 = sbr.rel (%p237) target = $region24
        $region23: #{simple_mlp_forward.1} parent=11 // pred_region
          %s241 = ssub.s32 16, 16
          %242 = vsyncadd [#allocation10], %s241
          %s244 = sshll.u32 [#allocation9], 4
          %s245 = int_to_ptr.vmem [resolvable:$true] %s244
          %247 = dma.hbm_to_vmem [thread:$0]  %s4, 16, %s245, [#allocation10]
        $region24: #{simple_mlp_forward.1} parent=11 // pred_fallthru
          _
        // Predicated region
        $region25: #{simple_mlp_forward.1} parent=11 // pred_check
          %p248 = pneg %p156
        $region26: #{simple_mlp_forward.1} parent=11 // pred_check_branch
          %250 = sbr.rel (%p248) target = $region28
        $region27: #{simple_mlp_forward.1} parent=11 // pred_region
          %s252 = ssub.s32 2048, 2048
          %253 = vsyncadd [#allocation10], %s252
          %s254 = sshll.u32 [#allocation11], 4
          %s255 = int_to_ptr.vmem [resolvable:$true] %s254
          %260 = dma.hbm_to_vmem [thread:$0]  %s5, 2048, %s255, [#allocation10], 128, 128, 8
        $region28: #{simple_mlp_forward.1} parent=11 // pred_fallthru
          _
        // Predicated region
        $region29: #{simple_mlp_forward.1} parent=11 // pred_check
          %p261 = pneg %p177
        $region30: #{simple_mlp_forward.1} parent=11 // pred_check_branch
          %263 = sbr.rel (%p261) target = $region32
        $region31: #{simple_mlp_forward.1} parent=11 // pred_region
          %s265 = ssub.s32 16, 16
          %266 = vsyncadd [#allocation13], %s265
          %s268 = sshll.u32 [#allocation12], 4
          %s269 = int_to_ptr.vmem [resolvable:$true] %s268
          %271 = dma.hbm_to_vmem [thread:$0]  %s6, 16, %s269, [#allocation13]
        $region32: #{simple_mlp_forward.1} parent=11 // pred_fallthru
          _
      $region12: #{simple_mlp_forward.1} parent=5 // pred_fallthru
        _
      %p272 = scmp.lt.s32.totalorder %s20, 4
      // Predicated region
      $region33: #{simple_mlp_forward.1} parent=5 // pred_check
        %p273 = pneg %p272
      $region34: #{simple_mlp_forward.1} parent=5 // pred_check_branch
        %275 = sbr.rel (%p273) target = $region36
      $region35: #{simple_mlp_forward.1} parent=5 // pred_region
        // Predicated region
        $region37: #{simple_mlp_forward.1} parent=35 // pred_check
          %p276 = pneg %p40
        $region38: #{simple_mlp_forward.1} parent=35 // pred_check_branch
          %278 = sbr.rel (%p276) target = $region40
        $region39: #{simple_mlp_forward.1} parent=35 // pred_region
          %s279 = smul.u32 20, %s20
          %p280 = scmp.lt.s32.totalorder %s279, 79
          %s281 = scalar_select %p280, %s279, 79
          %s282 = smul.addr %s281, 2
          %s283 = scalar_lea.vmem %s0, %s282
          %s284 = smul.u32 20, %s20
        $region40: #{simple_mlp_forward.1} parent=35 // pred_fallthru
          _
        // Predicated region
        $region41: #{simple_mlp_forward.1} parent=35 // pred_check
          %p285 = pneg %p66
        $region42: #{simple_mlp_forward.1} parent=35 // pred_check_branch
          %287 = sbr.rel (%p285) target = $region44
        $region43: #{simple_mlp_forward.1} parent=35 // pred_region
          %s288 = sand.u32 %s56, 1
          %s289 = scalar_lea.sflag [#allocation4], %s288
          %s290 = sand.u32 %s56, 1
          %s291 = smul.addr %s290, 10240
          %s292 = scalar_lea.vmem [#allocation3], %s291
          %s293 = smul.u32 320, %s20
          %s295 = ssub.s32 163840, 163840
          %296 = vsyncadd %s289, %s295
          %s297 = smul.addr %s293, 4
          %s298 = smul.addr %s297, 128
          %s299 = scalar_lea.hbm %s1, %s298
          %s300 = sshll.u32 %s292, 4
          %s301 = int_to_ptr.vmem [resolvable:$true] %s300
          %306 = dma.hbm_to_vmem [thread:$0]  %s299, 163840, %s301, %s289, 512, 512, 32
        $region44: #{simple_mlp_forward.1} parent=35 // pred_fallthru
          _
      $region36: #{simple_mlp_forward.1} parent=5 // pred_fallthru
        _
      %p307 = scmp.le.s32.totalorder 1, %s20
      %p308 = scmp.lt.s32.totalorder %s20, 5
      %p309 = pnand %p307, %p308
      %p310 = pneg %p309
      // Predicated region
      $region45: #{simple_mlp_forward.1} parent=5 // pred_check
        _
      $region46: #{simple_mlp_forward.1} parent=5 // pred_check_branch
        %312 = sbr.rel (%p309) target = $region48
      $region47: #{simple_mlp_forward.1} parent=5 // pred_region
        %s313 = ssub.s32 %s20, 1
        %s314 = sand.u32 %s59, 1
        %s315 = scalar_lea.sflag [#allocation4], %s314
        %s316 = sand.u32 %s59, 1
        %s317 = smul.addr %s316, 10240
        %s318 = scalar_lea.vmem [#allocation3], %s317
        // Predicated region
        $region49: #{simple_mlp_forward.1} parent=47 // pred_check
          %p319 = pneg %p72
        $region50: #{simple_mlp_forward.1} parent=47 // pred_check_branch
          %321 = sbr.rel (%p319) target = $region52
        $region51: #{simple_mlp_forward.1} parent=47 // pred_region
          %322 = dma.done %s315, 163840
        $region52: #{simple_mlp_forward.1} parent=47 // pred_fallthru
          _
        // Predicated region
        $region53: #{simple_mlp_forward.1} parent=47 // pred_check
          %p323 = pneg %p93
        $region54: #{simple_mlp_forward.1} parent=47 // pred_check_branch
          %325 = sbr.rel (%p323) target = $region56
        $region55: #{simple_mlp_forward.1} parent=47 // pred_region
          %326 = dma.done [#allocation7], 64
        $region56: #{simple_mlp_forward.1} parent=47 // pred_fallthru
          _
        // Predicated region
        $region57: #{simple_mlp_forward.1} parent=47 // pred_check
          %p327 = pneg %p114
        $region58: #{simple_mlp_forward.1} parent=47 // pred_check_branch
          %329 = sbr.rel (%p327) target = $region60
        $region59: #{simple_mlp_forward.1} parent=47 // pred_region
          %330 = dma.done [#allocation7], 8192
        $region60: #{simple_mlp_forward.1} parent=47 // pred_fallthru
          _
        // Predicated region
        $region61: #{simple_mlp_forward.1} parent=47 // pred_check
          %p331 = pneg %p135
        $region62: #{simple_mlp_forward.1} parent=47 // pred_check_branch
          %333 = sbr.rel (%p331) target = $region64
        $region63: #{simple_mlp_forward.1} parent=47 // pred_region
          %334 = dma.done [#allocation10], 16
        $region64: #{simple_mlp_forward.1} parent=47 // pred_fallthru
          _
        // Predicated region
        $region65: #{simple_mlp_forward.1} parent=47 // pred_check
          %p335 = pneg %p156
        $region66: #{simple_mlp_forward.1} parent=47 // pred_check_branch
          %337 = sbr.rel (%p335) target = $region68
        $region67: #{simple_mlp_forward.1} parent=47 // pred_region
          %338 = dma.done [#allocation10], 2048
        $region68: #{simple_mlp_forward.1} parent=47 // pred_fallthru
          _
        // Predicated region
        $region69: #{simple_mlp_forward.1} parent=47 // pred_check
          %p339 = pneg %p177
        $region70: #{simple_mlp_forward.1} parent=47 // pred_check_branch
          %341 = sbr.rel (%p339) target = $region72
        $region71: #{simple_mlp_forward.1} parent=47 // pred_region
          %342 = dma.done [#allocation13], 16
        $region72: #{simple_mlp_forward.1} parent=47 // pred_fallthru
          _
        %s343 = smul.u32 20, %s25
        %p344 = scmp.lt.s32.totalorder %s343, 79
        %s345 = scalar_select %p344, %s343, 79
        %s346 = smul.addr %s345, 2
        %s347 = scalar_lea.vmem %s0, %s346
        %p348 = pneg %p46
        %p349 = pneg %p43
        %s350 = sand.u32 %s59, 1
        %s351 = scalar_lea.sflag [#allocation4], %s350
        %s352 = sand.u32 %s59, 1
        %s353 = smul.addr %s352, 10240
        %s354 = scalar_lea.vmem [#allocation3], %s353
        %p355 = pneg %p72
        %p356 = pneg %p69
        %p357 = pneg %p93
        %p358 = pneg %p90
        %p359 = pneg %p114
        %p360 = pneg %p111
        %p361 = pneg %p135
        %p362 = pneg %p132
        %p363 = pneg %p156
        %p364 = pneg %p153
        %p365 = pneg %p177
        %p366 = pneg %p174
        %p367 = pneg %p198
        %p368 = pneg %p195
        %s369 = smul.u32 20, %s25
        %p370 = scmp.lt.s32.totalorder %s369, 79
        %s371 = scalar_select %p370, %s369, 79
        %s372 = smul.addr %s371, 2
        %s373 = scalar_lea.vmem %s0, %s372
        %s374 = smul.u32 20, %s25
        %s375 = smul.u32 320, %s25
        %p376 = scmp.eq.s32.totalorder %s25, 0
        // Predicated region
        $region73: #{simple_mlp_forward.1} parent=47 // pred_check
          %p377 = pneg %p376
        $region74: #{simple_mlp_forward.1} parent=47 // pred_check_branch
          %379 = sbr.rel (%p377) target = $region76
        $region75: #{simple_mlp_forward.1} parent=47 // pred_region
          %380 = vst [vmem:[#allocation2] sm:$0xff] 0.0
        $region76: #{simple_mlp_forward.1} parent=47 // pred_fallthru
          _
        %v381 = vld [vmem:[#allocation2] sm:$0xff]
        %v382 = vld [vmem:[%s373] sm:$0xff]
        %v383 = vld [vmem:[%s373 + $0x8] sm:$0xff]
        %v384 = vld [vmem:[%s373 + $0x10] sm:$0xff]
        %v385 = vld [vmem:[%s373 + $0x18] sm:$0xff]
        %v386 = vld [vmem:[%s373 + $0x20] sm:$0xff]
        %v387 = vld [vmem:[%s318] sm:$0xff]
        %v388 = vld [vmem:[%s318 + $0x8] sm:$0xff]
        %v389 = vld [vmem:[%s318 + $0x10] sm:$0xff]
        %v390 = vld [vmem:[%s318 + $0x18] sm:$0xff]
        %v391 = vld [vmem:[%s318 + $0x20] sm:$0xff]
        %v392 = vld [vmem:[%s318 + $0x28] sm:$0xff]
        %v393 = vld [vmem:[%s318 + $0x30] sm:$0xff]
        %v394 = vld [vmem:[%s318 + $0x38] sm:$0xff]
        %v395 = vld [vmem:[%s318 + $0x40] sm:$0xff]
        %v396 = vld [vmem:[%s318 + $0x48] sm:$0xff]
        %v397 = vld [vmem:[%s318 + $0x50] sm:$0xff]
        %v398 = vld [vmem:[%s318 + $0x58] sm:$0xff]
        %v399 = vld [vmem:[%s318 + $0x60] sm:$0xff]
        %v400 = vld [vmem:[%s318 + $0x68] sm:$0xff]
        %v401 = vld [vmem:[%s318 + $0x70] sm:$0xff]
        %v402 = vld [vmem:[%s318 + $0x78] sm:$0xff]
        %v403 = vld [vmem:[%s318 + $0x80] sm:$0xff]
        %v404 = vld [vmem:[%s318 + $0x88] sm:$0xff]
        %v405 = vld [vmem:[%s318 + $0x90] sm:$0xff]
        %v406 = vld [vmem:[%s318 + $0x98] sm:$0xff]
        %v407 = vld [vmem:[%s318 + $0xa0] sm:$0xff]
        %v408 = vld [vmem:[%s318 + $0xa8] sm:$0xff]
        %v409 = vld [vmem:[%s318 + $0xb0] sm:$0xff]
        %v410 = vld [vmem:[%s318 + $0xb8] sm:$0xff]
        %v411 = vld [vmem:[%s318 + $0xc0] sm:$0xff]
        %v412 = vld [vmem:[%s318 + $0xc8] sm:$0xff]
        %v413 = vld [vmem:[%s318 + $0xd0] sm:$0xff]
        %v414 = vld [vmem:[%s318 + $0xd8] sm:$0xff]
        %v415 = vld [vmem:[%s318 + $0xe0] sm:$0xff]
        %v416 = vld [vmem:[%s318 + $0xe8] sm:$0xff]
        %v417 = vld [vmem:[%s318 + $0xf0] sm:$0xff]
        %v418 = vld [vmem:[%s318 + $0xf8] sm:$0xff]
        %v419 = vld [vmem:[%s318 + $0x100] sm:$0xff]
        %v420 = vld [vmem:[%s318 + $0x108] sm:$0xff]
        %v421 = vld [vmem:[%s318 + $0x110] sm:$0xff]
        %v422 = vld [vmem:[%s318 + $0x118] sm:$0xff]
        %v423 = vld [vmem:[%s318 + $0x120] sm:$0xff]
        %v424 = vld [vmem:[%s318 + $0x128] sm:$0xff]
        %v425 = vld [vmem:[%s318 + $0x130] sm:$0xff]
        %v426 = vld [vmem:[%s318 + $0x138] sm:$0xff]
        %v427 = vld [vmem:[%s318 + $0x140] sm:$0xff]
        %v428 = vld [vmem:[%s318 + $0x148] sm:$0xff]
        %v429 = vld [vmem:[%s318 + $0x150] sm:$0xff]
        %v430 = vld [vmem:[%s318 + $0x158] sm:$0xff]
        %v431 = vld [vmem:[%s318 + $0x160] sm:$0xff]
        %v432 = vld [vmem:[%s318 + $0x168] sm:$0xff]
        %v433 = vld [vmem:[%s318 + $0x170] sm:$0xff]
        %v434 = vld [vmem:[%s318 + $0x178] sm:$0xff]
        %v435 = vld [vmem:[%s318 + $0x180] sm:$0xff]
        %v436 = vld [vmem:[%s318 + $0x188] sm:$0xff]
        %v437 = vld [vmem:[%s318 + $0x190] sm:$0xff]
        %v438 = vld [vmem:[%s318 + $0x198] sm:$0xff]
        %v439 = vld [vmem:[%s318 + $0x1a0] sm:$0xff]
        %v440 = vld [vmem:[%s318 + $0x1a8] sm:$0xff]
        %v441 = vld [vmem:[%s318 + $0x1b0] sm:$0xff]
        %v442 = vld [vmem:[%s318 + $0x1b8] sm:$0xff]
        %v443 = vld [vmem:[%s318 + $0x1c0] sm:$0xff]
        %v444 = vld [vmem:[%s318 + $0x1c8] sm:$0xff]
        %v445 = vld [vmem:[%s318 + $0x1d0] sm:$0xff]
        %v446 = vld [vmem:[%s318 + $0x1d8] sm:$0xff]
        %v447 = vld [vmem:[%s318 + $0x1e0] sm:$0xff]
        %v448 = vld [vmem:[%s318 + $0x1e8] sm:$0xff]
        %v449 = vld [vmem:[%s318 + $0x1f0] sm:$0xff]
        %v450 = vld [vmem:[%s318 + $0x1f8] sm:$0xff]
        %v451 = vld [vmem:[%s318 + $0x200] sm:$0xff]
        %v452 = vld [vmem:[%s318 + $0x208] sm:$0xff]
        %v453 = vld [vmem:[%s318 + $0x210] sm:$0xff]
        %v454 = vld [vmem:[%s318 + $0x218] sm:$0xff]
        %v455 = vld [vmem:[%s318 + $0x220] sm:$0xff]
        %v456 = vld [vmem:[%s318 + $0x228] sm:$0xff]
        %v457 = vld [vmem:[%s318 + $0x230] sm:$0xff]
        %v458 = vld [vmem:[%s318 + $0x238] sm:$0xff]
        %v459 = vld [vmem:[%s318 + $0x240] sm:$0xff]
        %v460 = vld [vmem:[%s318 + $0x248] sm:$0xff]
        %v461 = vld [vmem:[%s318 + $0x250] sm:$0xff]
        %v462 = vld [vmem:[%s318 + $0x258] sm:$0xff]
        %v463 = vld [vmem:[%s318 + $0x260] sm:$0xff]
        %v464 = vld [vmem:[%s318 + $0x268] sm:$0xff]
        %v465 = vld [vmem:[%s318 + $0x270] sm:$0xff]
        %v466 = vld [vmem:[%s318 + $0x278] sm:$0xff]
        %v467 = vld [vmem:[%s318 + $0x280] sm:$0xff]
        %v468 = vld [vmem:[%s318 + $0x288] sm:$0xff]
        %v469 = vld [vmem:[%s318 + $0x290] sm:$0xff]
        %v470 = vld [vmem:[%s318 + $0x298] sm:$0xff]
        %v471 = vld [vmem:[%s318 + $0x2a0] sm:$0xff]
        %v472 = vld [vmem:[%s318 + $0x2a8] sm:$0xff]
        %v473 = vld [vmem:[%s318 + $0x2b0] sm:$0xff]
        %v474 = vld [vmem:[%s318 + $0x2b8] sm:$0xff]
        %v475 = vld [vmem:[%s318 + $0x2c0] sm:$0xff]
        %v476 = vld [vmem:[%s318 + $0x2c8] sm:$0xff]
        %v477 = vld [vmem:[%s318 + $0x2d0] sm:$0xff]
        %v478 = vld [vmem:[%s318 + $0x2d8] sm:$0xff]
        %v479 = vld [vmem:[%s318 + $0x2e0] sm:$0xff]
        %v480 = vld [vmem:[%s318 + $0x2e8] sm:$0xff]
        %v481 = vld [vmem:[%s318 + $0x2f0] sm:$0xff]
        %v482 = vld [vmem:[%s318 + $0x2f8] sm:$0xff]
        %v483 = vld [vmem:[%s318 + $0x300] sm:$0xff]
        %v484 = vld [vmem:[%s318 + $0x308] sm:$0xff]
        %v485 = vld [vmem:[%s318 + $0x310] sm:$0xff]
        %v486 = vld [vmem:[%s318 + $0x318] sm:$0xff]
        %v487 = vld [vmem:[%s318 + $0x320] sm:$0xff]
        %v488 = vld [vmem:[%s318 + $0x328] sm:$0xff]
        %v489 = vld [vmem:[%s318 + $0x330] sm:$0xff]
        %v490 = vld [vmem:[%s318 + $0x338] sm:$0xff]
        %v491 = vld [vmem:[%s318 + $0x340] sm:$0xff]
        %v492 = vld [vmem:[%s318 + $0x348] sm:$0xff]
        %v493 = vld [vmem:[%s318 + $0x350] sm:$0xff]
        %v494 = vld [vmem:[%s318 + $0x358] sm:$0xff]
        %v495 = vld [vmem:[%s318 + $0x360] sm:$0xff]
        %v496 = vld [vmem:[%s318 + $0x368] sm:$0xff]
        %v497 = vld [vmem:[%s318 + $0x370] sm:$0xff]
        %v498 = vld [vmem:[%s318 + $0x378] sm:$0xff]
        %v499 = vld [vmem:[%s318 + $0x380] sm:$0xff]
        %v500 = vld [vmem:[%s318 + $0x388] sm:$0xff]
        %v501 = vld [vmem:[%s318 + $0x390] sm:$0xff]
        %v502 = vld [vmem:[%s318 + $0x398] sm:$0xff]
        %v503 = vld [vmem:[%s318 + $0x3a0] sm:$0xff]
        %v504 = vld [vmem:[%s318 + $0x3a8] sm:$0xff]
        %v505 = vld [vmem:[%s318 + $0x3b0] sm:$0xff]
        %v506 = vld [vmem:[%s318 + $0x3b8] sm:$0xff]
        %v507 = vld [vmem:[%s318 + $0x3c0] sm:$0xff]
        %v508 = vld [vmem:[%s318 + $0x3c8] sm:$0xff]
        %v509 = vld [vmem:[%s318 + $0x3d0] sm:$0xff]
        %v510 = vld [vmem:[%s318 + $0x3d8] sm:$0xff]
        %v511 = vld [vmem:[%s318 + $0x3e0] sm:$0xff]
        %v512 = vld [vmem:[%s318 + $0x3e8] sm:$0xff]
        %v513 = vld [vmem:[%s318 + $0x3f0] sm:$0xff]
        %v514 = vld [vmem:[%s318 + $0x3f8] sm:$0xff]
        %v515 = vld [vmem:[%s318 + $0x400] sm:$0xff]
        %v516 = vld [vmem:[%s318 + $0x408] sm:$0xff]
        %v517 = vld [vmem:[%s318 + $0x410] sm:$0xff]
        %v518 = vld [vmem:[%s318 + $0x418] sm:$0xff]
        %v519 = vld [vmem:[%s318 + $0x420] sm:$0xff]
        %v520 = vld [vmem:[%s318 + $0x428] sm:$0xff]
        %v521 = vld [vmem:[%s318 + $0x430] sm:$0xff]
        %v522 = vld [vmem:[%s318 + $0x438] sm:$0xff]
        %v523 = vld [vmem:[%s318 + $0x440] sm:$0xff]
        %v524 = vld [vmem:[%s318 + $0x448] sm:$0xff]
        %v525 = vld [vmem:[%s318 + $0x450] sm:$0xff]
        %v526 = vld [vmem:[%s318 + $0x458] sm:$0xff]
        %v527 = vld [vmem:[%s318 + $0x460] sm:$0xff]
        %v528 = vld [vmem:[%s318 + $0x468] sm:$0xff]
        %v529 = vld [vmem:[%s318 + $0x470] sm:$0xff]
        %v530 = vld [vmem:[%s318 + $0x478] sm:$0xff]
        %v531 = vld [vmem:[%s318 + $0x480] sm:$0xff]
        %v532 = vld [vmem:[%s318 + $0x488] sm:$0xff]
        %v533 = vld [vmem:[%s318 + $0x490] sm:$0xff]
        %v534 = vld [vmem:[%s318 + $0x498] sm:$0xff]
        %v535 = vld [vmem:[%s318 + $0x4a0] sm:$0xff]
        %v536 = vld [vmem:[%s318 + $0x4a8] sm:$0xff]
        %v537 = vld [vmem:[%s318 + $0x4b0] sm:$0xff]
        %v538 = vld [vmem:[%s318 + $0x4b8] sm:$0xff]
        %v539 = vld [vmem:[%s318 + $0x4c0] sm:$0xff]
        %v540 = vld [vmem:[%s318 + $0x4c8] sm:$0xff]
        %v541 = vld [vmem:[%s318 + $0x4d0] sm:$0xff]
        %v542 = vld [vmem:[%s318 + $0x4d8] sm:$0xff]
        %v543 = vld [vmem:[%s318 + $0x4e0] sm:$0xff]
        %v544 = vld [vmem:[%s318 + $0x4e8] sm:$0xff]
        %v545 = vld [vmem:[%s318 + $0x4f0] sm:$0xff]
        %v546 = vld [vmem:[%s318 + $0x4f8] sm:$0xff]
        %v547 = vld [vmem:[%s318 + $0x500] sm:$0xff]
        %v548 = vld [vmem:[%s318 + $0x508] sm:$0xff]
        %v549 = vld [vmem:[%s318 + $0x510] sm:$0xff]
        %v550 = vld [vmem:[%s318 + $0x518] sm:$0xff]
        %v551 = vld [vmem:[%s318 + $0x520] sm:$0xff]
        %v552 = vld [vmem:[%s318 + $0x528] sm:$0xff]
        %v553 = vld [vmem:[%s318 + $0x530] sm:$0xff]
        %v554 = vld [vmem:[%s318 + $0x538] sm:$0xff]
        %v555 = vld [vmem:[%s318 + $0x540] sm:$0xff]
        %v556 = vld [vmem:[%s318 + $0x548] sm:$0xff]
        %v557 = vld [vmem:[%s318 + $0x550] sm:$0xff]
        %v558 = vld [vmem:[%s318 + $0x558] sm:$0xff]
        %v559 = vld [vmem:[%s318 + $0x560] sm:$0xff]
        %v560 = vld [vmem:[%s318 + $0x568] sm:$0xff]
        %v561 = vld [vmem:[%s318 + $0x570] sm:$0xff]
        %v562 = vld [vmem:[%s318 + $0x578] sm:$0xff]
        %v563 = vld [vmem:[%s318 + $0x580] sm:$0xff]
        %v564 = vld [vmem:[%s318 + $0x588] sm:$0xff]
        %v565 = vld [vmem:[%s318 + $0x590] sm:$0xff]
        %v566 = vld [vmem:[%s318 + $0x598] sm:$0xff]
        %v567 = vld [vmem:[%s318 + $0x5a0] sm:$0xff]
        %v568 = vld [vmem:[%s318 + $0x5a8] sm:$0xff]
        %v569 = vld [vmem:[%s318 + $0x5b0] sm:$0xff]
        %v570 = vld [vmem:[%s318 + $0x5b8] sm:$0xff]
        %v571 = vld [vmem:[%s318 + $0x5c0] sm:$0xff]
        %v572 = vld [vmem:[%s318 + $0x5c8] sm:$0xff]
        %v573 = vld [vmem:[%s318 + $0x5d0] sm:$0xff]
        %v574 = vld [vmem:[%s318 + $0x5d8] sm:$0xff]
        %v575 = vld [vmem:[%s318 + $0x5e0] sm:$0xff]
        %v576 = vld [vmem:[%s318 + $0x5e8] sm:$0xff]
        %v577 = vld [vmem:[%s318 + $0x5f0] sm:$0xff]
        %v578 = vld [vmem:[%s318 + $0x5f8] sm:$0xff]
        %v579 = vld [vmem:[%s318 + $0x600] sm:$0xff]
        %v580 = vld [vmem:[%s318 + $0x608] sm:$0xff]
        %v581 = vld [vmem:[%s318 + $0x610] sm:$0xff]
        %v582 = vld [vmem:[%s318 + $0x618] sm:$0xff]
        %v583 = vld [vmem:[%s318 + $0x620] sm:$0xff]
        %v584 = vld [vmem:[%s318 + $0x628] sm:$0xff]
        %v585 = vld [vmem:[%s318 + $0x630] sm:$0xff]
        %v586 = vld [vmem:[%s318 + $0x638] sm:$0xff]
        %v587 = vld [vmem:[%s318 + $0x640] sm:$0xff]
        %v588 = vld [vmem:[%s318 + $0x648] sm:$0xff]
        %v589 = vld [vmem:[%s318 + $0x650] sm:$0xff]
        %v590 = vld [vmem:[%s318 + $0x658] sm:$0xff]
        %v591 = vld [vmem:[%s318 + $0x660] sm:$0xff]
        %v592 = vld [vmem:[%s318 + $0x668] sm:$0xff]
        %v593 = vld [vmem:[%s318 + $0x670] sm:$0xff]
        %v594 = vld [vmem:[%s318 + $0x678] sm:$0xff]
        %v595 = vld [vmem:[%s318 + $0x680] sm:$0xff]
        %v596 = vld [vmem:[%s318 + $0x688] sm:$0xff]
        %v597 = vld [vmem:[%s318 + $0x690] sm:$0xff]
        %v598 = vld [vmem:[%s318 + $0x698] sm:$0xff]
        %v599 = vld [vmem:[%s318 + $0x6a0] sm:$0xff]
        %v600 = vld [vmem:[%s318 + $0x6a8] sm:$0xff]
        %v601 = vld [vmem:[%s318 + $0x6b0] sm:$0xff]
        %v602 = vld [vmem:[%s318 + $0x6b8] sm:$0xff]
        %v603 = vld [vmem:[%s318 + $0x6c0] sm:$0xff]
        %v604 = vld [vmem:[%s318 + $0x6c8] sm:$0xff]
        %v605 = vld [vmem:[%s318 + $0x6d0] sm:$0xff]
        %v606 = vld [vmem:[%s318 + $0x6d8] sm:$0xff]
        %v607 = vld [vmem:[%s318 + $0x6e0] sm:$0xff]
        %v608 = vld [vmem:[%s318 + $0x6e8] sm:$0xff]
        %v609 = vld [vmem:[%s318 + $0x6f0] sm:$0xff]
        %v610 = vld [vmem:[%s318 + $0x6f8] sm:$0xff]
        %v611 = vld [vmem:[%s318 + $0x700] sm:$0xff]
        %v612 = vld [vmem:[%s318 + $0x708] sm:$0xff]
        %v613 = vld [vmem:[%s318 + $0x710] sm:$0xff]
        %v614 = vld [vmem:[%s318 + $0x718] sm:$0xff]
        %v615 = vld [vmem:[%s318 + $0x720] sm:$0xff]
        %v616 = vld [vmem:[%s318 + $0x728] sm:$0xff]
        %v617 = vld [vmem:[%s318 + $0x730] sm:$0xff]
        %v618 = vld [vmem:[%s318 + $0x738] sm:$0xff]
        %v619 = vld [vmem:[%s318 + $0x740] sm:$0xff]
        %v620 = vld [vmem:[%s318 + $0x748] sm:$0xff]
        %v621 = vld [vmem:[%s318 + $0x750] sm:$0xff]
        %v622 = vld [vmem:[%s318 + $0x758] sm:$0xff]
        %v623 = vld [vmem:[%s318 + $0x760] sm:$0xff]
        %v624 = vld [vmem:[%s318 + $0x768] sm:$0xff]
        %v625 = vld [vmem:[%s318 + $0x770] sm:$0xff]
        %v626 = vld [vmem:[%s318 + $0x778] sm:$0xff]
        %v627 = vld [vmem:[%s318 + $0x780] sm:$0xff]
        %v628 = vld [vmem:[%s318 + $0x788] sm:$0xff]
        %v629 = vld [vmem:[%s318 + $0x790] sm:$0xff]
        %v630 = vld [vmem:[%s318 + $0x798] sm:$0xff]
        %v631 = vld [vmem:[%s318 + $0x7a0] sm:$0xff]
        %v632 = vld [vmem:[%s318 + $0x7a8] sm:$0xff]
        %v633 = vld [vmem:[%s318 + $0x7b0] sm:$0xff]
        %v634 = vld [vmem:[%s318 + $0x7b8] sm:$0xff]
        %v635 = vld [vmem:[%s318 + $0x7c0] sm:$0xff]
        %v636 = vld [vmem:[%s318 + $0x7c8] sm:$0xff]
        %v637 = vld [vmem:[%s318 + $0x7d0] sm:$0xff]
        %v638 = vld [vmem:[%s318 + $0x7d8] sm:$0xff]
        %v639 = vld [vmem:[%s318 + $0x7e0] sm:$0xff]
        %v640 = vld [vmem:[%s318 + $0x7e8] sm:$0xff]
        %v641 = vld [vmem:[%s318 + $0x7f0] sm:$0xff]
        %v642 = vld [vmem:[%s318 + $0x7f8] sm:$0xff]
        %v643 = vld [vmem:[%s318 + $0x800] sm:$0xff]
        %v644 = vld [vmem:[%s318 + $0x808] sm:$0xff]
        %v645 = vld [vmem:[%s318 + $0x810] sm:$0xff]
        %v646 = vld [vmem:[%s318 + $0x818] sm:$0xff]
        %v647 = vld [vmem:[%s318 + $0x820] sm:$0xff]
        %v648 = vld [vmem:[%s318 + $0x828] sm:$0xff]
        %v649 = vld [vmem:[%s318 + $0x830] sm:$0xff]
        %v650 = vld [vmem:[%s318 + $0x838] sm:$0xff]
        %v651 = vld [vmem:[%s318 + $0x840] sm:$0xff]
        %v652 = vld [vmem:[%s318 + $0x848] sm:$0xff]
        %v653 = vld [vmem:[%s318 + $0x850] sm:$0xff]
        %v654 = vld [vmem:[%s318 + $0x858] sm:$0xff]
        %v655 = vld [vmem:[%s318 + $0x860] sm:$0xff]
        %v656 = vld [vmem:[%s318 + $0x868] sm:$0xff]
        %v657 = vld [vmem:[%s318 + $0x870] sm:$0xff]
        %v658 = vld [vmem:[%s318 + $0x878] sm:$0xff]
        %v659 = vld [vmem:[%s318 + $0x880] sm:$0xff]
        %v660 = vld [vmem:[%s318 + $0x888] sm:$0xff]
        %v661 = vld [vmem:[%s318 + $0x890] sm:$0xff]
        %v662 = vld [vmem:[%s318 + $0x898] sm:$0xff]
        %v663 = vld [vmem:[%s318 + $0x8a0] sm:$0xff]
        %v664 = vld [vmem:[%s318 + $0x8a8] sm:$0xff]
        %v665 = vld [vmem:[%s318 + $0x8b0] sm:$0xff]
        %v666 = vld [vmem:[%s318 + $0x8b8] sm:$0xff]
        %v667 = vld [vmem:[%s318 + $0x8c0] sm:$0xff]
        %v668 = vld [vmem:[%s318 + $0x8c8] sm:$0xff]
        %v669 = vld [vmem:[%s318 + $0x8d0] sm:$0xff]
        %v670 = vld [vmem:[%s318 + $0x8d8] sm:$0xff]
        %v671 = vld [vmem:[%s318 + $0x8e0] sm:$0xff]
        %v672 = vld [vmem:[%s318 + $0x8e8] sm:$0xff]
        %v673 = vld [vmem:[%s318 + $0x8f0] sm:$0xff]
        %v674 = vld [vmem:[%s318 + $0x8f8] sm:$0xff]
        %v675 = vld [vmem:[%s318 + $0x900] sm:$0xff]
        %v676 = vld [vmem:[%s318 + $0x908] sm:$0xff]
        %v677 = vld [vmem:[%s318 + $0x910] sm:$0xff]
        %v678 = vld [vmem:[%s318 + $0x918] sm:$0xff]
        %v679 = vld [vmem:[%s318 + $0x920] sm:$0xff]
        %v680 = vld [vmem:[%s318 + $0x928] sm:$0xff]
        %v681 = vld [vmem:[%s318 + $0x930] sm:$0xff]
        %v682 = vld [vmem:[%s318 + $0x938] sm:$0xff]
        %v683 = vld [vmem:[%s318 + $0x940] sm:$0xff]
        %v684 = vld [vmem:[%s318 + $0x948] sm:$0xff]
        %v685 = vld [vmem:[%s318 + $0x950] sm:$0xff]
        %v686 = vld [vmem:[%s318 + $0x958] sm:$0xff]
        %v687 = vld [vmem:[%s318 + $0x960] sm:$0xff]
        %v688 = vld [vmem:[%s318 + $0x968] sm:$0xff]
        %v689 = vld [vmem:[%s318 + $0x970] sm:$0xff]
        %v690 = vld [vmem:[%s318 + $0x978] sm:$0xff]
        %v691 = vld [vmem:[%s318 + $0x980] sm:$0xff]
        %v692 = vld [vmem:[%s318 + $0x988] sm:$0xff]
        %v693 = vld [vmem:[%s318 + $0x990] sm:$0xff]
        %v694 = vld [vmem:[%s318 + $0x998] sm:$0xff]
        %v695 = vld [vmem:[%s318 + $0x9a0] sm:$0xff]
        %v696 = vld [vmem:[%s318 + $0x9a8] sm:$0xff]
        %v697 = vld [vmem:[%s318 + $0x9b0] sm:$0xff]
        %v698 = vld [vmem:[%s318 + $0x9b8] sm:$0xff]
        %v699 = vld [vmem:[%s318 + $0x9c0] sm:$0xff]
        %v700 = vld [vmem:[%s318 + $0x9c8] sm:$0xff]
        %v701 = vld [vmem:[%s318 + $0x9d0] sm:$0xff]
        %v702 = vld [vmem:[%s318 + $0x9d8] sm:$0xff]
        %v703 = vld [vmem:[%s318 + $0x9e0] sm:$0xff]
        %v704 = vld [vmem:[%s318 + $0x9e8] sm:$0xff]
        %v705 = vld [vmem:[%s318 + $0x9f0] sm:$0xff]
        %v706 = vld [vmem:[%s318 + $0x9f8] sm:$0xff]
        %v707 = vld [vmem:[%s318 + $0xa00] sm:$0xff]
        %v708 = vld [vmem:[%s318 + $0xa08] sm:$0xff]
        %v709 = vld [vmem:[%s318 + $0xa10] sm:$0xff]
        %v710 = vld [vmem:[%s318 + $0xa18] sm:$0xff]
        %v711 = vld [vmem:[%s318 + $0xa20] sm:$0xff]
        %v712 = vld [vmem:[%s318 + $0xa28] sm:$0xff]
        %v713 = vld [vmem:[%s318 + $0xa30] sm:$0xff]
        %v714 = vld [vmem:[%s318 + $0xa38] sm:$0xff]
        %v715 = vld [vmem:[%s318 + $0xa40] sm:$0xff]
        %v716 = vld [vmem:[%s318 + $0xa48] sm:$0xff]
        %v717 = vld [vmem:[%s318 + $0xa50] sm:$0xff]
        %v718 = vld [vmem:[%s318 + $0xa58] sm:$0xff]
        %v719 = vld [vmem:[%s318 + $0xa60] sm:$0xff]
        %v720 = vld [vmem:[%s318 + $0xa68] sm:$0xff]
        %v721 = vld [vmem:[%s318 + $0xa70] sm:$0xff]
        %v722 = vld [vmem:[%s318 + $0xa78] sm:$0xff]
        %v723 = vld [vmem:[%s318 + $0xa80] sm:$0xff]
        %v724 = vld [vmem:[%s318 + $0xa88] sm:$0xff]
        %v725 = vld [vmem:[%s318 + $0xa90] sm:$0xff]
        %v726 = vld [vmem:[%s318 + $0xa98] sm:$0xff]
        %v727 = vld [vmem:[%s318 + $0xaa0] sm:$0xff]
        %v728 = vld [vmem:[%s318 + $0xaa8] sm:$0xff]
        %v729 = vld [vmem:[%s318 + $0xab0] sm:$0xff]
        %v730 = vld [vmem:[%s318 + $0xab8] sm:$0xff]
        %v731 = vld [vmem:[%s318 + $0xac0] sm:$0xff]
        %v732 = vld [vmem:[%s318 + $0xac8] sm:$0xff]
        %v733 = vld [vmem:[%s318 + $0xad0] sm:$0xff]
        %v734 = vld [vmem:[%s318 + $0xad8] sm:$0xff]
        %v735 = vld [vmem:[%s318 + $0xae0] sm:$0xff]
        %v736 = vld [vmem:[%s318 + $0xae8] sm:$0xff]
        %v737 = vld [vmem:[%s318 + $0xaf0] sm:$0xff]
        %v738 = vld [vmem:[%s318 + $0xaf8] sm:$0xff]
        %v739 = vld [vmem:[%s318 + $0xb00] sm:$0xff]
        %v740 = vld [vmem:[%s318 + $0xb08] sm:$0xff]
        %v741 = vld [vmem:[%s318 + $0xb10] sm:$0xff]
        %v742 = vld [vmem:[%s318 + $0xb18] sm:$0xff]
        %v743 = vld [vmem:[%s318 + $0xb20] sm:$0xff]
        %v744 = vld [vmem:[%s318 + $0xb28] sm:$0xff]
        %v745 = vld [vmem:[%s318 + $0xb30] sm:$0xff]
        %v746 = vld [vmem:[%s318 + $0xb38] sm:$0xff]
        %v747 = vld [vmem:[%s318 + $0xb40] sm:$0xff]
        %v748 = vld [vmem:[%s318 + $0xb48] sm:$0xff]
        %v749 = vld [vmem:[%s318 + $0xb50] sm:$0xff]
        %v750 = vld [vmem:[%s318 + $0xb58] sm:$0xff]
        %v751 = vld [vmem:[%s318 + $0xb60] sm:$0xff]
        %v752 = vld [vmem:[%s318 + $0xb68] sm:$0xff]
        %v753 = vld [vmem:[%s318 + $0xb70] sm:$0xff]
        %v754 = vld [vmem:[%s318 + $0xb78] sm:$0xff]
        %v755 = vld [vmem:[%s318 + $0xb80] sm:$0xff]
        %v756 = vld [vmem:[%s318 + $0xb88] sm:$0xff]
        %v757 = vld [vmem:[%s318 + $0xb90] sm:$0xff]
        %v758 = vld [vmem:[%s318 + $0xb98] sm:$0xff]
        %v759 = vld [vmem:[%s318 + $0xba0] sm:$0xff]
        %v760 = vld [vmem:[%s318 + $0xba8] sm:$0xff]
        %v761 = vld [vmem:[%s318 + $0xbb0] sm:$0xff]
        %v762 = vld [vmem:[%s318 + $0xbb8] sm:$0xff]
        %v763 = vld [vmem:[%s318 + $0xbc0] sm:$0xff]
        %v764 = vld [vmem:[%s318 + $0xbc8] sm:$0xff]
        %v765 = vld [vmem:[%s318 + $0xbd0] sm:$0xff]
        %v766 = vld [vmem:[%s318 + $0xbd8] sm:$0xff]
        %v767 = vld [vmem:[%s318 + $0xbe0] sm:$0xff]
        %v768 = vld [vmem:[%s318 + $0xbe8] sm:$0xff]
        %v769 = vld [vmem:[%s318 + $0xbf0] sm:$0xff]
        %v770 = vld [vmem:[%s318 + $0xbf8] sm:$0xff]
        %v771 = vld [vmem:[%s318 + $0xc00] sm:$0xff]
        %v772 = vld [vmem:[%s318 + $0xc08] sm:$0xff]
        %v773 = vld [vmem:[%s318 + $0xc10] sm:$0xff]
        %v774 = vld [vmem:[%s318 + $0xc18] sm:$0xff]
        %v775 = vld [vmem:[%s318 + $0xc20] sm:$0xff]
        %v776 = vld [vmem:[%s318 + $0xc28] sm:$0xff]
        %v777 = vld [vmem:[%s318 + $0xc30] sm:$0xff]
        %v778 = vld [vmem:[%s318 + $0xc38] sm:$0xff]
        %v779 = vld [vmem:[%s318 + $0xc40] sm:$0xff]
        %v780 = vld [vmem:[%s318 + $0xc48] sm:$0xff]
        %v781 = vld [vmem:[%s318 + $0xc50] sm:$0xff]
        %v782 = vld [vmem:[%s318 + $0xc58] sm:$0xff]
        %v783 = vld [vmem:[%s318 + $0xc60] sm:$0xff]
        %v784 = vld [vmem:[%s318 + $0xc68] sm:$0xff]
        %v785 = vld [vmem:[%s318 + $0xc70] sm:$0xff]
        %v786 = vld [vmem:[%s318 + $0xc78] sm:$0xff]
        %v787 = vld [vmem:[%s318 + $0xc80] sm:$0xff]
        %v788 = vld [vmem:[%s318 + $0xc88] sm:$0xff]
        %v789 = vld [vmem:[%s318 + $0xc90] sm:$0xff]
        %v790 = vld [vmem:[%s318 + $0xc98] sm:$0xff]
        %v791 = vld [vmem:[%s318 + $0xca0] sm:$0xff]
        %v792 = vld [vmem:[%s318 + $0xca8] sm:$0xff]
        %v793 = vld [vmem:[%s318 + $0xcb0] sm:$0xff]
        %v794 = vld [vmem:[%s318 + $0xcb8] sm:$0xff]
        %v795 = vld [vmem:[%s318 + $0xcc0] sm:$0xff]
        %v796 = vld [vmem:[%s318 + $0xcc8] sm:$0xff]
        %v797 = vld [vmem:[%s318 + $0xcd0] sm:$0xff]
        %v798 = vld [vmem:[%s318 + $0xcd8] sm:$0xff]
        %v799 = vld [vmem:[%s318 + $0xce0] sm:$0xff]
        %v800 = vld [vmem:[%s318 + $0xce8] sm:$0xff]
        %v801 = vld [vmem:[%s318 + $0xcf0] sm:$0xff]
        %v802 = vld [vmem:[%s318 + $0xcf8] sm:$0xff]
        %v803 = vld [vmem:[%s318 + $0xd00] sm:$0xff]
        %v804 = vld [vmem:[%s318 + $0xd08] sm:$0xff]
        %v805 = vld [vmem:[%s318 + $0xd10] sm:$0xff]
        %v806 = vld [vmem:[%s318 + $0xd18] sm:$0xff]
        %v807 = vld [vmem:[%s318 + $0xd20] sm:$0xff]
        %v808 = vld [vmem:[%s318 + $0xd28] sm:$0xff]
        %v809 = vld [vmem:[%s318 + $0xd30] sm:$0xff]
        %v810 = vld [vmem:[%s318 + $0xd38] sm:$0xff]
        %v811 = vld [vmem:[%s318 + $0xd40] sm:$0xff]
        %v812 = vld [vmem:[%s318 + $0xd48] sm:$0xff]
        %v813 = vld [vmem:[%s318 + $0xd50] sm:$0xff]
        %v814 = vld [vmem:[%s318 + $0xd58] sm:$0xff]
        %v815 = vld [vmem:[%s318 + $0xd60] sm:$0xff]
        %v816 = vld [vmem:[%s318 + $0xd68] sm:$0xff]
        %v817 = vld [vmem:[%s318 + $0xd70] sm:$0xff]
        %v818 = vld [vmem:[%s318 + $0xd78] sm:$0xff]
        %v819 = vld [vmem:[%s318 + $0xd80] sm:$0xff]
        %v820 = vld [vmem:[%s318 + $0xd88] sm:$0xff]
        %v821 = vld [vmem:[%s318 + $0xd90] sm:$0xff]
        %v822 = vld [vmem:[%s318 + $0xd98] sm:$0xff]
        %v823 = vld [vmem:[%s318 + $0xda0] sm:$0xff]
        %v824 = vld [vmem:[%s318 + $0xda8] sm:$0xff]
        %v825 = vld [vmem:[%s318 + $0xdb0] sm:$0xff]
        %v826 = vld [vmem:[%s318 + $0xdb8] sm:$0xff]
        %v827 = vld [vmem:[%s318 + $0xdc0] sm:$0xff]
        %v828 = vld [vmem:[%s318 + $0xdc8] sm:$0xff]
        %v829 = vld [vmem:[%s318 + $0xdd0] sm:$0xff]
        %v830 = vld [vmem:[%s318 + $0xdd8] sm:$0xff]
        %v831 = vld [vmem:[%s318 + $0xde0] sm:$0xff]
        %v832 = vld [vmem:[%s318 + $0xde8] sm:$0xff]
        %v833 = vld [vmem:[%s318 + $0xdf0] sm:$0xff]
        %v834 = vld [vmem:[%s318 + $0xdf8] sm:$0xff]
        %v835 = vld [vmem:[%s318 + $0xe00] sm:$0xff]
        %v836 = vld [vmem:[%s318 + $0xe08] sm:$0xff]
        %v837 = vld [vmem:[%s318 + $0xe10] sm:$0xff]
        %v838 = vld [vmem:[%s318 + $0xe18] sm:$0xff]
        %v839 = vld [vmem:[%s318 + $0xe20] sm:$0xff]
        %v840 = vld [vmem:[%s318 + $0xe28] sm:$0xff]
        %v841 = vld [vmem:[%s318 + $0xe30] sm:$0xff]
        %v842 = vld [vmem:[%s318 + $0xe38] sm:$0xff]
        %v843 = vld [vmem:[%s318 + $0xe40] sm:$0xff]
        %v844 = vld [vmem:[%s318 + $0xe48] sm:$0xff]
        %v845 = vld [vmem:[%s318 + $0xe50] sm:$0xff]
        %v846 = vld [vmem:[%s318 + $0xe58] sm:$0xff]
        %v847 = vld [vmem:[%s318 + $0xe60] sm:$0xff]
        %v848 = vld [vmem:[%s318 + $0xe68] sm:$0xff]
        %v849 = vld [vmem:[%s318 + $0xe70] sm:$0xff]
        %v850 = vld [vmem:[%s318 + $0xe78] sm:$0xff]
        %v851 = vld [vmem:[%s318 + $0xe80] sm:$0xff]
        %v852 = vld [vmem:[%s318 + $0xe88] sm:$0xff]
        %v853 = vld [vmem:[%s318 + $0xe90] sm:$0xff]
        %v854 = vld [vmem:[%s318 + $0xe98] sm:$0xff]
        %v855 = vld [vmem:[%s318 + $0xea0] sm:$0xff]
        %v856 = vld [vmem:[%s318 + $0xea8] sm:$0xff]
        %v857 = vld [vmem:[%s318 + $0xeb0] sm:$0xff]
        %v858 = vld [vmem:[%s318 + $0xeb8] sm:$0xff]
        %v859 = vld [vmem:[%s318 + $0xec0] sm:$0xff]
        %v860 = vld [vmem:[%s318 + $0xec8] sm:$0xff]
        %v861 = vld [vmem:[%s318 + $0xed0] sm:$0xff]
        %v862 = vld [vmem:[%s318 + $0xed8] sm:$0xff]
        %v863 = vld [vmem:[%s318 + $0xee0] sm:$0xff]
        %v864 = vld [vmem:[%s318 + $0xee8] sm:$0xff]
        %v865 = vld [vmem:[%s318 + $0xef0] sm:$0xff]
        %v866 = vld [vmem:[%s318 + $0xef8] sm:$0xff]
        %v867 = vld [vmem:[%s318 + $0xf00] sm:$0xff]
        %v868 = vld [vmem:[%s318 + $0xf08] sm:$0xff]
        %v869 = vld [vmem:[%s318 + $0xf10] sm:$0xff]
        %v870 = vld [vmem:[%s318 + $0xf18] sm:$0xff]
        %v871 = vld [vmem:[%s318 + $0xf20] sm:$0xff]
        %v872 = vld [vmem:[%s318 + $0xf28] sm:$0xff]
        %v873 = vld [vmem:[%s318 + $0xf30] sm:$0xff]
        %v874 = vld [vmem:[%s318 + $0xf38] sm:$0xff]
        %v875 = vld [vmem:[%s318 + $0xf40] sm:$0xff]
        %v876 = vld [vmem:[%s318 + $0xf48] sm:$0xff]
        %v877 = vld [vmem:[%s318 + $0xf50] sm:$0xff]
        %v878 = vld [vmem:[%s318 + $0xf58] sm:$0xff]
        %v879 = vld [vmem:[%s318 + $0xf60] sm:$0xff]
        %v880 = vld [vmem:[%s318 + $0xf68] sm:$0xff]
        %v881 = vld [vmem:[%s318 + $0xf70] sm:$0xff]
        %v882 = vld [vmem:[%s318 + $0xf78] sm:$0xff]
        %v883 = vld [vmem:[%s318 + $0xf80] sm:$0xff]
        %v884 = vld [vmem:[%s318 + $0xf88] sm:$0xff]
        %v885 = vld [vmem:[%s318 + $0xf90] sm:$0xff]
        %v886 = vld [vmem:[%s318 + $0xf98] sm:$0xff]
        %v887 = vld [vmem:[%s318 + $0xfa0] sm:$0xff]
        %v888 = vld [vmem:[%s318 + $0xfa8] sm:$0xff]
        %v889 = vld [vmem:[%s318 + $0xfb0] sm:$0xff]
        %v890 = vld [vmem:[%s318 + $0xfb8] sm:$0xff]
        %v891 = vld [vmem:[%s318 + $0xfc0] sm:$0xff]
        %v892 = vld [vmem:[%s318 + $0xfc8] sm:$0xff]
        %v893 = vld [vmem:[%s318 + $0xfd0] sm:$0xff]
        %v894 = vld [vmem:[%s318 + $0xfd8] sm:$0xff]
        %v895 = vld [vmem:[%s318 + $0xfe0] sm:$0xff]
        %v896 = vld [vmem:[%s318 + $0xfe8] sm:$0xff]
        %v897 = vld [vmem:[%s318 + $0xff0] sm:$0xff]
        %v898 = vld [vmem:[%s318 + $0xff8] sm:$0xff]
        %v899 = vld [vmem:[%s318 + $0x1000] sm:$0xff]
        %v900 = vld [vmem:[%s318 + $0x1008] sm:$0xff]
        %v901 = vld [vmem:[%s318 + $0x1010] sm:$0xff]
        %v902 = vld [vmem:[%s318 + $0x1018] sm:$0xff]
        %v903 = vld [vmem:[%s318 + $0x1020] sm:$0xff]
        %v904 = vld [vmem:[%s318 + $0x1028] sm:$0xff]
        %v905 = vld [vmem:[%s318 + $0x1030] sm:$0xff]
        %v906 = vld [vmem:[%s318 + $0x1038] sm:$0xff]
        %v907 = vld [vmem:[%s318 + $0x1040] sm:$0xff]
        %v908 = vld [vmem:[%s318 + $0x1048] sm:$0xff]
        %v909 = vld [vmem:[%s318 + $0x1050] sm:$0xff]
        %v910 = vld [vmem:[%s318 + $0x1058] sm:$0xff]
        %v911 = vld [vmem:[%s318 + $0x1060] sm:$0xff]
        %v912 = vld [vmem:[%s318 + $0x1068] sm:$0xff]
        %v913 = vld [vmem:[%s318 + $0x1070] sm:$0xff]
        %v914 = vld [vmem:[%s318 + $0x1078] sm:$0xff]
        %v915 = vld [vmem:[%s318 + $0x1080] sm:$0xff]
        %v916 = vld [vmem:[%s318 + $0x1088] sm:$0xff]
        %v917 = vld [vmem:[%s318 + $0x1090] sm:$0xff]
        %v918 = vld [vmem:[%s318 + $0x1098] sm:$0xff]
        %v919 = vld [vmem:[%s318 + $0x10a0] sm:$0xff]
        %v920 = vld [vmem:[%s318 + $0x10a8] sm:$0xff]
        %v921 = vld [vmem:[%s318 + $0x10b0] sm:$0xff]
        %v922 = vld [vmem:[%s318 + $0x10b8] sm:$0xff]
        %v923 = vld [vmem:[%s318 + $0x10c0] sm:$0xff]
        %v924 = vld [vmem:[%s318 + $0x10c8] sm:$0xff]
        %v925 = vld [vmem:[%s318 + $0x10d0] sm:$0xff]
        %v926 = vld [vmem:[%s318 + $0x10d8] sm:$0xff]
        %v927 = vld [vmem:[%s318 + $0x10e0] sm:$0xff]
        %v928 = vld [vmem:[%s318 + $0x10e8] sm:$0xff]
        %v929 = vld [vmem:[%s318 + $0x10f0] sm:$0xff]
        %v930 = vld [vmem:[%s318 + $0x10f8] sm:$0xff]
        %v931 = vld [vmem:[%s318 + $0x1100] sm:$0xff]
        %v932 = vld [vmem:[%s318 + $0x1108] sm:$0xff]
        %v933 = vld [vmem:[%s318 + $0x1110] sm:$0xff]
        %v934 = vld [vmem:[%s318 + $0x1118] sm:$0xff]
        %v935 = vld [vmem:[%s318 + $0x1120] sm:$0xff]
        %v936 = vld [vmem:[%s318 + $0x1128] sm:$0xff]
        %v937 = vld [vmem:[%s318 + $0x1130] sm:$0xff]
        %v938 = vld [vmem:[%s318 + $0x1138] sm:$0xff]
        %v939 = vld [vmem:[%s318 + $0x1140] sm:$0xff]
        %v940 = vld [vmem:[%s318 + $0x1148] sm:$0xff]
        %v941 = vld [vmem:[%s318 + $0x1150] sm:$0xff]
        %v942 = vld [vmem:[%s318 + $0x1158] sm:$0xff]
        %v943 = vld [vmem:[%s318 + $0x1160] sm:$0xff]
        %v944 = vld [vmem:[%s318 + $0x1168] sm:$0xff]
        %v945 = vld [vmem:[%s318 + $0x1170] sm:$0xff]
        %v946 = vld [vmem:[%s318 + $0x1178] sm:$0xff]
        %v947 = vld [vmem:[%s318 + $0x1180] sm:$0xff]
        %v948 = vld [vmem:[%s318 + $0x1188] sm:$0xff]
        %v949 = vld [vmem:[%s318 + $0x1190] sm:$0xff]
        %v950 = vld [vmem:[%s318 + $0x1198] sm:$0xff]
        %v951 = vld [vmem:[%s318 + $0x11a0] sm:$0xff]
        %v952 = vld [vmem:[%s318 + $0x11a8] sm:$0xff]
        %v953 = vld [vmem:[%s318 + $0x11b0] sm:$0xff]
        %v954 = vld [vmem:[%s318 + $0x11b8] sm:$0xff]
        %v955 = vld [vmem:[%s318 + $0x11c0] sm:$0xff]
        %v956 = vld [vmem:[%s318 + $0x11c8] sm:$0xff]
        %v957 = vld [vmem:[%s318 + $0x11d0] sm:$0xff]
        %v958 = vld [vmem:[%s318 + $0x11d8] sm:$0xff]
        %v959 = vld [vmem:[%s318 + $0x11e0] sm:$0xff]
        %v960 = vld [vmem:[%s318 + $0x11e8] sm:$0xff]
        %v961 = vld [vmem:[%s318 + $0x11f0] sm:$0xff]
        %v962 = vld [vmem:[%s318 + $0x11f8] sm:$0xff]
        %v963 = vld [vmem:[%s318 + $0x1200] sm:$0xff]
        %v964 = vld [vmem:[%s318 + $0x1208] sm:$0xff]
        %v965 = vld [vmem:[%s318 + $0x1210] sm:$0xff]
        %v966 = vld [vmem:[%s318 + $0x1218] sm:$0xff]
        %v967 = vld [vmem:[%s318 + $0x1220] sm:$0xff]
        %v968 = vld [vmem:[%s318 + $0x1228] sm:$0xff]
        %v969 = vld [vmem:[%s318 + $0x1230] sm:$0xff]
        %v970 = vld [vmem:[%s318 + $0x1238] sm:$0xff]
        %v971 = vld [vmem:[%s318 + $0x1240] sm:$0xff]
        %v972 = vld [vmem:[%s318 + $0x1248] sm:$0xff]
        %v973 = vld [vmem:[%s318 + $0x1250] sm:$0xff]
        %v974 = vld [vmem:[%s318 + $0x1258] sm:$0xff]
        %v975 = vld [vmem:[%s318 + $0x1260] sm:$0xff]
        %v976 = vld [vmem:[%s318 + $0x1268] sm:$0xff]
        %v977 = vld [vmem:[%s318 + $0x1270] sm:$0xff]
        %v978 = vld [vmem:[%s318 + $0x1278] sm:$0xff]
        %v979 = vld [vmem:[%s318 + $0x1280] sm:$0xff]
        %v980 = vld [vmem:[%s318 + $0x1288] sm:$0xff]
        %v981 = vld [vmem:[%s318 + $0x1290] sm:$0xff]
        %v982 = vld [vmem:[%s318 + $0x1298] sm:$0xff]
        %v983 = vld [vmem:[%s318 + $0x12a0] sm:$0xff]
        %v984 = vld [vmem:[%s318 + $0x12a8] sm:$0xff]
        %v985 = vld [vmem:[%s318 + $0x12b0] sm:$0xff]
        %v986 = vld [vmem:[%s318 + $0x12b8] sm:$0xff]
        %v987 = vld [vmem:[%s318 + $0x12c0] sm:$0xff]
        %v988 = vld [vmem:[%s318 + $0x12c8] sm:$0xff]
        %v989 = vld [vmem:[%s318 + $0x12d0] sm:$0xff]
        %v990 = vld [vmem:[%s318 + $0x12d8] sm:$0xff]
        %v991 = vld [vmem:[%s318 + $0x12e0] sm:$0xff]
        %v992 = vld [vmem:[%s318 + $0x12e8] sm:$0xff]
        %v993 = vld [vmem:[%s318 + $0x12f0] sm:$0xff]
        %v994 = vld [vmem:[%s318 + $0x12f8] sm:$0xff]
        %v995 = vld [vmem:[%s318 + $0x1300] sm:$0xff]
        %v996 = vld [vmem:[%s318 + $0x1308] sm:$0xff]
        %v997 = vld [vmem:[%s318 + $0x1310] sm:$0xff]
        %v998 = vld [vmem:[%s318 + $0x1318] sm:$0xff]
        %v999 = vld [vmem:[%s318 + $0x1320] sm:$0xff]
        %v1000 = vld [vmem:[%s318 + $0x1328] sm:$0xff]
        %v1001 = vld [vmem:[%s318 + $0x1330] sm:$0xff]
        %v1002 = vld [vmem:[%s318 + $0x1338] sm:$0xff]
        %v1003 = vld [vmem:[%s318 + $0x1340] sm:$0xff]
        %v1004 = vld [vmem:[%s318 + $0x1348] sm:$0xff]
        %v1005 = vld [vmem:[%s318 + $0x1350] sm:$0xff]
        %v1006 = vld [vmem:[%s318 + $0x1358] sm:$0xff]
        %v1007 = vld [vmem:[%s318 + $0x1360] sm:$0xff]
        %v1008 = vld [vmem:[%s318 + $0x1368] sm:$0xff]
        %v1009 = vld [vmem:[%s318 + $0x1370] sm:$0xff]
        %v1010 = vld [vmem:[%s318 + $0x1378] sm:$0xff]
        %v1011 = vld [vmem:[%s318 + $0x1380] sm:$0xff]
        %v1012 = vld [vmem:[%s318 + $0x1388] sm:$0xff]
        %v1013 = vld [vmem:[%s318 + $0x1390] sm:$0xff]
        %v1014 = vld [vmem:[%s318 + $0x1398] sm:$0xff]
        %v1015 = vld [vmem:[%s318 + $0x13a0] sm:$0xff]
        %v1016 = vld [vmem:[%s318 + $0x13a8] sm:$0xff]
        %v1017 = vld [vmem:[%s318 + $0x13b0] sm:$0xff]
        %v1018 = vld [vmem:[%s318 + $0x13b8] sm:$0xff]
        %v1019 = vld [vmem:[%s318 + $0x13c0] sm:$0xff]
        %v1020 = vld [vmem:[%s318 + $0x13c8] sm:$0xff]
        %v1021 = vld [vmem:[%s318 + $0x13d0] sm:$0xff]
        %v1022 = vld [vmem:[%s318 + $0x13d8] sm:$0xff]
        %v1023 = vld [vmem:[%s318 + $0x13e0] sm:$0xff]
        %v1024 = vld [vmem:[%s318 + $0x13e8] sm:$0xff]
        %v1025 = vld [vmem:[%s318 + $0x13f0] sm:$0xff]
        %v1026 = vld [vmem:[%s318 + $0x13f8] sm:$0xff]
        %v1027 = vld [vmem:[%s318 + $0x1400] sm:$0xff]
        %v1028 = vld [vmem:[%s318 + $0x1408] sm:$0xff]
        %v1029 = vld [vmem:[%s318 + $0x1410] sm:$0xff]
        %v1030 = vld [vmem:[%s318 + $0x1418] sm:$0xff]
        %v1031 = vld [vmem:[%s318 + $0x1420] sm:$0xff]
        %v1032 = vld [vmem:[%s318 + $0x1428] sm:$0xff]
        %v1033 = vld [vmem:[%s318 + $0x1430] sm:$0xff]
        %v1034 = vld [vmem:[%s318 + $0x1438] sm:$0xff]
        %v1035 = vld [vmem:[%s318 + $0x1440] sm:$0xff]
        %v1036 = vld [vmem:[%s318 + $0x1448] sm:$0xff]
        %v1037 = vld [vmem:[%s318 + $0x1450] sm:$0xff]
        %v1038 = vld [vmem:[%s318 + $0x1458] sm:$0xff]
        %v1039 = vld [vmem:[%s318 + $0x1460] sm:$0xff]
        %v1040 = vld [vmem:[%s318 + $0x1468] sm:$0xff]
        %v1041 = vld [vmem:[%s318 + $0x1470] sm:$0xff]
        %v1042 = vld [vmem:[%s318 + $0x1478] sm:$0xff]
        %v1043 = vld [vmem:[%s318 + $0x1480] sm:$0xff]
        %v1044 = vld [vmem:[%s318 + $0x1488] sm:$0xff]
        %v1045 = vld [vmem:[%s318 + $0x1490] sm:$0xff]
        %v1046 = vld [vmem:[%s318 + $0x1498] sm:$0xff]
        %v1047 = vld [vmem:[%s318 + $0x14a0] sm:$0xff]
        %v1048 = vld [vmem:[%s318 + $0x14a8] sm:$0xff]
        %v1049 = vld [vmem:[%s318 + $0x14b0] sm:$0xff]
        %v1050 = vld [vmem:[%s318 + $0x14b8] sm:$0xff]
        %v1051 = vld [vmem:[%s318 + $0x14c0] sm:$0xff]
        %v1052 = vld [vmem:[%s318 + $0x14c8] sm:$0xff]
        %v1053 = vld [vmem:[%s318 + $0x14d0] sm:$0xff]
        %v1054 = vld [vmem:[%s318 + $0x14d8] sm:$0xff]
        %v1055 = vld [vmem:[%s318 + $0x14e0] sm:$0xff]
        %v1056 = vld [vmem:[%s318 + $0x14e8] sm:$0xff]
        %v1057 = vld [vmem:[%s318 + $0x14f0] sm:$0xff]
        %v1058 = vld [vmem:[%s318 + $0x14f8] sm:$0xff]
        %v1059 = vld [vmem:[%s318 + $0x1500] sm:$0xff]
        %v1060 = vld [vmem:[%s318 + $0x1508] sm:$0xff]
        %v1061 = vld [vmem:[%s318 + $0x1510] sm:$0xff]
        %v1062 = vld [vmem:[%s318 + $0x1518] sm:$0xff]
        %v1063 = vld [vmem:[%s318 + $0x1520] sm:$0xff]
        %v1064 = vld [vmem:[%s318 + $0x1528] sm:$0xff]
        %v1065 = vld [vmem:[%s318 + $0x1530] sm:$0xff]
        %v1066 = vld [vmem:[%s318 + $0x1538] sm:$0xff]
        %v1067 = vld [vmem:[%s318 + $0x1540] sm:$0xff]
        %v1068 = vld [vmem:[%s318 + $0x1548] sm:$0xff]
        %v1069 = vld [vmem:[%s318 + $0x1550] sm:$0xff]
        %v1070 = vld [vmem:[%s318 + $0x1558] sm:$0xff]
        %v1071 = vld [vmem:[%s318 + $0x1560] sm:$0xff]
        %v1072 = vld [vmem:[%s318 + $0x1568] sm:$0xff]
        %v1073 = vld [vmem:[%s318 + $0x1570] sm:$0xff]
        %v1074 = vld [vmem:[%s318 + $0x1578] sm:$0xff]
        %v1075 = vld [vmem:[%s318 + $0x1580] sm:$0xff]
        %v1076 = vld [vmem:[%s318 + $0x1588] sm:$0xff]
        %v1077 = vld [vmem:[%s318 + $0x1590] sm:$0xff]
        %v1078 = vld [vmem:[%s318 + $0x1598] sm:$0xff]
        %v1079 = vld [vmem:[%s318 + $0x15a0] sm:$0xff]
        %v1080 = vld [vmem:[%s318 + $0x15a8] sm:$0xff]
        %v1081 = vld [vmem:[%s318 + $0x15b0] sm:$0xff]
        %v1082 = vld [vmem:[%s318 + $0x15b8] sm:$0xff]
        %v1083 = vld [vmem:[%s318 + $0x15c0] sm:$0xff]
        %v1084 = vld [vmem:[%s318 + $0x15c8] sm:$0xff]
        %v1085 = vld [vmem:[%s318 + $0x15d0] sm:$0xff]
        %v1086 = vld [vmem:[%s318 + $0x15d8] sm:$0xff]
        %v1087 = vld [vmem:[%s318 + $0x15e0] sm:$0xff]
        %v1088 = vld [vmem:[%s318 + $0x15e8] sm:$0xff]
        %v1089 = vld [vmem:[%s318 + $0x15f0] sm:$0xff]
        %v1090 = vld [vmem:[%s318 + $0x15f8] sm:$0xff]
        %v1091 = vld [vmem:[%s318 + $0x1600] sm:$0xff]
        %v1092 = vld [vmem:[%s318 + $0x1608] sm:$0xff]
        %v1093 = vld [vmem:[%s318 + $0x1610] sm:$0xff]
        %v1094 = vld [vmem:[%s318 + $0x1618] sm:$0xff]
        %v1095 = vld [vmem:[%s318 + $0x1620] sm:$0xff]
        %v1096 = vld [vmem:[%s318 + $0x1628] sm:$0xff]
        %v1097 = vld [vmem:[%s318 + $0x1630] sm:$0xff]
        %v1098 = vld [vmem:[%s318 + $0x1638] sm:$0xff]
        %v1099 = vld [vmem:[%s318 + $0x1640] sm:$0xff]
        %v1100 = vld [vmem:[%s318 + $0x1648] sm:$0xff]
        %v1101 = vld [vmem:[%s318 + $0x1650] sm:$0xff]
        %v1102 = vld [vmem:[%s318 + $0x1658] sm:$0xff]
        %v1103 = vld [vmem:[%s318 + $0x1660] sm:$0xff]
        %v1104 = vld [vmem:[%s318 + $0x1668] sm:$0xff]
        %v1105 = vld [vmem:[%s318 + $0x1670] sm:$0xff]
        %v1106 = vld [vmem:[%s318 + $0x1678] sm:$0xff]
        %v1107 = vld [vmem:[%s318 + $0x1680] sm:$0xff]
        %v1108 = vld [vmem:[%s318 + $0x1688] sm:$0xff]
        %v1109 = vld [vmem:[%s318 + $0x1690] sm:$0xff]
        %v1110 = vld [vmem:[%s318 + $0x1698] sm:$0xff]
        %v1111 = vld [vmem:[%s318 + $0x16a0] sm:$0xff]
        %v1112 = vld [vmem:[%s318 + $0x16a8] sm:$0xff]
        %v1113 = vld [vmem:[%s318 + $0x16b0] sm:$0xff]
        %v1114 = vld [vmem:[%s318 + $0x16b8] sm:$0xff]
        %v1115 = vld [vmem:[%s318 + $0x16c0] sm:$0xff]
        %v1116 = vld [vmem:[%s318 + $0x16c8] sm:$0xff]
        %v1117 = vld [vmem:[%s318 + $0x16d0] sm:$0xff]
        %v1118 = vld [vmem:[%s318 + $0x16d8] sm:$0xff]
        %v1119 = vld [vmem:[%s318 + $0x16e0] sm:$0xff]
        %v1120 = vld [vmem:[%s318 + $0x16e8] sm:$0xff]
        %v1121 = vld [vmem:[%s318 + $0x16f0] sm:$0xff]
        %v1122 = vld [vmem:[%s318 + $0x16f8] sm:$0xff]
        %v1123 = vld [vmem:[%s318 + $0x1700] sm:$0xff]
        %v1124 = vld [vmem:[%s318 + $0x1708] sm:$0xff]
        %v1125 = vld [vmem:[%s318 + $0x1710] sm:$0xff]
        %v1126 = vld [vmem:[%s318 + $0x1718] sm:$0xff]
        %v1127 = vld [vmem:[%s318 + $0x1720] sm:$0xff]
        %v1128 = vld [vmem:[%s318 + $0x1728] sm:$0xff]
        %v1129 = vld [vmem:[%s318 + $0x1730] sm:$0xff]
        %v1130 = vld [vmem:[%s318 + $0x1738] sm:$0xff]
        %v1131 = vld [vmem:[%s318 + $0x1740] sm:$0xff]
        %v1132 = vld [vmem:[%s318 + $0x1748] sm:$0xff]
        %v1133 = vld [vmem:[%s318 + $0x1750] sm:$0xff]
        %v1134 = vld [vmem:[%s318 + $0x1758] sm:$0xff]
        %v1135 = vld [vmem:[%s318 + $0x1760] sm:$0xff]
        %v1136 = vld [vmem:[%s318 + $0x1768] sm:$0xff]
        %v1137 = vld [vmem:[%s318 + $0x1770] sm:$0xff]
        %v1138 = vld [vmem:[%s318 + $0x1778] sm:$0xff]
        %v1139 = vld [vmem:[%s318 + $0x1780] sm:$0xff]
        %v1140 = vld [vmem:[%s318 + $0x1788] sm:$0xff]
        %v1141 = vld [vmem:[%s318 + $0x1790] sm:$0xff]
        %v1142 = vld [vmem:[%s318 + $0x1798] sm:$0xff]
        %v1143 = vld [vmem:[%s318 + $0x17a0] sm:$0xff]
        %v1144 = vld [vmem:[%s318 + $0x17a8] sm:$0xff]
        %v1145 = vld [vmem:[%s318 + $0x17b0] sm:$0xff]
        %v1146 = vld [vmem:[%s318 + $0x17b8] sm:$0xff]
        %v1147 = vld [vmem:[%s318 + $0x17c0] sm:$0xff]
        %v1148 = vld [vmem:[%s318 + $0x17c8] sm:$0xff]
        %v1149 = vld [vmem:[%s318 + $0x17d0] sm:$0xff]
        %v1150 = vld [vmem:[%s318 + $0x17d8] sm:$0xff]
        %v1151 = vld [vmem:[%s318 + $0x17e0] sm:$0xff]
        %v1152 = vld [vmem:[%s318 + $0x17e8] sm:$0xff]
        %v1153 = vld [vmem:[%s318 + $0x17f0] sm:$0xff]
        %v1154 = vld [vmem:[%s318 + $0x17f8] sm:$0xff]
        %v1155 = vld [vmem:[%s318 + $0x1800] sm:$0xff]
        %v1156 = vld [vmem:[%s318 + $0x1808] sm:$0xff]
        %v1157 = vld [vmem:[%s318 + $0x1810] sm:$0xff]
        %v1158 = vld [vmem:[%s318 + $0x1818] sm:$0xff]
        %v1159 = vld [vmem:[%s318 + $0x1820] sm:$0xff]
        %v1160 = vld [vmem:[%s318 + $0x1828] sm:$0xff]
        %v1161 = vld [vmem:[%s318 + $0x1830] sm:$0xff]
        %v1162 = vld [vmem:[%s318 + $0x1838] sm:$0xff]
        %v1163 = vld [vmem:[%s318 + $0x1840] sm:$0xff]
        %v1164 = vld [vmem:[%s318 + $0x1848] sm:$0xff]
        %v1165 = vld [vmem:[%s318 + $0x1850] sm:$0xff]
        %v1166 = vld [vmem:[%s318 + $0x1858] sm:$0xff]
        %v1167 = vld [vmem:[%s318 + $0x1860] sm:$0xff]
        %v1168 = vld [vmem:[%s318 + $0x1868] sm:$0xff]
        %v1169 = vld [vmem:[%s318 + $0x1870] sm:$0xff]
        %v1170 = vld [vmem:[%s318 + $0x1878] sm:$0xff]
        %v1171 = vld [vmem:[%s318 + $0x1880] sm:$0xff]
        %v1172 = vld [vmem:[%s318 + $0x1888] sm:$0xff]
        %v1173 = vld [vmem:[%s318 + $0x1890] sm:$0xff]
        %v1174 = vld [vmem:[%s318 + $0x1898] sm:$0xff]
        %v1175 = vld [vmem:[%s318 + $0x18a0] sm:$0xff]
        %v1176 = vld [vmem:[%s318 + $0x18a8] sm:$0xff]
        %v1177 = vld [vmem:[%s318 + $0x18b0] sm:$0xff]
        %v1178 = vld [vmem:[%s318 + $0x18b8] sm:$0xff]
        %v1179 = vld [vmem:[%s318 + $0x18c0] sm:$0xff]
        %v1180 = vld [vmem:[%s318 + $0x18c8] sm:$0xff]
        %v1181 = vld [vmem:[%s318 + $0x18d0] sm:$0xff]
        %v1182 = vld [vmem:[%s318 + $0x18d8] sm:$0xff]
        %v1183 = vld [vmem:[%s318 + $0x18e0] sm:$0xff]
        %v1184 = vld [vmem:[%s318 + $0x18e8] sm:$0xff]
        %v1185 = vld [vmem:[%s318 + $0x18f0] sm:$0xff]
        %v1186 = vld [vmem:[%s318 + $0x18f8] sm:$0xff]
        %v1187 = vld [vmem:[%s318 + $0x1900] sm:$0xff]
        %v1188 = vld [vmem:[%s318 + $0x1908] sm:$0xff]
        %v1189 = vld [vmem:[%s318 + $0x1910] sm:$0xff]
        %v1190 = vld [vmem:[%s318 + $0x1918] sm:$0xff]
        %v1191 = vld [vmem:[%s318 + $0x1920] sm:$0xff]
        %v1192 = vld [vmem:[%s318 + $0x1928] sm:$0xff]
        %v1193 = vld [vmem:[%s318 + $0x1930] sm:$0xff]
        %v1194 = vld [vmem:[%s318 + $0x1938] sm:$0xff]
        %v1195 = vld [vmem:[%s318 + $0x1940] sm:$0xff]
        %v1196 = vld [vmem:[%s318 + $0x1948] sm:$0xff]
        %v1197 = vld [vmem:[%s318 + $0x1950] sm:$0xff]
        %v1198 = vld [vmem:[%s318 + $0x1958] sm:$0xff]
        %v1199 = vld [vmem:[%s318 + $0x1960] sm:$0xff]
        %v1200 = vld [vmem:[%s318 + $0x1968] sm:$0xff]
        %v1201 = vld [vmem:[%s318 + $0x1970] sm:$0xff]
        %v1202 = vld [vmem:[%s318 + $0x1978] sm:$0xff]
        %v1203 = vld [vmem:[%s318 + $0x1980] sm:$0xff]
        %v1204 = vld [vmem:[%s318 + $0x1988] sm:$0xff]
        %v1205 = vld [vmem:[%s318 + $0x1990] sm:$0xff]
        %v1206 = vld [vmem:[%s318 + $0x1998] sm:$0xff]
        %v1207 = vld [vmem:[%s318 + $0x19a0] sm:$0xff]
        %v1208 = vld [vmem:[%s318 + $0x19a8] sm:$0xff]
        %v1209 = vld [vmem:[%s318 + $0x19b0] sm:$0xff]
        %v1210 = vld [vmem:[%s318 + $0x19b8] sm:$0xff]
        %v1211 = vld [vmem:[%s318 + $0x19c0] sm:$0xff]
        %v1212 = vld [vmem:[%s318 + $0x19c8] sm:$0xff]
        %v1213 = vld [vmem:[%s318 + $0x19d0] sm:$0xff]
        %v1214 = vld [vmem:[%s318 + $0x19d8] sm:$0xff]
        %v1215 = vld [vmem:[%s318 + $0x19e0] sm:$0xff]
        %v1216 = vld [vmem:[%s318 + $0x19e8] sm:$0xff]
        %v1217 = vld [vmem:[%s318 + $0x19f0] sm:$0xff]
        %v1218 = vld [vmem:[%s318 + $0x19f8] sm:$0xff]
        %v1219 = vld [vmem:[%s318 + $0x1a00] sm:$0xff]
        %v1220 = vld [vmem:[%s318 + $0x1a08] sm:$0xff]
        %v1221 = vld [vmem:[%s318 + $0x1a10] sm:$0xff]
        %v1222 = vld [vmem:[%s318 + $0x1a18] sm:$0xff]
        %v1223 = vld [vmem:[%s318 + $0x1a20] sm:$0xff]
        %v1224 = vld [vmem:[%s318 + $0x1a28] sm:$0xff]
        %v1225 = vld [vmem:[%s318 + $0x1a30] sm:$0xff]
        %v1226 = vld [vmem:[%s318 + $0x1a38] sm:$0xff]
        %v1227 = vld [vmem:[%s318 + $0x1a40] sm:$0xff]
        %v1228 = vld [vmem:[%s318 + $0x1a48] sm:$0xff]
        %v1229 = vld [vmem:[%s318 + $0x1a50] sm:$0xff]
        %v1230 = vld [vmem:[%s318 + $0x1a58] sm:$0xff]
        %v1231 = vld [vmem:[%s318 + $0x1a60] sm:$0xff]
        %v1232 = vld [vmem:[%s318 + $0x1a68] sm:$0xff]
        %v1233 = vld [vmem:[%s318 + $0x1a70] sm:$0xff]
        %v1234 = vld [vmem:[%s318 + $0x1a78] sm:$0xff]
        %v1235 = vld [vmem:[%s318 + $0x1a80] sm:$0xff]
        %v1236 = vld [vmem:[%s318 + $0x1a88] sm:$0xff]
        %v1237 = vld [vmem:[%s318 + $0x1a90] sm:$0xff]
        %v1238 = vld [vmem:[%s318 + $0x1a98] sm:$0xff]
        %v1239 = vld [vmem:[%s318 + $0x1aa0] sm:$0xff]
        %v1240 = vld [vmem:[%s318 + $0x1aa8] sm:$0xff]
        %v1241 = vld [vmem:[%s318 + $0x1ab0] sm:$0xff]
        %v1242 = vld [vmem:[%s318 + $0x1ab8] sm:$0xff]
        %v1243 = vld [vmem:[%s318 + $0x1ac0] sm:$0xff]
        %v1244 = vld [vmem:[%s318 + $0x1ac8] sm:$0xff]
        %v1245 = vld [vmem:[%s318 + $0x1ad0] sm:$0xff]
        %v1246 = vld [vmem:[%s318 + $0x1ad8] sm:$0xff]
        %v1247 = vld [vmem:[%s318 + $0x1ae0] sm:$0xff]
        %v1248 = vld [vmem:[%s318 + $0x1ae8] sm:$0xff]
        %v1249 = vld [vmem:[%s318 + $0x1af0] sm:$0xff]
        %v1250 = vld [vmem:[%s318 + $0x1af8] sm:$0xff]
        %v1251 = vld [vmem:[%s318 + $0x1b00] sm:$0xff]
        %v1252 = vld [vmem:[%s318 + $0x1b08] sm:$0xff]
        %v1253 = vld [vmem:[%s318 + $0x1b10] sm:$0xff]
        %v1254 = vld [vmem:[%s318 + $0x1b18] sm:$0xff]
        %v1255 = vld [vmem:[%s318 + $0x1b20] sm:$0xff]
        %v1256 = vld [vmem:[%s318 + $0x1b28] sm:$0xff]
        %v1257 = vld [vmem:[%s318 + $0x1b30] sm:$0xff]
        %v1258 = vld [vmem:[%s318 + $0x1b38] sm:$0xff]
        %v1259 = vld [vmem:[%s318 + $0x1b40] sm:$0xff]
        %v1260 = vld [vmem:[%s318 + $0x1b48] sm:$0xff]
        %v1261 = vld [vmem:[%s318 + $0x1b50] sm:$0xff]
        %v1262 = vld [vmem:[%s318 + $0x1b58] sm:$0xff]
        %v1263 = vld [vmem:[%s318 + $0x1b60] sm:$0xff]
        %v1264 = vld [vmem:[%s318 + $0x1b68] sm:$0xff]
        %v1265 = vld [vmem:[%s318 + $0x1b70] sm:$0xff]
        %v1266 = vld [vmem:[%s318 + $0x1b78] sm:$0xff]
        %v1267 = vld [vmem:[%s318 + $0x1b80] sm:$0xff]
        %v1268 = vld [vmem:[%s318 + $0x1b88] sm:$0xff]
        %v1269 = vld [vmem:[%s318 + $0x1b90] sm:$0xff]
        %v1270 = vld [vmem:[%s318 + $0x1b98] sm:$0xff]
        %v1271 = vld [vmem:[%s318 + $0x1ba0] sm:$0xff]
        %v1272 = vld [vmem:[%s318 + $0x1ba8] sm:$0xff]
        %v1273 = vld [vmem:[%s318 + $0x1bb0] sm:$0xff]
        %v1274 = vld [vmem:[%s318 + $0x1bb8] sm:$0xff]
        %v1275 = vld [vmem:[%s318 + $0x1bc0] sm:$0xff]
        %v1276 = vld [vmem:[%s318 + $0x1bc8] sm:$0xff]
        %v1277 = vld [vmem:[%s318 + $0x1bd0] sm:$0xff]
        %v1278 = vld [vmem:[%s318 + $0x1bd8] sm:$0xff]
        %v1279 = vld [vmem:[%s318 + $0x1be0] sm:$0xff]
        %v1280 = vld [vmem:[%s318 + $0x1be8] sm:$0xff]
        %v1281 = vld [vmem:[%s318 + $0x1bf0] sm:$0xff]
        %v1282 = vld [vmem:[%s318 + $0x1bf8] sm:$0xff]
        %v1283 = vld [vmem:[%s318 + $0x1c00] sm:$0xff]
        %v1284 = vld [vmem:[%s318 + $0x1c08] sm:$0xff]
        %v1285 = vld [vmem:[%s318 + $0x1c10] sm:$0xff]
        %v1286 = vld [vmem:[%s318 + $0x1c18] sm:$0xff]
        %v1287 = vld [vmem:[%s318 + $0x1c20] sm:$0xff]
        %v1288 = vld [vmem:[%s318 + $0x1c28] sm:$0xff]
        %v1289 = vld [vmem:[%s318 + $0x1c30] sm:$0xff]
        %v1290 = vld [vmem:[%s318 + $0x1c38] sm:$0xff]
        %v1291 = vld [vmem:[%s318 + $0x1c40] sm:$0xff]
        %v1292 = vld [vmem:[%s318 + $0x1c48] sm:$0xff]
        %v1293 = vld [vmem:[%s318 + $0x1c50] sm:$0xff]
        %v1294 = vld [vmem:[%s318 + $0x1c58] sm:$0xff]
        %v1295 = vld [vmem:[%s318 + $0x1c60] sm:$0xff]
        %v1296 = vld [vmem:[%s318 + $0x1c68] sm:$0xff]
        %v1297 = vld [vmem:[%s318 + $0x1c70] sm:$0xff]
        %v1298 = vld [vmem:[%s318 + $0x1c78] sm:$0xff]
        %v1299 = vld [vmem:[%s318 + $0x1c80] sm:$0xff]
        %v1300 = vld [vmem:[%s318 + $0x1c88] sm:$0xff]
        %v1301 = vld [vmem:[%s318 + $0x1c90] sm:$0xff]
        %v1302 = vld [vmem:[%s318 + $0x1c98] sm:$0xff]
        %v1303 = vld [vmem:[%s318 + $0x1ca0] sm:$0xff]
        %v1304 = vld [vmem:[%s318 + $0x1ca8] sm:$0xff]
        %v1305 = vld [vmem:[%s318 + $0x1cb0] sm:$0xff]
        %v1306 = vld [vmem:[%s318 + $0x1cb8] sm:$0xff]
        %v1307 = vld [vmem:[%s318 + $0x1cc0] sm:$0xff]
        %v1308 = vld [vmem:[%s318 + $0x1cc8] sm:$0xff]
        %v1309 = vld [vmem:[%s318 + $0x1cd0] sm:$0xff]
        %v1310 = vld [vmem:[%s318 + $0x1cd8] sm:$0xff]
        %v1311 = vld [vmem:[%s318 + $0x1ce0] sm:$0xff]
        %v1312 = vld [vmem:[%s318 + $0x1ce8] sm:$0xff]
        %v1313 = vld [vmem:[%s318 + $0x1cf0] sm:$0xff]
        %v1314 = vld [vmem:[%s318 + $0x1cf8] sm:$0xff]
        %v1315 = vld [vmem:[%s318 + $0x1d00] sm:$0xff]
        %v1316 = vld [vmem:[%s318 + $0x1d08] sm:$0xff]
        %v1317 = vld [vmem:[%s318 + $0x1d10] sm:$0xff]
        %v1318 = vld [vmem:[%s318 + $0x1d18] sm:$0xff]
        %v1319 = vld [vmem:[%s318 + $0x1d20] sm:$0xff]
        %v1320 = vld [vmem:[%s318 + $0x1d28] sm:$0xff]
        %v1321 = vld [vmem:[%s318 + $0x1d30] sm:$0xff]
        %v1322 = vld [vmem:[%s318 + $0x1d38] sm:$0xff]
        %v1323 = vld [vmem:[%s318 + $0x1d40] sm:$0xff]
        %v1324 = vld [vmem:[%s318 + $0x1d48] sm:$0xff]
        %v1325 = vld [vmem:[%s318 + $0x1d50] sm:$0xff]
        %v1326 = vld [vmem:[%s318 + $0x1d58] sm:$0xff]
        %v1327 = vld [vmem:[%s318 + $0x1d60] sm:$0xff]
        %v1328 = vld [vmem:[%s318 + $0x1d68] sm:$0xff]
        %v1329 = vld [vmem:[%s318 + $0x1d70] sm:$0xff]
        %v1330 = vld [vmem:[%s318 + $0x1d78] sm:$0xff]
        %v1331 = vld [vmem:[%s318 + $0x1d80] sm:$0xff]
        %v1332 = vld [vmem:[%s318 + $0x1d88] sm:$0xff]
        %v1333 = vld [vmem:[%s318 + $0x1d90] sm:$0xff]
        %v1334 = vld [vmem:[%s318 + $0x1d98] sm:$0xff]
        %v1335 = vld [vmem:[%s318 + $0x1da0] sm:$0xff]
        %v1336 = vld [vmem:[%s318 + $0x1da8] sm:$0xff]
        %v1337 = vld [vmem:[%s318 + $0x1db0] sm:$0xff]
        %v1338 = vld [vmem:[%s318 + $0x1db8] sm:$0xff]
        %v1339 = vld [vmem:[%s318 + $0x1dc0] sm:$0xff]
        %v1340 = vld [vmem:[%s318 + $0x1dc8] sm:$0xff]
        %v1341 = vld [vmem:[%s318 + $0x1dd0] sm:$0xff]
        %v1342 = vld [vmem:[%s318 + $0x1dd8] sm:$0xff]
        %v1343 = vld [vmem:[%s318 + $0x1de0] sm:$0xff]
        %v1344 = vld [vmem:[%s318 + $0x1de8] sm:$0xff]
        %v1345 = vld [vmem:[%s318 + $0x1df0] sm:$0xff]
        %v1346 = vld [vmem:[%s318 + $0x1df8] sm:$0xff]
        %v1347 = vld [vmem:[%s318 + $0x1e00] sm:$0xff]
        %v1348 = vld [vmem:[%s318 + $0x1e08] sm:$0xff]
        %v1349 = vld [vmem:[%s318 + $0x1e10] sm:$0xff]
        %v1350 = vld [vmem:[%s318 + $0x1e18] sm:$0xff]
        %v1351 = vld [vmem:[%s318 + $0x1e20] sm:$0xff]
        %v1352 = vld [vmem:[%s318 + $0x1e28] sm:$0xff]
        %v1353 = vld [vmem:[%s318 + $0x1e30] sm:$0xff]
        %v1354 = vld [vmem:[%s318 + $0x1e38] sm:$0xff]
        %v1355 = vld [vmem:[%s318 + $0x1e40] sm:$0xff]
        %v1356 = vld [vmem:[%s318 + $0x1e48] sm:$0xff]
        %v1357 = vld [vmem:[%s318 + $0x1e50] sm:$0xff]
        %v1358 = vld [vmem:[%s318 + $0x1e58] sm:$0xff]
        %v1359 = vld [vmem:[%s318 + $0x1e60] sm:$0xff]
        %v1360 = vld [vmem:[%s318 + $0x1e68] sm:$0xff]
        %v1361 = vld [vmem:[%s318 + $0x1e70] sm:$0xff]
        %v1362 = vld [vmem:[%s318 + $0x1e78] sm:$0xff]
        %v1363 = vld [vmem:[%s318 + $0x1e80] sm:$0xff]
        %v1364 = vld [vmem:[%s318 + $0x1e88] sm:$0xff]
        %v1365 = vld [vmem:[%s318 + $0x1e90] sm:$0xff]
        %v1366 = vld [vmem:[%s318 + $0x1e98] sm:$0xff]
        %v1367 = vld [vmem:[%s318 + $0x1ea0] sm:$0xff]
        %v1368 = vld [vmem:[%s318 + $0x1ea8] sm:$0xff]
        %v1369 = vld [vmem:[%s318 + $0x1eb0] sm:$0xff]
        %v1370 = vld [vmem:[%s318 + $0x1eb8] sm:$0xff]
        %v1371 = vld [vmem:[%s318 + $0x1ec0] sm:$0xff]
        %v1372 = vld [vmem:[%s318 + $0x1ec8] sm:$0xff]
        %v1373 = vld [vmem:[%s318 + $0x1ed0] sm:$0xff]
        %v1374 = vld [vmem:[%s318 + $0x1ed8] sm:$0xff]
        %v1375 = vld [vmem:[%s318 + $0x1ee0] sm:$0xff]
        %v1376 = vld [vmem:[%s318 + $0x1ee8] sm:$0xff]
        %v1377 = vld [vmem:[%s318 + $0x1ef0] sm:$0xff]
        %v1378 = vld [vmem:[%s318 + $0x1ef8] sm:$0xff]
        %v1379 = vld [vmem:[%s318 + $0x1f00] sm:$0xff]
        %v1380 = vld [vmem:[%s318 + $0x1f08] sm:$0xff]
        %v1381 = vld [vmem:[%s318 + $0x1f10] sm:$0xff]
        %v1382 = vld [vmem:[%s318 + $0x1f18] sm:$0xff]
        %v1383 = vld [vmem:[%s318 + $0x1f20] sm:$0xff]
        %v1384 = vld [vmem:[%s318 + $0x1f28] sm:$0xff]
        %v1385 = vld [vmem:[%s318 + $0x1f30] sm:$0xff]
        %v1386 = vld [vmem:[%s318 + $0x1f38] sm:$0xff]
        %v1387 = vld [vmem:[%s318 + $0x1f40] sm:$0xff]
        %v1388 = vld [vmem:[%s318 + $0x1f48] sm:$0xff]
        %v1389 = vld [vmem:[%s318 + $0x1f50] sm:$0xff]
        %v1390 = vld [vmem:[%s318 + $0x1f58] sm:$0xff]
        %v1391 = vld [vmem:[%s318 + $0x1f60] sm:$0xff]
        %v1392 = vld [vmem:[%s318 + $0x1f68] sm:$0xff]
        %v1393 = vld [vmem:[%s318 + $0x1f70] sm:$0xff]
        %v1394 = vld [vmem:[%s318 + $0x1f78] sm:$0xff]
        %v1395 = vld [vmem:[%s318 + $0x1f80] sm:$0xff]
        %v1396 = vld [vmem:[%s318 + $0x1f88] sm:$0xff]
        %v1397 = vld [vmem:[%s318 + $0x1f90] sm:$0xff]
        %v1398 = vld [vmem:[%s318 + $0x1f98] sm:$0xff]
        %v1399 = vld [vmem:[%s318 + $0x1fa0] sm:$0xff]
        %v1400 = vld [vmem:[%s318 + $0x1fa8] sm:$0xff]
        %v1401 = vld [vmem:[%s318 + $0x1fb0] sm:$0xff]
        %v1402 = vld [vmem:[%s318 + $0x1fb8] sm:$0xff]
        %v1403 = vld [vmem:[%s318 + $0x1fc0] sm:$0xff]
        %v1404 = vld [vmem:[%s318 + $0x1fc8] sm:$0xff]
        %v1405 = vld [vmem:[%s318 + $0x1fd0] sm:$0xff]
        %v1406 = vld [vmem:[%s318 + $0x1fd8] sm:$0xff]
        %v1407 = vld [vmem:[%s318 + $0x1fe0] sm:$0xff]
        %v1408 = vld [vmem:[%s318 + $0x1fe8] sm:$0xff]
        %v1409 = vld [vmem:[%s318 + $0x1ff0] sm:$0xff]
        %v1410 = vld [vmem:[%s318 + $0x1ff8] sm:$0xff]
        %v1411 = vld [vmem:[%s318 + $0x2000] sm:$0xff]
        %v1412 = vld [vmem:[%s318 + $0x2008] sm:$0xff]
        %v1413 = vld [vmem:[%s318 + $0x2010] sm:$0xff]
        %v1414 = vld [vmem:[%s318 + $0x2018] sm:$0xff]
        %v1415 = vld [vmem:[%s318 + $0x2020] sm:$0xff]
        %v1416 = vld [vmem:[%s318 + $0x2028] sm:$0xff]
        %v1417 = vld [vmem:[%s318 + $0x2030] sm:$0xff]
        %v1418 = vld [vmem:[%s318 + $0x2038] sm:$0xff]
        %v1419 = vld [vmem:[%s318 + $0x2040] sm:$0xff]
        %v1420 = vld [vmem:[%s318 + $0x2048] sm:$0xff]
        %v1421 = vld [vmem:[%s318 + $0x2050] sm:$0xff]
        %v1422 = vld [vmem:[%s318 + $0x2058] sm:$0xff]
        %v1423 = vld [vmem:[%s318 + $0x2060] sm:$0xff]
        %v1424 = vld [vmem:[%s318 + $0x2068] sm:$0xff]
        %v1425 = vld [vmem:[%s318 + $0x2070] sm:$0xff]
        %v1426 = vld [vmem:[%s318 + $0x2078] sm:$0xff]
        %v1427 = vld [vmem:[%s318 + $0x2080] sm:$0xff]
        %v1428 = vld [vmem:[%s318 + $0x2088] sm:$0xff]
        %v1429 = vld [vmem:[%s318 + $0x2090] sm:$0xff]
        %v1430 = vld [vmem:[%s318 + $0x2098] sm:$0xff]
        %v1431 = vld [vmem:[%s318 + $0x20a0] sm:$0xff]
        %v1432 = vld [vmem:[%s318 + $0x20a8] sm:$0xff]
        %v1433 = vld [vmem:[%s318 + $0x20b0] sm:$0xff]
        %v1434 = vld [vmem:[%s318 + $0x20b8] sm:$0xff]
        %v1435 = vld [vmem:[%s318 + $0x20c0] sm:$0xff]
        %v1436 = vld [vmem:[%s318 + $0x20c8] sm:$0xff]
        %v1437 = vld [vmem:[%s318 + $0x20d0] sm:$0xff]
        %v1438 = vld [vmem:[%s318 + $0x20d8] sm:$0xff]
        %v1439 = vld [vmem:[%s318 + $0x20e0] sm:$0xff]
        %v1440 = vld [vmem:[%s318 + $0x20e8] sm:$0xff]
        %v1441 = vld [vmem:[%s318 + $0x20f0] sm:$0xff]
        %v1442 = vld [vmem:[%s318 + $0x20f8] sm:$0xff]
        %v1443 = vld [vmem:[%s318 + $0x2100] sm:$0xff]
        %v1444 = vld [vmem:[%s318 + $0x2108] sm:$0xff]
        %v1445 = vld [vmem:[%s318 + $0x2110] sm:$0xff]
        %v1446 = vld [vmem:[%s318 + $0x2118] sm:$0xff]
        %v1447 = vld [vmem:[%s318 + $0x2120] sm:$0xff]
        %v1448 = vld [vmem:[%s318 + $0x2128] sm:$0xff]
        %v1449 = vld [vmem:[%s318 + $0x2130] sm:$0xff]
        %v1450 = vld [vmem:[%s318 + $0x2138] sm:$0xff]
        %v1451 = vld [vmem:[%s318 + $0x2140] sm:$0xff]
        %v1452 = vld [vmem:[%s318 + $0x2148] sm:$0xff]
        %v1453 = vld [vmem:[%s318 + $0x2150] sm:$0xff]
        %v1454 = vld [vmem:[%s318 + $0x2158] sm:$0xff]
        %v1455 = vld [vmem:[%s318 + $0x2160] sm:$0xff]
        %v1456 = vld [vmem:[%s318 + $0x2168] sm:$0xff]
        %v1457 = vld [vmem:[%s318 + $0x2170] sm:$0xff]
        %v1458 = vld [vmem:[%s318 + $0x2178] sm:$0xff]
        %v1459 = vld [vmem:[%s318 + $0x2180] sm:$0xff]
        %v1460 = vld [vmem:[%s318 + $0x2188] sm:$0xff]
        %v1461 = vld [vmem:[%s318 + $0x2190] sm:$0xff]
        %v1462 = vld [vmem:[%s318 + $0x2198] sm:$0xff]
        %v1463 = vld [vmem:[%s318 + $0x21a0] sm:$0xff]
        %v1464 = vld [vmem:[%s318 + $0x21a8] sm:$0xff]
        %v1465 = vld [vmem:[%s318 + $0x21b0] sm:$0xff]
        %v1466 = vld [vmem:[%s318 + $0x21b8] sm:$0xff]
        %v1467 = vld [vmem:[%s318 + $0x21c0] sm:$0xff]
        %v1468 = vld [vmem:[%s318 + $0x21c8] sm:$0xff]
        %v1469 = vld [vmem:[%s318 + $0x21d0] sm:$0xff]
        %v1470 = vld [vmem:[%s318 + $0x21d8] sm:$0xff]
        %v1471 = vld [vmem:[%s318 + $0x21e0] sm:$0xff]
        %v1472 = vld [vmem:[%s318 + $0x21e8] sm:$0xff]
        %v1473 = vld [vmem:[%s318 + $0x21f0] sm:$0xff]
        %v1474 = vld [vmem:[%s318 + $0x21f8] sm:$0xff]
        %v1475 = vld [vmem:[%s318 + $0x2200] sm:$0xff]
        %v1476 = vld [vmem:[%s318 + $0x2208] sm:$0xff]
        %v1477 = vld [vmem:[%s318 + $0x2210] sm:$0xff]
        %v1478 = vld [vmem:[%s318 + $0x2218] sm:$0xff]
        %v1479 = vld [vmem:[%s318 + $0x2220] sm:$0xff]
        %v1480 = vld [vmem:[%s318 + $0x2228] sm:$0xff]
        %v1481 = vld [vmem:[%s318 + $0x2230] sm:$0xff]
        %v1482 = vld [vmem:[%s318 + $0x2238] sm:$0xff]
        %v1483 = vld [vmem:[%s318 + $0x2240] sm:$0xff]
        %v1484 = vld [vmem:[%s318 + $0x2248] sm:$0xff]
        %v1485 = vld [vmem:[%s318 + $0x2250] sm:$0xff]
        %v1486 = vld [vmem:[%s318 + $0x2258] sm:$0xff]
        %v1487 = vld [vmem:[%s318 + $0x2260] sm:$0xff]
        %v1488 = vld [vmem:[%s318 + $0x2268] sm:$0xff]
        %v1489 = vld [vmem:[%s318 + $0x2270] sm:$0xff]
        %v1490 = vld [vmem:[%s318 + $0x2278] sm:$0xff]
        %v1491 = vld [vmem:[%s318 + $0x2280] sm:$0xff]
        %v1492 = vld [vmem:[%s318 + $0x2288] sm:$0xff]
        %v1493 = vld [vmem:[%s318 + $0x2290] sm:$0xff]
        %v1494 = vld [vmem:[%s318 + $0x2298] sm:$0xff]
        %v1495 = vld [vmem:[%s318 + $0x22a0] sm:$0xff]
        %v1496 = vld [vmem:[%s318 + $0x22a8] sm:$0xff]
        %v1497 = vld [vmem:[%s318 + $0x22b0] sm:$0xff]
        %v1498 = vld [vmem:[%s318 + $0x22b8] sm:$0xff]
        %v1499 = vld [vmem:[%s318 + $0x22c0] sm:$0xff]
        %v1500 = vld [vmem:[%s318 + $0x22c8] sm:$0xff]
        %v1501 = vld [vmem:[%s318 + $0x22d0] sm:$0xff]
        %v1502 = vld [vmem:[%s318 + $0x22d8] sm:$0xff]
        %v1503 = vld [vmem:[%s318 + $0x22e0] sm:$0xff]
        %v1504 = vld [vmem:[%s318 + $0x22e8] sm:$0xff]
        %v1505 = vld [vmem:[%s318 + $0x22f0] sm:$0xff]
        %v1506 = vld [vmem:[%s318 + $0x22f8] sm:$0xff]
        %v1507 = vld [vmem:[%s318 + $0x2300] sm:$0xff]
        %v1508 = vld [vmem:[%s318 + $0x2308] sm:$0xff]
        %v1509 = vld [vmem:[%s318 + $0x2310] sm:$0xff]
        %v1510 = vld [vmem:[%s318 + $0x2318] sm:$0xff]
        %v1511 = vld [vmem:[%s318 + $0x2320] sm:$0xff]
        %v1512 = vld [vmem:[%s318 + $0x2328] sm:$0xff]
        %v1513 = vld [vmem:[%s318 + $0x2330] sm:$0xff]
        %v1514 = vld [vmem:[%s318 + $0x2338] sm:$0xff]
        %v1515 = vld [vmem:[%s318 + $0x2340] sm:$0xff]
        %v1516 = vld [vmem:[%s318 + $0x2348] sm:$0xff]
        %v1517 = vld [vmem:[%s318 + $0x2350] sm:$0xff]
        %v1518 = vld [vmem:[%s318 + $0x2358] sm:$0xff]
        %v1519 = vld [vmem:[%s318 + $0x2360] sm:$0xff]
        %v1520 = vld [vmem:[%s318 + $0x2368] sm:$0xff]
        %v1521 = vld [vmem:[%s318 + $0x2370] sm:$0xff]
        %v1522 = vld [vmem:[%s318 + $0x2378] sm:$0xff]
        %v1523 = vld [vmem:[%s318 + $0x2380] sm:$0xff]
        %v1524 = vld [vmem:[%s318 + $0x2388] sm:$0xff]
        %v1525 = vld [vmem:[%s318 + $0x2390] sm:$0xff]
        %v1526 = vld [vmem:[%s318 + $0x2398] sm:$0xff]
        %v1527 = vld [vmem:[%s318 + $0x23a0] sm:$0xff]
        %v1528 = vld [vmem:[%s318 + $0x23a8] sm:$0xff]
        %v1529 = vld [vmem:[%s318 + $0x23b0] sm:$0xff]
        %v1530 = vld [vmem:[%s318 + $0x23b8] sm:$0xff]
        %v1531 = vld [vmem:[%s318 + $0x23c0] sm:$0xff]
        %v1532 = vld [vmem:[%s318 + $0x23c8] sm:$0xff]
        %v1533 = vld [vmem:[%s318 + $0x23d0] sm:$0xff]
        %v1534 = vld [vmem:[%s318 + $0x23d8] sm:$0xff]
        %v1535 = vld [vmem:[%s318 + $0x23e0] sm:$0xff]
        %v1536 = vld [vmem:[%s318 + $0x23e8] sm:$0xff]
        %v1537 = vld [vmem:[%s318 + $0x23f0] sm:$0xff]
        %v1538 = vld [vmem:[%s318 + $0x23f8] sm:$0xff]
        %v1539 = vld [vmem:[%s318 + $0x2400] sm:$0xff]
        %v1540 = vld [vmem:[%s318 + $0x2408] sm:$0xff]
        %v1541 = vld [vmem:[%s318 + $0x2410] sm:$0xff]
        %v1542 = vld [vmem:[%s318 + $0x2418] sm:$0xff]
        %v1543 = vld [vmem:[%s318 + $0x2420] sm:$0xff]
        %v1544 = vld [vmem:[%s318 + $0x2428] sm:$0xff]
        %v1545 = vld [vmem:[%s318 + $0x2430] sm:$0xff]
        %v1546 = vld [vmem:[%s318 + $0x2438] sm:$0xff]
        %v1547 = vld [vmem:[%s318 + $0x2440] sm:$0xff]
        %v1548 = vld [vmem:[%s318 + $0x2448] sm:$0xff]
        %v1549 = vld [vmem:[%s318 + $0x2450] sm:$0xff]
        %v1550 = vld [vmem:[%s318 + $0x2458] sm:$0xff]
        %v1551 = vld [vmem:[%s318 + $0x2460] sm:$0xff]
        %v1552 = vld [vmem:[%s318 + $0x2468] sm:$0xff]
        %v1553 = vld [vmem:[%s318 + $0x2470] sm:$0xff]
        %v1554 = vld [vmem:[%s318 + $0x2478] sm:$0xff]
        %v1555 = vld [vmem:[%s318 + $0x2480] sm:$0xff]
        %v1556 = vld [vmem:[%s318 + $0x2488] sm:$0xff]
        %v1557 = vld [vmem:[%s318 + $0x2490] sm:$0xff]
        %v1558 = vld [vmem:[%s318 + $0x2498] sm:$0xff]
        %v1559 = vld [vmem:[%s318 + $0x24a0] sm:$0xff]
        %v1560 = vld [vmem:[%s318 + $0x24a8] sm:$0xff]
        %v1561 = vld [vmem:[%s318 + $0x24b0] sm:$0xff]
        %v1562 = vld [vmem:[%s318 + $0x24b8] sm:$0xff]
        %v1563 = vld [vmem:[%s318 + $0x24c0] sm:$0xff]
        %v1564 = vld [vmem:[%s318 + $0x24c8] sm:$0xff]
        %v1565 = vld [vmem:[%s318 + $0x24d0] sm:$0xff]
        %v1566 = vld [vmem:[%s318 + $0x24d8] sm:$0xff]
        %v1567 = vld [vmem:[%s318 + $0x24e0] sm:$0xff]
        %v1568 = vld [vmem:[%s318 + $0x24e8] sm:$0xff]
        %v1569 = vld [vmem:[%s318 + $0x24f0] sm:$0xff]
        %v1570 = vld [vmem:[%s318 + $0x24f8] sm:$0xff]
        %v1571 = vld [vmem:[%s318 + $0x2500] sm:$0xff]
        %v1572 = vld [vmem:[%s318 + $0x2508] sm:$0xff]
        %v1573 = vld [vmem:[%s318 + $0x2510] sm:$0xff]
        %v1574 = vld [vmem:[%s318 + $0x2518] sm:$0xff]
        %v1575 = vld [vmem:[%s318 + $0x2520] sm:$0xff]
        %v1576 = vld [vmem:[%s318 + $0x2528] sm:$0xff]
        %v1577 = vld [vmem:[%s318 + $0x2530] sm:$0xff]
        %v1578 = vld [vmem:[%s318 + $0x2538] sm:$0xff]
        %v1579 = vld [vmem:[%s318 + $0x2540] sm:$0xff]
        %v1580 = vld [vmem:[%s318 + $0x2548] sm:$0xff]
        %v1581 = vld [vmem:[%s318 + $0x2550] sm:$0xff]
        %v1582 = vld [vmem:[%s318 + $0x2558] sm:$0xff]
        %v1583 = vld [vmem:[%s318 + $0x2560] sm:$0xff]
        %v1584 = vld [vmem:[%s318 + $0x2568] sm:$0xff]
        %v1585 = vld [vmem:[%s318 + $0x2570] sm:$0xff]
        %v1586 = vld [vmem:[%s318 + $0x2578] sm:$0xff]
        %v1587 = vld [vmem:[%s318 + $0x2580] sm:$0xff]
        %v1588 = vld [vmem:[%s318 + $0x2588] sm:$0xff]
        %v1589 = vld [vmem:[%s318 + $0x2590] sm:$0xff]
        %v1590 = vld [vmem:[%s318 + $0x2598] sm:$0xff]
        %v1591 = vld [vmem:[%s318 + $0x25a0] sm:$0xff]
        %v1592 = vld [vmem:[%s318 + $0x25a8] sm:$0xff]
        %v1593 = vld [vmem:[%s318 + $0x25b0] sm:$0xff]
        %v1594 = vld [vmem:[%s318 + $0x25b8] sm:$0xff]
        %v1595 = vld [vmem:[%s318 + $0x25c0] sm:$0xff]
        %v1596 = vld [vmem:[%s318 + $0x25c8] sm:$0xff]
        %v1597 = vld [vmem:[%s318 + $0x25d0] sm:$0xff]
        %v1598 = vld [vmem:[%s318 + $0x25d8] sm:$0xff]
        %v1599 = vld [vmem:[%s318 + $0x25e0] sm:$0xff]
        %v1600 = vld [vmem:[%s318 + $0x25e8] sm:$0xff]
        %v1601 = vld [vmem:[%s318 + $0x25f0] sm:$0xff]
        %v1602 = vld [vmem:[%s318 + $0x25f8] sm:$0xff]
        %v1603 = vld [vmem:[%s318 + $0x2600] sm:$0xff]
        %v1604 = vld [vmem:[%s318 + $0x2608] sm:$0xff]
        %v1605 = vld [vmem:[%s318 + $0x2610] sm:$0xff]
        %v1606 = vld [vmem:[%s318 + $0x2618] sm:$0xff]
        %v1607 = vld [vmem:[%s318 + $0x2620] sm:$0xff]
        %v1608 = vld [vmem:[%s318 + $0x2628] sm:$0xff]
        %v1609 = vld [vmem:[%s318 + $0x2630] sm:$0xff]
        %v1610 = vld [vmem:[%s318 + $0x2638] sm:$0xff]
        %v1611 = vld [vmem:[%s318 + $0x2640] sm:$0xff]
        %v1612 = vld [vmem:[%s318 + $0x2648] sm:$0xff]
        %v1613 = vld [vmem:[%s318 + $0x2650] sm:$0xff]
        %v1614 = vld [vmem:[%s318 + $0x2658] sm:$0xff]
        %v1615 = vld [vmem:[%s318 + $0x2660] sm:$0xff]
        %v1616 = vld [vmem:[%s318 + $0x2668] sm:$0xff]
        %v1617 = vld [vmem:[%s318 + $0x2670] sm:$0xff]
        %v1618 = vld [vmem:[%s318 + $0x2678] sm:$0xff]
        %v1619 = vld [vmem:[%s318 + $0x2680] sm:$0xff]
        %v1620 = vld [vmem:[%s318 + $0x2688] sm:$0xff]
        %v1621 = vld [vmem:[%s318 + $0x2690] sm:$0xff]
        %v1622 = vld [vmem:[%s318 + $0x2698] sm:$0xff]
        %v1623 = vld [vmem:[%s318 + $0x26a0] sm:$0xff]
        %v1624 = vld [vmem:[%s318 + $0x26a8] sm:$0xff]
        %v1625 = vld [vmem:[%s318 + $0x26b0] sm:$0xff]
        %v1626 = vld [vmem:[%s318 + $0x26b8] sm:$0xff]
        %v1627 = vld [vmem:[%s318 + $0x26c0] sm:$0xff]
        %v1628 = vld [vmem:[%s318 + $0x26c8] sm:$0xff]
        %v1629 = vld [vmem:[%s318 + $0x26d0] sm:$0xff]
        %v1630 = vld [vmem:[%s318 + $0x26d8] sm:$0xff]
        %v1631 = vld [vmem:[%s318 + $0x26e0] sm:$0xff]
        %v1632 = vld [vmem:[%s318 + $0x26e8] sm:$0xff]
        %v1633 = vld [vmem:[%s318 + $0x26f0] sm:$0xff]
        %v1634 = vld [vmem:[%s318 + $0x26f8] sm:$0xff]
        %v1635 = vld [vmem:[%s318 + $0x2700] sm:$0xff]
        %v1636 = vld [vmem:[%s318 + $0x2708] sm:$0xff]
        %v1637 = vld [vmem:[%s318 + $0x2710] sm:$0xff]
        %v1638 = vld [vmem:[%s318 + $0x2718] sm:$0xff]
        %v1639 = vld [vmem:[%s318 + $0x2720] sm:$0xff]
        %v1640 = vld [vmem:[%s318 + $0x2728] sm:$0xff]
        %v1641 = vld [vmem:[%s318 + $0x2730] sm:$0xff]
        %v1642 = vld [vmem:[%s318 + $0x2738] sm:$0xff]
        %v1643 = vld [vmem:[%s318 + $0x2740] sm:$0xff]
        %v1644 = vld [vmem:[%s318 + $0x2748] sm:$0xff]
        %v1645 = vld [vmem:[%s318 + $0x2750] sm:$0xff]
        %v1646 = vld [vmem:[%s318 + $0x2758] sm:$0xff]
        %v1647 = vld [vmem:[%s318 + $0x2760] sm:$0xff]
        %v1648 = vld [vmem:[%s318 + $0x2768] sm:$0xff]
        %v1649 = vld [vmem:[%s318 + $0x2770] sm:$0xff]
        %v1650 = vld [vmem:[%s318 + $0x2778] sm:$0xff]
        %v1651 = vld [vmem:[%s318 + $0x2780] sm:$0xff]
        %v1652 = vld [vmem:[%s318 + $0x2788] sm:$0xff]
        %v1653 = vld [vmem:[%s318 + $0x2790] sm:$0xff]
        %v1654 = vld [vmem:[%s318 + $0x2798] sm:$0xff]
        %v1655 = vld [vmem:[%s318 + $0x27a0] sm:$0xff]
        %v1656 = vld [vmem:[%s318 + $0x27a8] sm:$0xff]
        %v1657 = vld [vmem:[%s318 + $0x27b0] sm:$0xff]
        %v1658 = vld [vmem:[%s318 + $0x27b8] sm:$0xff]
        %v1659 = vld [vmem:[%s318 + $0x27c0] sm:$0xff]
        %v1660 = vld [vmem:[%s318 + $0x27c8] sm:$0xff]
        %v1661 = vld [vmem:[%s318 + $0x27d0] sm:$0xff]
        %v1662 = vld [vmem:[%s318 + $0x27d8] sm:$0xff]
        %v1663 = vld [vmem:[%s318 + $0x27e0] sm:$0xff]
        %v1664 = vld [vmem:[%s318 + $0x27e8] sm:$0xff]
        %v1665 = vld [vmem:[%s318 + $0x27f0] sm:$0xff]
        %v1666 = vld [vmem:[%s318 + $0x27f8] sm:$0xff]
        %v1672 = vcombine.high %v382, %v382
        %v1674 = vunpack.c.l.s4 1983009808
        %v1675 = vunpack.c.0.s8 %v1674
        %v1676 = vlaneseq
        %v1677 = vshrl.u32 %v1676, 7
        %v1678 = vsub.s32 %v1675, %v1677
        %v1679 = vrot.slane %v382, %v1678
        %v1681 = vunpack.c.l.s4 1983009808
        %v1682 = vunpack.c.0.s8 %v1681
        %v1683 = vlaneseq
        %v1684 = vshrl.u32 %v1683, 7
        %v1685 = vsub.s32 %v1682, %v1684
        %v1686 = vrot.slane %v1672, %v1685
        %v1687 = vcombine.high %v1679, %v1679
        %v1688 = vcombine.high %v1686, %v1686
        %v1689 = vcombine.high %v383, %v383
        %v1691 = vunpack.c.l.s4 1983009808
        %v1692 = vunpack.c.0.s8 %v1691
        %v1693 = vlaneseq
        %v1694 = vshrl.u32 %v1693, 7
        %v1695 = vsub.s32 %v1692, %v1694
        %v1696 = vrot.slane %v383, %v1695
        %v1698 = vunpack.c.l.s4 1983009808
        %v1699 = vunpack.c.0.s8 %v1698
        %v1700 = vlaneseq
        %v1701 = vshrl.u32 %v1700, 7
        %v1702 = vsub.s32 %v1699, %v1701
        %v1703 = vrot.slane %v1689, %v1702
        %v1704 = vcombine.high %v1696, %v1696
        %v1705 = vcombine.high %v1703, %v1703
        %v1706 = vcombine.high %v384, %v384
        %v1708 = vunpack.c.l.s4 1983009808
        %v1709 = vunpack.c.0.s8 %v1708
        %v1710 = vlaneseq
        %v1711 = vshrl.u32 %v1710, 7
        %v1712 = vsub.s32 %v1709, %v1711
        %v1713 = vrot.slane %v384, %v1712
        %v1715 = vunpack.c.l.s4 1983009808
        %v1716 = vunpack.c.0.s8 %v1715
        %v1717 = vlaneseq
        %v1718 = vshrl.u32 %v1717, 7
        %v1719 = vsub.s32 %v1716, %v1718
        %v1720 = vrot.slane %v1706, %v1719
        %v1721 = vcombine.high %v1713, %v1713
        %v1722 = vcombine.high %v1720, %v1720
        %v1723 = vcombine.high %v385, %v385
        %v1725 = vunpack.c.l.s4 1983009808
        %v1726 = vunpack.c.0.s8 %v1725
        %v1727 = vlaneseq
        %v1728 = vshrl.u32 %v1727, 7
        %v1729 = vsub.s32 %v1726, %v1728
        %v1730 = vrot.slane %v385, %v1729
        %v1732 = vunpack.c.l.s4 1983009808
        %v1733 = vunpack.c.0.s8 %v1732
        %v1734 = vlaneseq
        %v1735 = vshrl.u32 %v1734, 7
        %v1736 = vsub.s32 %v1733, %v1735
        %v1737 = vrot.slane %v1723, %v1736
        %v1738 = vcombine.high %v1730, %v1730
        %v1739 = vcombine.high %v1737, %v1737
        %v1740 = vcombine.high %v386, %v386
        %v1742 = vunpack.c.l.s4 1983009808
        %v1743 = vunpack.c.0.s8 %v1742
        %v1744 = vlaneseq
        %v1745 = vshrl.u32 %v1744, 7
        %v1746 = vsub.s32 %v1743, %v1745
        %v1747 = vrot.slane %v386, %v1746
        %v1749 = vunpack.c.l.s4 1983009808
        %v1750 = vunpack.c.0.s8 %v1749
        %v1751 = vlaneseq
        %v1752 = vshrl.u32 %v1751, 7
        %v1753 = vsub.s32 %v1750, %v1752
        %v1754 = vrot.slane %v1740, %v1753
        %v1755 = vcombine.high %v1747, %v1747
        %v1756 = vcombine.high %v1754, %v1754
        %1777 = vmatprep.subr.mxu0 %v388
        %1778 = vmatpush1.msra.mxu0 %v387
        %1779 = vmatprep.subr.mxu0 %v392
        %1780 = vmatpush1.msra.mxu0 %v391
        %1781 = vmatprep.subr.mxu0 %v396
        %1782 = vmatpush1.msra.mxu0 %v395
        %1783 = vmatprep.subr.mxu0 %v400
        %1784 = vmatpush1.msra.mxu0 %v399
        %1785 = vmatprep.subr.mxu0 %v404
        %1786 = vmatpush1.msra.mxu0 %v403
        %1787 = vmatprep.subr.mxu0 %v408
        %1788 = vmatpush1.msra.mxu0 %v407
        %1789 = vmatprep.subr.mxu0 %v412
        %1790 = vmatpush1.msra.mxu0 %v411
        %1791 = vmatprep.subr.mxu0 %v416
        %1792 = vmatpush1.msra.mxu0 %v415
        %1793 = vmatprep.subr.mxu0 %v420
        %1794 = vmatpush1.msra.mxu0 %v419
        %1795 = vmatprep.subr.mxu0 %v424
        %1796 = vmatpush1.msra.mxu0 %v423
        %1797 = vmatprep.subr.mxu0 %v428
        %1798 = vmatpush1.msra.mxu0 %v427
        %1799 = vmatprep.subr.mxu0 %v432
        %1800 = vmatpush1.msra.mxu0 %v431
        %1801 = vmatprep.subr.mxu0 %v436
        %1802 = vmatpush1.msra.mxu0 %v435
        %1803 = vmatprep.subr.mxu0 %v440
        %1804 = vmatpush1.msra.mxu0 %v439
        %1805 = vmatprep.subr.mxu0 %v444
        %1806 = vmatpush1.msra.mxu0 %v443
        %1807 = vmatprep.subr.mxu0 %v448
        %1808 = vmatpush1.msra.mxu0 %v447
        %1809 = vmatprep.subr.mxu0 %v452
        %1810 = vmatpush1.msra.mxu0 %v451
        %1811 = vmatprep.subr.mxu0 %v456
        %1812 = vmatpush1.msra.mxu0 %v455
        %1813 = vmatprep.subr.mxu0 %v460
        %1814 = vmatpush1.msra.mxu0 %v459
        %1815 = vmatprep.subr.mxu0 %v464
        %1816 = vmatpush1.msra.mxu0 %v463
        %1817 = vmatprep.subr.mxu0 %v468
        %1818 = vmatpush1.msra.mxu0 %v467
        %1819 = vmatprep.subr.mxu0 %v472
        %1820 = vmatpush1.msra.mxu0 %v471
        %1821 = vmatprep.subr.mxu0 %v476
        %1822 = vmatpush1.msra.mxu0 %v475
        %1823 = vmatprep.subr.mxu0 %v480
        %1824 = vmatpush1.msra.mxu0 %v479
        %1825 = vmatprep.subr.mxu0 %v484
        %1826 = vmatpush1.msra.mxu0 %v483
        %1827 = vmatprep.subr.mxu0 %v488
        %1828 = vmatpush1.msra.mxu0 %v487
        %1829 = vmatprep.subr.mxu0 %v492
        %1830 = vmatpush1.msra.mxu0 %v491
        %1831 = vmatprep.subr.mxu0 %v496
        %1832 = vmatpush1.msra.mxu0 %v495
        %1833 = vmatprep.subr.mxu0 %v500
        %1834 = vmatpush1.msra.mxu0 %v499
        %1835 = vmatprep.subr.mxu0 %v504
        %1836 = vmatpush1.msra.mxu0 %v503
        %1837 = vmatprep.subr.mxu0 %v508
        %1838 = vmatpush1.msra.mxu0 %v507
        %1839 = vmatprep.subr.mxu0 %v512
        %1840 = vmatpush1.msra.mxu0 %v511
        %1841 = vmatprep.mubr.f32.mxu0 %v1687
        %1842 = vmatmul.mubr.f32.gmra.mrb[0].mxu0 %v1679
        %v1843 = vpop.f32.mrb[0].mxu0
        %v1844 = vadd.f32 0.0, %v1843
        %v1845 = vpop.f32.mrb[0].mxu0
        %v1846 = vadd.f32 0.0, %v1845
        %1847 = vdwg.mxu0
        %1848 = vmatprep.subr.mxu0 %v516
        %1849 = vmatpush1.msra.mxu0 %v515
        %1850 = vmatprep.subr.mxu0 %v520
        %1851 = vmatpush1.msra.mxu0 %v519
        %1852 = vmatprep.subr.mxu0 %v524
        %1853 = vmatpush1.msra.mxu0 %v523
        %1854 = vmatprep.subr.mxu0 %v528
        %1855 = vmatpush1.msra.mxu0 %v527
        %1856 = vmatprep.subr.mxu0 %v532
        %1857 = vmatpush1.msra.mxu0 %v531
        %1858 = vmatprep.subr.mxu0 %v536
        %1859 = vmatpush1.msra.mxu0 %v535
        %1860 = vmatprep.subr.mxu0 %v540
        %1861 = vmatpush1.msra.mxu0 %v539
        %1862 = vmatprep.subr.mxu0 %v544
        %1863 = vmatpush1.msra.mxu0 %v543
        %1864 = vmatprep.subr.mxu0 %v548
        %1865 = vmatpush1.msra.mxu0 %v547
        %1866 = vmatprep.subr.mxu0 %v552
        %1867 = vmatpush1.msra.mxu0 %v551
        %1868 = vmatprep.subr.mxu0 %v556
        %1869 = vmatpush1.msra.mxu0 %v555
        %1870 = vmatprep.subr.mxu0 %v560
        %1871 = vmatpush1.msra.mxu0 %v559
        %1872 = vmatprep.subr.mxu0 %v564
        %1873 = vmatpush1.msra.mxu0 %v563
        %1874 = vmatprep.subr.mxu0 %v568
        %1875 = vmatpush1.msra.mxu0 %v567
        %1876 = vmatprep.subr.mxu0 %v572
        %1877 = vmatpush1.msra.mxu0 %v571
        %1878 = vmatprep.subr.mxu0 %v576
        %1879 = vmatpush1.msra.mxu0 %v575
        %1880 = vmatprep.subr.mxu0 %v580
        %1881 = vmatpush1.msra.mxu0 %v579
        %1882 = vmatprep.subr.mxu0 %v584
        %1883 = vmatpush1.msra.mxu0 %v583
        %1884 = vmatprep.subr.mxu0 %v588
        %1885 = vmatpush1.msra.mxu0 %v587
        %1886 = vmatprep.subr.mxu0 %v592
        %1887 = vmatpush1.msra.mxu0 %v591
        %1888 = vmatprep.subr.mxu0 %v596
        %1889 = vmatpush1.msra.mxu0 %v595
        %1890 = vmatprep.subr.mxu0 %v600
        %1891 = vmatpush1.msra.mxu0 %v599
        %1892 = vmatprep.subr.mxu0 %v604
        %1893 = vmatpush1.msra.mxu0 %v603
        %1894 = vmatprep.subr.mxu0 %v608
        %1895 = vmatpush1.msra.mxu0 %v607
        %1896 = vmatprep.subr.mxu0 %v612
        %1897 = vmatpush1.msra.mxu0 %v611
        %1898 = vmatprep.subr.mxu0 %v616
        %1899 = vmatpush1.msra.mxu0 %v615
        %1900 = vmatprep.subr.mxu0 %v620
        %1901 = vmatpush1.msra.mxu0 %v619
        %1902 = vmatprep.subr.mxu0 %v624
        %1903 = vmatpush1.msra.mxu0 %v623
        %1904 = vmatprep.subr.mxu0 %v628
        %1905 = vmatpush1.msra.mxu0 %v627
        %1906 = vmatprep.subr.mxu0 %v632
        %1907 = vmatpush1.msra.mxu0 %v631
        %1908 = vmatprep.subr.mxu0 %v636
        %1909 = vmatpush1.msra.mxu0 %v635
        %1910 = vmatprep.subr.mxu0 %v640
        %1911 = vmatpush1.msra.mxu0 %v639
        %1912 = vmatprep.mubr.f32.mxu0 %v1688
        %1913 = vmatmul.mubr.f32.gmra.mrb[0].mxu0 %v1686
        %v1914 = vpop.f32.mrb[0].mxu0
        %v1915 = vadd.f32 %v1844, %v1914
        %v1916 = vpop.f32.mrb[0].mxu0
        %v1917 = vadd.f32 %v1846, %v1916
        %1918 = vdwg.mxu0
        %1919 = vmatprep.subr.mxu0 %v644
        %1920 = vmatpush1.msra.mxu0 %v643
        %1921 = vmatprep.subr.mxu0 %v648
        %1922 = vmatpush1.msra.mxu0 %v647
        %1923 = vmatprep.subr.mxu0 %v652
        %1924 = vmatpush1.msra.mxu0 %v651
        %1925 = vmatprep.subr.mxu0 %v656
        %1926 = vmatpush1.msra.mxu0 %v655
        %1927 = vmatprep.subr.mxu0 %v660
        %1928 = vmatpush1.msra.mxu0 %v659
        %1929 = vmatprep.subr.mxu0 %v664
        %1930 = vmatpush1.msra.mxu0 %v663
        %1931 = vmatprep.subr.mxu0 %v668
        %1932 = vmatpush1.msra.mxu0 %v667
        %1933 = vmatprep.subr.mxu0 %v672
        %1934 = vmatpush1.msra.mxu0 %v671
        %1935 = vmatprep.subr.mxu0 %v676
        %1936 = vmatpush1.msra.mxu0 %v675
        %1937 = vmatprep.subr.mxu0 %v680
        %1938 = vmatpush1.msra.mxu0 %v679
        %1939 = vmatprep.subr.mxu0 %v684
        %1940 = vmatpush1.msra.mxu0 %v683
        %1941 = vmatprep.subr.mxu0 %v688
        %1942 = vmatpush1.msra.mxu0 %v687
        %1943 = vmatprep.subr.mxu0 %v692
        %1944 = vmatpush1.msra.mxu0 %v691
        %1945 = vmatprep.subr.mxu0 %v696
        %1946 = vmatpush1.msra.mxu0 %v695
        %1947 = vmatprep.subr.mxu0 %v700
        %1948 = vmatpush1.msra.mxu0 %v699
        %1949 = vmatprep.subr.mxu0 %v704
        %1950 = vmatpush1.msra.mxu0 %v703
        %1951 = vmatprep.subr.mxu0 %v708
        %1952 = vmatpush1.msra.mxu0 %v707
        %1953 = vmatprep.subr.mxu0 %v712
        %1954 = vmatpush1.msra.mxu0 %v711
        %1955 = vmatprep.subr.mxu0 %v716
        %1956 = vmatpush1.msra.mxu0 %v715
        %1957 = vmatprep.subr.mxu0 %v720
        %1958 = vmatpush1.msra.mxu0 %v719
        %1959 = vmatprep.subr.mxu0 %v724
        %1960 = vmatpush1.msra.mxu0 %v723
        %1961 = vmatprep.subr.mxu0 %v728
        %1962 = vmatpush1.msra.mxu0 %v727
        %1963 = vmatprep.subr.mxu0 %v732
        %1964 = vmatpush1.msra.mxu0 %v731
        %1965 = vmatprep.subr.mxu0 %v736
        %1966 = vmatpush1.msra.mxu0 %v735
        %1967 = vmatprep.subr.mxu0 %v740
        %1968 = vmatpush1.msra.mxu0 %v739
        %1969 = vmatprep.subr.mxu0 %v744
        %1970 = vmatpush1.msra.mxu0 %v743
        %1971 = vmatprep.subr.mxu0 %v748
        %1972 = vmatpush1.msra.mxu0 %v747
        %1973 = vmatprep.subr.mxu0 %v752
        %1974 = vmatpush1.msra.mxu0 %v751
        %1975 = vmatprep.subr.mxu0 %v756
        %1976 = vmatpush1.msra.mxu0 %v755
        %1977 = vmatprep.subr.mxu0 %v760
        %1978 = vmatpush1.msra.mxu0 %v759
        %1979 = vmatprep.subr.mxu0 %v764
        %1980 = vmatpush1.msra.mxu0 %v763
        %1981 = vmatprep.subr.mxu0 %v768
        %1982 = vmatpush1.msra.mxu0 %v767
        %1983 = vmatprep.mubr.f32.mxu0 %v1704
        %1984 = vmatmul.mubr.f32.gmra.mrb[0].mxu0 %v1696
        %v1985 = vpop.f32.mrb[0].mxu0
        %v1986 = vadd.f32 %v1915, %v1985
        %v1987 = vpop.f32.mrb[0].mxu0
        %v1988 = vadd.f32 %v1917, %v1987
        %1989 = vdwg.mxu0
        %1990 = vmatprep.subr.mxu0 %v772
        %1991 = vmatpush1.msra.mxu0 %v771
        %1992 = vmatprep.subr.mxu0 %v776
        %1993 = vmatpush1.msra.mxu0 %v775
        %1994 = vmatprep.subr.mxu0 %v780
        %1995 = vmatpush1.msra.mxu0 %v779
        %1996 = vmatprep.subr.mxu0 %v784
        %1997 = vmatpush1.msra.mxu0 %v783
        %1998 = vmatprep.subr.mxu0 %v788
        %1999 = vmatpush1.msra.mxu0 %v787
        %2000 = vmatprep.subr.mxu0 %v792
        %2001 = vmatpush1.msra.mxu0 %v791
        %2002 = vmatprep.subr.mxu0 %v796
        %2003 = vmatpush1.msra.mxu0 %v795
        %2004 = vmatprep.subr.mxu0 %v800
        %2005 = vmatpush1.msra.mxu0 %v799
        %2006 = vmatprep.subr.mxu0 %v804
        %2007 = vmatpush1.msra.mxu0 %v803
        %2008 = vmatprep.subr.mxu0 %v808
        %2009 = vmatpush1.msra.mxu0 %v807
        %2010 = vmatprep.subr.mxu0 %v812
        %2011 = vmatpush1.msra.mxu0 %v811
        %2012 = vmatprep.subr.mxu0 %v816
        %2013 = vmatpush1.msra.mxu0 %v815
        %2014 = vmatprep.subr.mxu0 %v820
        %2015 = vmatpush1.msra.mxu0 %v819
        %2016 = vmatprep.subr.mxu0 %v824
        %2017 = vmatpush1.msra.mxu0 %v823
        %2018 = vmatprep.subr.mxu0 %v828
        %2019 = vmatpush1.msra.mxu0 %v827
        %2020 = vmatprep.subr.mxu0 %v832
        %2021 = vmatpush1.msra.mxu0 %v831
        %2022 = vmatprep.subr.mxu0 %v836
        %2023 = vmatpush1.msra.mxu0 %v835
        %2024 = vmatprep.subr.mxu0 %v840
        %2025 = vmatpush1.msra.mxu0 %v839
        %2026 = vmatprep.subr.mxu0 %v844
        %2027 = vmatpush1.msra.mxu0 %v843
        %2028 = vmatprep.subr.mxu0 %v848
        %2029 = vmatpush1.msra.mxu0 %v847
        %2030 = vmatprep.subr.mxu0 %v852
        %2031 = vmatpush1.msra.mxu0 %v851
        %2032 = vmatprep.subr.mxu0 %v856
        %2033 = vmatpush1.msra.mxu0 %v855
        %2034 = vmatprep.subr.mxu0 %v860
        %2035 = vmatpush1.msra.mxu0 %v859
        %2036 = vmatprep.subr.mxu0 %v864
        %2037 = vmatpush1.msra.mxu0 %v863
        %2038 = vmatprep.subr.mxu0 %v868
        %2039 = vmatpush1.msra.mxu0 %v867
        %2040 = vmatprep.subr.mxu0 %v872
        %2041 = vmatpush1.msra.mxu0 %v871
        %2042 = vmatprep.subr.mxu0 %v876
        %2043 = vmatpush1.msra.mxu0 %v875
        %2044 = vmatprep.subr.mxu0 %v880
        %2045 = vmatpush1.msra.mxu0 %v879
        %2046 = vmatprep.subr.mxu0 %v884
        %2047 = vmatpush1.msra.mxu0 %v883
        %2048 = vmatprep.subr.mxu0 %v888
        %2049 = vmatpush1.msra.mxu0 %v887
        %2050 = vmatprep.subr.mxu0 %v892
        %2051 = vmatpush1.msra.mxu0 %v891
        %2052 = vmatprep.subr.mxu0 %v896
        %2053 = vmatpush1.msra.mxu0 %v895
        %2054 = vmatprep.mubr.f32.mxu0 %v1705
        %2055 = vmatmul.mubr.f32.gmra.mrb[0].mxu0 %v1703
        %v2056 = vpop.f32.mrb[0].mxu0
        %v2057 = vadd.f32 %v1986, %v2056
        %v2058 = vpop.f32.mrb[0].mxu0
        %v2059 = vadd.f32 %v1988, %v2058
        %2060 = vdwg.mxu0
        %2061 = vmatprep.subr.mxu0 %v900
        %2062 = vmatpush1.msra.mxu0 %v899
        %2063 = vmatprep.subr.mxu0 %v904
        %2064 = vmatpush1.msra.mxu0 %v903
        %2065 = vmatprep.subr.mxu0 %v908
        %2066 = vmatpush1.msra.mxu0 %v907
        %2067 = vmatprep.subr.mxu0 %v912
        %2068 = vmatpush1.msra.mxu0 %v911
        %2069 = vmatprep.subr.mxu0 %v916
        %2070 = vmatpush1.msra.mxu0 %v915
        %2071 = vmatprep.subr.mxu0 %v920
        %2072 = vmatpush1.msra.mxu0 %v919
        %2073 = vmatprep.subr.mxu0 %v924
        %2074 = vmatpush1.msra.mxu0 %v923
        %2075 = vmatprep.subr.mxu0 %v928
        %2076 = vmatpush1.msra.mxu0 %v927
        %2077 = vmatprep.subr.mxu0 %v932
        %2078 = vmatpush1.msra.mxu0 %v931
        %2079 = vmatprep.subr.mxu0 %v936
        %2080 = vmatpush1.msra.mxu0 %v935
        %2081 = vmatprep.subr.mxu0 %v940
        %2082 = vmatpush1.msra.mxu0 %v939
        %2083 = vmatprep.subr.mxu0 %v944
        %2084 = vmatpush1.msra.mxu0 %v943
        %2085 = vmatprep.subr.mxu0 %v948
        %2086 = vmatpush1.msra.mxu0 %v947
        %2087 = vmatprep.subr.mxu0 %v952
        %2088 = vmatpush1.msra.mxu0 %v951
        %2089 = vmatprep.subr.mxu0 %v956
        %2090 = vmatpush1.msra.mxu0 %v955
        %2091 = vmatprep.subr.mxu0 %v960
        %2092 = vmatpush1.msra.mxu0 %v959
        %2093 = vmatprep.subr.mxu0 %v964
        %2094 = vmatpush1.msra.mxu0 %v963
        %2095 = vmatprep.subr.mxu0 %v968
        %2096 = vmatpush1.msra.mxu0 %v967
        %2097 = vmatprep.subr.mxu0 %v972
        %2098 = vmatpush1.msra.mxu0 %v971
        %2099 = vmatprep.subr.mxu0 %v976
        %2100 = vmatpush1.msra.mxu0 %v975
        %2101 = vmatprep.subr.mxu0 %v980
        %2102 = vmatpush1.msra.mxu0 %v979
        %2103 = vmatprep.subr.mxu0 %v984
        %2104 = vmatpush1.msra.mxu0 %v983
        %2105 = vmatprep.subr.mxu0 %v988
        %2106 = vmatpush1.msra.mxu0 %v987
        %2107 = vmatprep.subr.mxu0 %v992
        %2108 = vmatpush1.msra.mxu0 %v991
        %2109 = vmatprep.subr.mxu0 %v996
        %2110 = vmatpush1.msra.mxu0 %v995
        %2111 = vmatprep.subr.mxu0 %v1000
        %2112 = vmatpush1.msra.mxu0 %v999
        %2113 = vmatprep.subr.mxu0 %v1004
        %2114 = vmatpush1.msra.mxu0 %v1003
        %2115 = vmatprep.subr.mxu0 %v1008
        %2116 = vmatpush1.msra.mxu0 %v1007
        %2117 = vmatprep.subr.mxu0 %v1012
        %2118 = vmatpush1.msra.mxu0 %v1011
        %2119 = vmatprep.subr.mxu0 %v1016
        %2120 = vmatpush1.msra.mxu0 %v1015
        %2121 = vmatprep.subr.mxu0 %v1020
        %2122 = vmatpush1.msra.mxu0 %v1019
        %2123 = vmatprep.subr.mxu0 %v1024
        %2124 = vmatpush1.msra.mxu0 %v1023
        %2125 = vmatprep.mubr.f32.mxu0 %v1721
        %2126 = vmatmul.mubr.f32.gmra.mrb[0].mxu0 %v1713
        %v2127 = vpop.f32.mrb[0].mxu0
        %v2128 = vadd.f32 %v2057, %v2127
        %v2129 = vpop.f32.mrb[0].mxu0
        %v2130 = vadd.f32 %v2059, %v2129
        %2131 = vdwg.mxu0
        %2132 = vmatprep.subr.mxu0 %v1028
        %2133 = vmatpush1.msra.mxu0 %v1027
        %2134 = vmatprep.subr.mxu0 %v1032
        %2135 = vmatpush1.msra.mxu0 %v1031
        %2136 = vmatprep.subr.mxu0 %v1036
        %2137 = vmatpush1.msra.mxu0 %v1035
        %2138 = vmatprep.subr.mxu0 %v1040
        %2139 = vmatpush1.msra.mxu0 %v1039
        %2140 = vmatprep.subr.mxu0 %v1044
        %2141 = vmatpush1.msra.mxu0 %v1043
        %2142 = vmatprep.subr.mxu0 %v1048
        %2143 = vmatpush1.msra.mxu0 %v1047
        %2144 = vmatprep.subr.mxu0 %v1052
        %2145 = vmatpush1.msra.mxu0 %v1051
        %2146 = vmatprep.subr.mxu0 %v1056
        %2147 = vmatpush1.msra.mxu0 %v1055
        %2148 = vmatprep.subr.mxu0 %v1060
        %2149 = vmatpush1.msra.mxu0 %v1059
        %2150 = vmatprep.subr.mxu0 %v1064
        %2151 = vmatpush1.msra.mxu0 %v1063
        %2152 = vmatprep.subr.mxu0 %v1068
        %2153 = vmatpush1.msra.mxu0 %v1067
        %2154 = vmatprep.subr.mxu0 %v1072
        %2155 = vmatpush1.msra.mxu0 %v1071
        %2156 = vmatprep.subr.mxu0 %v1076
        %2157 = vmatpush1.msra.mxu0 %v1075
        %2158 = vmatprep.subr.mxu0 %v1080
        %2159 = vmatpush1.msra.mxu0 %v1079
        %2160 = vmatprep.subr.mxu0 %v1084
        %2161 = vmatpush1.msra.mxu0 %v1083
        %2162 = vmatprep.subr.mxu0 %v1088
        %2163 = vmatpush1.msra.mxu0 %v1087
        %2164 = vmatprep.subr.mxu0 %v1092
        %2165 = vmatpush1.msra.mxu0 %v1091
        %2166 = vmatprep.subr.mxu0 %v1096
        %2167 = vmatpush1.msra.mxu0 %v1095
        %2168 = vmatprep.subr.mxu0 %v1100
        %2169 = vmatpush1.msra.mxu0 %v1099
        %2170 = vmatprep.subr.mxu0 %v1104
        %2171 = vmatpush1.msra.mxu0 %v1103
        %2172 = vmatprep.subr.mxu0 %v1108
        %2173 = vmatpush1.msra.mxu0 %v1107
        %2174 = vmatprep.subr.mxu0 %v1112
        %2175 = vmatpush1.msra.mxu0 %v1111
        %2176 = vmatprep.subr.mxu0 %v1116
        %2177 = vmatpush1.msra.mxu0 %v1115
        %2178 = vmatprep.subr.mxu0 %v1120
        %2179 = vmatpush1.msra.mxu0 %v1119
        %2180 = vmatprep.subr.mxu0 %v1124
        %2181 = vmatpush1.msra.mxu0 %v1123
        %2182 = vmatprep.subr.mxu0 %v1128
        %2183 = vmatpush1.msra.mxu0 %v1127
        %2184 = vmatprep.subr.mxu0 %v1132
        %2185 = vmatpush1.msra.mxu0 %v1131
        %2186 = vmatprep.subr.mxu0 %v1136
        %2187 = vmatpush1.msra.mxu0 %v1135
        %2188 = vmatprep.subr.mxu0 %v1140
        %2189 = vmatpush1.msra.mxu0 %v1139
        %2190 = vmatprep.subr.mxu0 %v1144
        %2191 = vmatpush1.msra.mxu0 %v1143
        %2192 = vmatprep.subr.mxu0 %v1148
        %2193 = vmatpush1.msra.mxu0 %v1147
        %2194 = vmatprep.subr.mxu0 %v1152
        %2195 = vmatpush1.msra.mxu0 %v1151
        %2196 = vmatprep.mubr.f32.mxu0 %v1722
        %2197 = vmatmul.mubr.f32.gmra.mrb[0].mxu0 %v1720
        %v2198 = vpop.f32.mrb[0].mxu0
        %v2199 = vadd.f32 %v2128, %v2198
        %v2200 = vpop.f32.mrb[0].mxu0
        %v2201 = vadd.f32 %v2130, %v2200
        %2202 = vdwg.mxu0
        %2203 = vmatprep.subr.mxu0 %v1156
        %2204 = vmatpush1.msra.mxu0 %v1155
        %2205 = vmatprep.subr.mxu0 %v1160
        %2206 = vmatpush1.msra.mxu0 %v1159
        %2207 = vmatprep.subr.mxu0 %v1164
        %2208 = vmatpush1.msra.mxu0 %v1163
        %2209 = vmatprep.subr.mxu0 %v1168
        %2210 = vmatpush1.msra.mxu0 %v1167
        %2211 = vmatprep.subr.mxu0 %v1172
        %2212 = vmatpush1.msra.mxu0 %v1171
        %2213 = vmatprep.subr.mxu0 %v1176
        %2214 = vmatpush1.msra.mxu0 %v1175
        %2215 = vmatprep.subr.mxu0 %v1180
        %2216 = vmatpush1.msra.mxu0 %v1179
        %2217 = vmatprep.subr.mxu0 %v1184
        %2218 = vmatpush1.msra.mxu0 %v1183
        %2219 = vmatprep.subr.mxu0 %v1188
        %2220 = vmatpush1.msra.mxu0 %v1187
        %2221 = vmatprep.subr.mxu0 %v1192
        %2222 = vmatpush1.msra.mxu0 %v1191
        %2223 = vmatprep.subr.mxu0 %v1196
        %2224 = vmatpush1.msra.mxu0 %v1195
        %2225 = vmatprep.subr.mxu0 %v1200
        %2226 = vmatpush1.msra.mxu0 %v1199
        %2227 = vmatprep.subr.mxu0 %v1204
        %2228 = vmatpush1.msra.mxu0 %v1203
        %2229 = vmatprep.subr.mxu0 %v1208
        %2230 = vmatpush1.msra.mxu0 %v1207
        %2231 = vmatprep.subr.mxu0 %v1212
        %2232 = vmatpush1.msra.mxu0 %v1211
        %2233 = vmatprep.subr.mxu0 %v1216
        %2234 = vmatpush1.msra.mxu0 %v1215
        %2235 = vmatprep.subr.mxu0 %v1220
        %2236 = vmatpush1.msra.mxu0 %v1219
        %2237 = vmatprep.subr.mxu0 %v1224
        %2238 = vmatpush1.msra.mxu0 %v1223
        %2239 = vmatprep.subr.mxu0 %v1228
        %2240 = vmatpush1.msra.mxu0 %v1227
        %2241 = vmatprep.subr.mxu0 %v1232
        %2242 = vmatpush1.msra.mxu0 %v1231
        %2243 = vmatprep.subr.mxu0 %v1236
        %2244 = vmatpush1.msra.mxu0 %v1235
        %2245 = vmatprep.subr.mxu0 %v1240
        %2246 = vmatpush1.msra.mxu0 %v1239
        %2247 = vmatprep.subr.mxu0 %v1244
        %2248 = vmatpush1.msra.mxu0 %v1243
        %2249 = vmatprep.subr.mxu0 %v1248
        %2250 = vmatpush1.msra.mxu0 %v1247
        %2251 = vmatprep.subr.mxu0 %v1252
        %2252 = vmatpush1.msra.mxu0 %v1251
        %2253 = vmatprep.subr.mxu0 %v1256
        %2254 = vmatpush1.msra.mxu0 %v1255
        %2255 = vmatprep.subr.mxu0 %v1260
        %2256 = vmatpush1.msra.mxu0 %v1259
        %2257 = vmatprep.subr.mxu0 %v1264
        %2258 = vmatpush1.msra.mxu0 %v1263
        %2259 = vmatprep.subr.mxu0 %v1268
        %2260 = vmatpush1.msra.mxu0 %v1267
        %2261 = vmatprep.subr.mxu0 %v1272
        %2262 = vmatpush1.msra.mxu0 %v1271
        %2263 = vmatprep.subr.mxu0 %v1276
        %2264 = vmatpush1.msra.mxu0 %v1275
        %2265 = vmatprep.subr.mxu0 %v1280
        %2266 = vmatpush1.msra.mxu0 %v1279
        %2267 = vmatprep.mubr.f32.mxu0 %v1738
        %2268 = vmatmul.mubr.f32.gmra.mrb[0].mxu0 %v1730
        %v2269 = vpop.f32.mrb[0].mxu0
        %v2270 = vadd.f32 %v2199, %v2269
        %v2271 = vpop.f32.mrb[0].mxu0
        %v2272 = vadd.f32 %v2201, %v2271
        %2273 = vdwg.mxu0
        %2274 = vmatprep.subr.mxu0 %v1284
        %2275 = vmatpush1.msra.mxu0 %v1283
        %2276 = vmatprep.subr.mxu0 %v1288
        %2277 = vmatpush1.msra.mxu0 %v1287
        %2278 = vmatprep.subr.mxu0 %v1292
        %2279 = vmatpush1.msra.mxu0 %v1291
        %2280 = vmatprep.subr.mxu0 %v1296
        %2281 = vmatpush1.msra.mxu0 %v1295
        %2282 = vmatprep.subr.mxu0 %v1300
        %2283 = vmatpush1.msra.mxu0 %v1299
        %2284 = vmatprep.subr.mxu0 %v1304
        %2285 = vmatpush1.msra.mxu0 %v1303
        %2286 = vmatprep.subr.mxu0 %v1308
        %2287 = vmatpush1.msra.mxu0 %v1307
        %2288 = vmatprep.subr.mxu0 %v1312
        %2289 = vmatpush1.msra.mxu0 %v1311
        %2290 = vmatprep.subr.mxu0 %v1316
        %2291 = vmatpush1.msra.mxu0 %v1315
        %2292 = vmatprep.subr.mxu0 %v1320
        %2293 = vmatpush1.msra.mxu0 %v1319
        %2294 = vmatprep.subr.mxu0 %v1324
        %2295 = vmatpush1.msra.mxu0 %v1323
        %2296 = vmatprep.subr.mxu0 %v1328
        %2297 = vmatpush1.msra.mxu0 %v1327
        %2298 = vmatprep.subr.mxu0 %v1332
        %2299 = vmatpush1.msra.mxu0 %v1331
        %2300 = vmatprep.subr.mxu0 %v1336
        %2301 = vmatpush1.msra.mxu0 %v1335
        %2302 = vmatprep.subr.mxu0 %v1340
        %2303 = vmatpush1.msra.mxu0 %v1339
        %2304 = vmatprep.subr.mxu0 %v1344
        %2305 = vmatpush1.msra.mxu0 %v1343
        %2306 = vmatprep.subr.mxu0 %v1348
        %2307 = vmatpush1.msra.mxu0 %v1347
        %2308 = vmatprep.subr.mxu0 %v1352
        %2309 = vmatpush1.msra.mxu0 %v1351
        %2310 = vmatprep.subr.mxu0 %v1356
        %2311 = vmatpush1.msra.mxu0 %v1355
        %2312 = vmatprep.subr.mxu0 %v1360
        %2313 = vmatpush1.msra.mxu0 %v1359
        %2314 = vmatprep.subr.mxu0 %v1364
        %2315 = vmatpush1.msra.mxu0 %v1363
        %2316 = vmatprep.subr.mxu0 %v1368
        %2317 = vmatpush1.msra.mxu0 %v1367
        %2318 = vmatprep.subr.mxu0 %v1372
        %2319 = vmatpush1.msra.mxu0 %v1371
        %2320 = vmatprep.subr.mxu0 %v1376
        %2321 = vmatpush1.msra.mxu0 %v1375
        %2322 = vmatprep.subr.mxu0 %v1380
        %2323 = vmatpush1.msra.mxu0 %v1379
        %2324 = vmatprep.subr.mxu0 %v1384
        %2325 = vmatpush1.msra.mxu0 %v1383
        %2326 = vmatprep.subr.mxu0 %v1388
        %2327 = vmatpush1.msra.mxu0 %v1387
        %2328 = vmatprep.subr.mxu0 %v1392
        %2329 = vmatpush1.msra.mxu0 %v1391
        %2330 = vmatprep.subr.mxu0 %v1396
        %2331 = vmatpush1.msra.mxu0 %v1395
        %2332 = vmatprep.subr.mxu0 %v1400
        %2333 = vmatpush1.msra.mxu0 %v1399
        %2334 = vmatprep.subr.mxu0 %v1404
        %2335 = vmatpush1.msra.mxu0 %v1403
        %2336 = vmatprep.subr.mxu0 %v1408
        %2337 = vmatpush1.msra.mxu0 %v1407
        %2338 = vmatprep.mubr.f32.mxu0 %v1739
        %2339 = vmatmul.mubr.f32.gmra.mrb[0].mxu0 %v1737
        %v2340 = vpop.f32.mrb[0].mxu0
        %v2341 = vadd.f32 %v2270, %v2340
        %v2342 = vpop.f32.mrb[0].mxu0
        %v2343 = vadd.f32 %v2272, %v2342
        %2344 = vdwg.mxu0
        %2345 = vmatprep.subr.mxu0 %v1412
        %2346 = vmatpush1.msra.mxu0 %v1411
        %2347 = vmatprep.subr.mxu0 %v1416
        %2348 = vmatpush1.msra.mxu0 %v1415
        %2349 = vmatprep.subr.mxu0 %v1420
        %2350 = vmatpush1.msra.mxu0 %v1419
        %2351 = vmatprep.subr.mxu0 %v1424
        %2352 = vmatpush1.msra.mxu0 %v1423
        %2353 = vmatprep.subr.mxu0 %v1428
        %2354 = vmatpush1.msra.mxu0 %v1427
        %2355 = vmatprep.subr.mxu0 %v1432
        %2356 = vmatpush1.msra.mxu0 %v1431
        %2357 = vmatprep.subr.mxu0 %v1436
        %2358 = vmatpush1.msra.mxu0 %v1435
        %2359 = vmatprep.subr.mxu0 %v1440
        %2360 = vmatpush1.msra.mxu0 %v1439
        %2361 = vmatprep.subr.mxu0 %v1444
        %2362 = vmatpush1.msra.mxu0 %v1443
        %2363 = vmatprep.subr.mxu0 %v1448
        %2364 = vmatpush1.msra.mxu0 %v1447
        %2365 = vmatprep.subr.mxu0 %v1452
        %2366 = vmatpush1.msra.mxu0 %v1451
        %2367 = vmatprep.subr.mxu0 %v1456
        %2368 = vmatpush1.msra.mxu0 %v1455
        %2369 = vmatprep.subr.mxu0 %v1460
        %2370 = vmatpush1.msra.mxu0 %v1459
        %2371 = vmatprep.subr.mxu0 %v1464
        %2372 = vmatpush1.msra.mxu0 %v1463
        %2373 = vmatprep.subr.mxu0 %v1468
        %2374 = vmatpush1.msra.mxu0 %v1467
        %2375 = vmatprep.subr.mxu0 %v1472
        %2376 = vmatpush1.msra.mxu0 %v1471
        %2377 = vmatprep.subr.mxu0 %v1476
        %2378 = vmatpush1.msra.mxu0 %v1475
        %2379 = vmatprep.subr.mxu0 %v1480
        %2380 = vmatpush1.msra.mxu0 %v1479
        %2381 = vmatprep.subr.mxu0 %v1484
        %2382 = vmatpush1.msra.mxu0 %v1483
        %2383 = vmatprep.subr.mxu0 %v1488
        %2384 = vmatpush1.msra.mxu0 %v1487
        %2385 = vmatprep.subr.mxu0 %v1492
        %2386 = vmatpush1.msra.mxu0 %v1491
        %2387 = vmatprep.subr.mxu0 %v1496
        %2388 = vmatpush1.msra.mxu0 %v1495
        %2389 = vmatprep.subr.mxu0 %v1500
        %2390 = vmatpush1.msra.mxu0 %v1499
        %2391 = vmatprep.subr.mxu0 %v1504
        %2392 = vmatpush1.msra.mxu0 %v1503
        %2393 = vmatprep.subr.mxu0 %v1508
        %2394 = vmatpush1.msra.mxu0 %v1507
        %2395 = vmatprep.subr.mxu0 %v1512
        %2396 = vmatpush1.msra.mxu0 %v1511
        %2397 = vmatprep.subr.mxu0 %v1516
        %2398 = vmatpush1.msra.mxu0 %v1515
        %2399 = vmatprep.subr.mxu0 %v1520
        %2400 = vmatpush1.msra.mxu0 %v1519
        %2401 = vmatprep.subr.mxu0 %v1524
        %2402 = vmatpush1.msra.mxu0 %v1523
        %2403 = vmatprep.subr.mxu0 %v1528
        %2404 = vmatpush1.msra.mxu0 %v1527
        %2405 = vmatprep.subr.mxu0 %v1532
        %2406 = vmatpush1.msra.mxu0 %v1531
        %2407 = vmatprep.subr.mxu0 %v1536
        %2408 = vmatpush1.msra.mxu0 %v1535
        %2409 = vmatprep.mubr.f32.mxu0 %v1755
        %2410 = vmatmul.mubr.f32.gmra.mrb[0].mxu0 %v1747
        %v2411 = vpop.f32.mrb[0].mxu0
        %v2412 = vadd.f32 %v2341, %v2411
        %v2413 = vpop.f32.mrb[0].mxu0
        %v2414 = vadd.f32 %v2343, %v2413
        %2415 = vdwg.mxu0
        %2416 = vmatprep.subr.mxu0 %v1540
        %2417 = vmatpush1.msra.mxu0 %v1539
        %2418 = vmatprep.subr.mxu0 %v1544
        %2419 = vmatpush1.msra.mxu0 %v1543
        %2420 = vmatprep.subr.mxu0 %v1548
        %2421 = vmatpush1.msra.mxu0 %v1547
        %2422 = vmatprep.subr.mxu0 %v1552
        %2423 = vmatpush1.msra.mxu0 %v1551
        %2424 = vmatprep.subr.mxu0 %v1556
        %2425 = vmatpush1.msra.mxu0 %v1555
        %2426 = vmatprep.subr.mxu0 %v1560
        %2427 = vmatpush1.msra.mxu0 %v1559
        %2428 = vmatprep.subr.mxu0 %v1564
        %2429 = vmatpush1.msra.mxu0 %v1563
        %2430 = vmatprep.subr.mxu0 %v1568
        %2431 = vmatpush1.msra.mxu0 %v1567
        %2432 = vmatprep.subr.mxu0 %v1572
        %2433 = vmatpush1.msra.mxu0 %v1571
        %2434 = vmatprep.subr.mxu0 %v1576
        %2435 = vmatpush1.msra.mxu0 %v1575
        %2436 = vmatprep.subr.mxu0 %v1580
        %2437 = vmatpush1.msra.mxu0 %v1579
        %2438 = vmatprep.subr.mxu0 %v1584
        %2439 = vmatpush1.msra.mxu0 %v1583
        %2440 = vmatprep.subr.mxu0 %v1588
        %2441 = vmatpush1.msra.mxu0 %v1587
        %2442 = vmatprep.subr.mxu0 %v1592
        %2443 = vmatpush1.msra.mxu0 %v1591
        %2444 = vmatprep.subr.mxu0 %v1596
        %2445 = vmatpush1.msra.mxu0 %v1595
        %2446 = vmatprep.subr.mxu0 %v1600
        %2447 = vmatpush1.msra.mxu0 %v1599
        %2448 = vmatprep.subr.mxu0 %v1604
        %2449 = vmatpush1.msra.mxu0 %v1603
        %2450 = vmatprep.subr.mxu0 %v1608
        %2451 = vmatpush1.msra.mxu0 %v1607
        %2452 = vmatprep.subr.mxu0 %v1612
        %2453 = vmatpush1.msra.mxu0 %v1611
        %2454 = vmatprep.subr.mxu0 %v1616
        %2455 = vmatpush1.msra.mxu0 %v1615
        %2456 = vmatprep.subr.mxu0 %v1620
        %2457 = vmatpush1.msra.mxu0 %v1619
        %2458 = vmatprep.subr.mxu0 %v1624
        %2459 = vmatpush1.msra.mxu0 %v1623
        %2460 = vmatprep.subr.mxu0 %v1628
        %2461 = vmatpush1.msra.mxu0 %v1627
        %2462 = vmatprep.subr.mxu0 %v1632
        %2463 = vmatpush1.msra.mxu0 %v1631
        %2464 = vmatprep.subr.mxu0 %v1636
        %2465 = vmatpush1.msra.mxu0 %v1635
        %2466 = vmatprep.subr.mxu0 %v1640
        %2467 = vmatpush1.msra.mxu0 %v1639
        %2468 = vmatprep.subr.mxu0 %v1644
        %2469 = vmatpush1.msra.mxu0 %v1643
        %2470 = vmatprep.subr.mxu0 %v1648
        %2471 = vmatpush1.msra.mxu0 %v1647
        %2472 = vmatprep.subr.mxu0 %v1652
        %2473 = vmatpush1.msra.mxu0 %v1651
        %2474 = vmatprep.subr.mxu0 %v1656
        %2475 = vmatpush1.msra.mxu0 %v1655
        %2476 = vmatprep.subr.mxu0 %v1660
        %2477 = vmatpush1.msra.mxu0 %v1659
        %2478 = vmatprep.subr.mxu0 %v1664
        %2479 = vmatpush1.msra.mxu0 %v1663
        %2480 = vmatprep.mubr.f32.mxu0 %v1756
        %2481 = vmatmul.mubr.f32.gmra.mrb[0].mxu0 %v1754
        %v2482 = vpop.f32.mrb[0].mxu0
        %v2483 = vadd.f32 %v2412, %v2482
        %v2484 = vpop.f32.mrb[0].mxu0
        %v2485 = vadd.f32 %v2414, %v2484
        %2486 = vdwg.mxu0
        %2487 = vmatprep.subr.mxu0 %v390
        %2488 = vmatpush1.msra.mxu0 %v389
        %2489 = vmatprep.subr.mxu0 %v394
        %2490 = vmatpush1.msra.mxu0 %v393
        %2491 = vmatprep.subr.mxu0 %v398
        %2492 = vmatpush1.msra.mxu0 %v397
        %2493 = vmatprep.subr.mxu0 %v402
        %2494 = vmatpush1.msra.mxu0 %v401
        %2495 = vmatprep.subr.mxu0 %v406
        %2496 = vmatpush1.msra.mxu0 %v405
        %2497 = vmatprep.subr.mxu0 %v410
        %2498 = vmatpush1.msra.mxu0 %v409
        %2499 = vmatprep.subr.mxu0 %v414
        %2500 = vmatpush1.msra.mxu0 %v413
        %2501 = vmatprep.subr.mxu0 %v418
        %2502 = vmatpush1.msra.mxu0 %v417
        %2503 = vmatprep.subr.mxu0 %v422
        %2504 = vmatpush1.msra.mxu0 %v421
        %2505 = vmatprep.subr.mxu0 %v426
        %2506 = vmatpush1.msra.mxu0 %v425
        %2507 = vmatprep.subr.mxu0 %v430
        %2508 = vmatpush1.msra.mxu0 %v429
        %2509 = vmatprep.subr.mxu0 %v434
        %2510 = vmatpush1.msra.mxu0 %v433
        %2511 = vmatprep.subr.mxu0 %v438
        %2512 = vmatpush1.msra.mxu0 %v437
        %2513 = vmatprep.subr.mxu0 %v442
        %2514 = vmatpush1.msra.mxu0 %v441
        %2515 = vmatprep.subr.mxu0 %v446
        %2516 = vmatpush1.msra.mxu0 %v445
        %2517 = vmatprep.subr.mxu0 %v450
        %2518 = vmatpush1.msra.mxu0 %v449
        %2519 = vmatprep.subr.mxu0 %v454
        %2520 = vmatpush1.msra.mxu0 %v453
        %2521 = vmatprep.subr.mxu0 %v458
        %2522 = vmatpush1.msra.mxu0 %v457
        %2523 = vmatprep.subr.mxu0 %v462
        %2524 = vmatpush1.msra.mxu0 %v461
        %2525 = vmatprep.subr.mxu0 %v466
        %2526 = vmatpush1.msra.mxu0 %v465
        %2527 = vmatprep.subr.mxu0 %v470
        %2528 = vmatpush1.msra.mxu0 %v469
        %2529 = vmatprep.subr.mxu0 %v474
        %2530 = vmatpush1.msra.mxu0 %v473
        %2531 = vmatprep.subr.mxu0 %v478
        %2532 = vmatpush1.msra.mxu0 %v477
        %2533 = vmatprep.subr.mxu0 %v482
        %2534 = vmatpush1.msra.mxu0 %v481
        %2535 = vmatprep.subr.mxu0 %v486
        %2536 = vmatpush1.msra.mxu0 %v485
        %2537 = vmatprep.subr.mxu0 %v490
        %2538 = vmatpush1.msra.mxu0 %v489
        %2539 = vmatprep.subr.mxu0 %v494
        %2540 = vmatpush1.msra.mxu0 %v493
        %2541 = vmatprep.subr.mxu0 %v498
        %2542 = vmatpush1.msra.mxu0 %v497
        %2543 = vmatprep.subr.mxu0 %v502
        %2544 = vmatpush1.msra.mxu0 %v501
        %2545 = vmatprep.subr.mxu0 %v506
        %2546 = vmatpush1.msra.mxu0 %v505
        %2547 = vmatprep.subr.mxu0 %v510
        %2548 = vmatpush1.msra.mxu0 %v509
        %2549 = vmatprep.subr.mxu0 %v514
        %2550 = vmatpush1.msra.mxu0 %v513
        %2551 = vmatprep.mubr.f32.mxu0 %v1687
        %2552 = vmatmul.mubr.f32.gmra.mrb[0].mxu0 %v1679
        %v2553 = vpop.f32.mrb[0].mxu0
        %v2554 = vadd.f32 0.0, %v2553
        %v2555 = vpop.f32.mrb[0].mxu0
        %v2556 = vadd.f32 0.0, %v2555
        %2557 = vdwg.mxu0
        %2558 = vmatprep.subr.mxu0 %v518
        %2559 = vmatpush1.msra.mxu0 %v517
        %2560 = vmatprep.subr.mxu0 %v522
        %2561 = vmatpush1.msra.mxu0 %v521
        %2562 = vmatprep.subr.mxu0 %v526
        %2563 = vmatpush1.msra.mxu0 %v525
        %2564 = vmatprep.subr.mxu0 %v530
        %2565 = vmatpush1.msra.mxu0 %v529
        %2566 = vmatprep.subr.mxu0 %v534
        %2567 = vmatpush1.msra.mxu0 %v533
        %2568 = vmatprep.subr.mxu0 %v538
        %2569 = vmatpush1.msra.mxu0 %v537
        %2570 = vmatprep.subr.mxu0 %v542
        %2571 = vmatpush1.msra.mxu0 %v541
        %2572 = vmatprep.subr.mxu0 %v546
        %2573 = vmatpush1.msra.mxu0 %v545
        %2574 = vmatprep.subr.mxu0 %v550
        %2575 = vmatpush1.msra.mxu0 %v549
        %2576 = vmatprep.subr.mxu0 %v554
        %2577 = vmatpush1.msra.mxu0 %v553
        %2578 = vmatprep.subr.mxu0 %v558
        %2579 = vmatpush1.msra.mxu0 %v557
        %2580 = vmatprep.subr.mxu0 %v562
        %2581 = vmatpush1.msra.mxu0 %v561
        %2582 = vmatprep.subr.mxu0 %v566
        %2583 = vmatpush1.msra.mxu0 %v565
        %2584 = vmatprep.subr.mxu0 %v570
        %2585 = vmatpush1.msra.mxu0 %v569
        %2586 = vmatprep.subr.mxu0 %v574
        %2587 = vmatpush1.msra.mxu0 %v573
        %2588 = vmatprep.subr.mxu0 %v578
        %2589 = vmatpush1.msra.mxu0 %v577
        %2590 = vmatprep.subr.mxu0 %v582
        %2591 = vmatpush1.msra.mxu0 %v581
        %2592 = vmatprep.subr.mxu0 %v586
        %2593 = vmatpush1.msra.mxu0 %v585
        %2594 = vmatprep.subr.mxu0 %v590
        %2595 = vmatpush1.msra.mxu0 %v589
        %2596 = vmatprep.subr.mxu0 %v594
        %2597 = vmatpush1.msra.mxu0 %v593
        %2598 = vmatprep.subr.mxu0 %v598
        %2599 = vmatpush1.msra.mxu0 %v597
        %2600 = vmatprep.subr.mxu0 %v602
        %2601 = vmatpush1.msra.mxu0 %v601
        %2602 = vmatprep.subr.mxu0 %v606
        %2603 = vmatpush1.msra.mxu0 %v605
        %2604 = vmatprep.subr.mxu0 %v610
        %2605 = vmatpush1.msra.mxu0 %v609
        %2606 = vmatprep.subr.mxu0 %v614
        %2607 = vmatpush1.msra.mxu0 %v613
        %2608 = vmatprep.subr.mxu0 %v618
        %2609 = vmatpush1.msra.mxu0 %v617
        %2610 = vmatprep.subr.mxu0 %v622
        %2611 = vmatpush1.msra.mxu0 %v621
        %2612 = vmatprep.subr.mxu0 %v626
        %2613 = vmatpush1.msra.mxu0 %v625
        %2614 = vmatprep.subr.mxu0 %v630
        %2615 = vmatpush1.msra.mxu0 %v629
        %2616 = vmatprep.subr.mxu0 %v634
        %2617 = vmatpush1.msra.mxu0 %v633
        %2618 = vmatprep.subr.mxu0 %v638
        %2619 = vmatpush1.msra.mxu0 %v637
        %2620 = vmatprep.subr.mxu0 %v642
        %2621 = vmatpush1.msra.mxu0 %v641
        %2622 = vmatprep.mubr.f32.mxu0 %v1688
        %2623 = vmatmul.mubr.f32.gmra.mrb[0].mxu0 %v1686
        %v2624 = vpop.f32.mrb[0].mxu0
        %v2625 = vadd.f32 %v2554, %v2624
        %v2626 = vpop.f32.mrb[0].mxu0
        %v2627 = vadd.f32 %v2556, %v2626
        %2628 = vdwg.mxu0
        %2629 = vmatprep.subr.mxu0 %v646
        %2630 = vmatpush1.msra.mxu0 %v645
        %2631 = vmatprep.subr.mxu0 %v650
        %2632 = vmatpush1.msra.mxu0 %v649
        %2633 = vmatprep.subr.mxu0 %v654
        %2634 = vmatpush1.msra.mxu0 %v653
        %2635 = vmatprep.subr.mxu0 %v658
        %2636 = vmatpush1.msra.mxu0 %v657
        %2637 = vmatprep.subr.mxu0 %v662
        %2638 = vmatpush1.msra.mxu0 %v661
        %2639 = vmatprep.subr.mxu0 %v666
        %2640 = vmatpush1.msra.mxu0 %v665
        %2641 = vmatprep.subr.mxu0 %v670
        %2642 = vmatpush1.msra.mxu0 %v669
        %2643 = vmatprep.subr.mxu0 %v674
        %2644 = vmatpush1.msra.mxu0 %v673
        %2645 = vmatprep.subr.mxu0 %v678
        %2646 = vmatpush1.msra.mxu0 %v677
        %2647 = vmatprep.subr.mxu0 %v682
        %2648 = vmatpush1.msra.mxu0 %v681
        %2649 = vmatprep.subr.mxu0 %v686
        %2650 = vmatpush1.msra.mxu0 %v685
        %2651 = vmatprep.subr.mxu0 %v690
        %2652 = vmatpush1.msra.mxu0 %v689
        %2653 = vmatprep.subr.mxu0 %v694
        %2654 = vmatpush1.msra.mxu0 %v693
        %2655 = vmatprep.subr.mxu0 %v698
        %2656 = vmatpush1.msra.mxu0 %v697
        %2657 = vmatprep.subr.mxu0 %v702
        %2658 = vmatpush1.msra.mxu0 %v701
        %2659 = vmatprep.subr.mxu0 %v706
        %2660 = vmatpush1.msra.mxu0 %v705
        %2661 = vmatprep.subr.mxu0 %v710
        %2662 = vmatpush1.msra.mxu0 %v709
        %2663 = vmatprep.subr.mxu0 %v714
        %2664 = vmatpush1.msra.mxu0 %v713
        %2665 = vmatprep.subr.mxu0 %v718
        %2666 = vmatpush1.msra.mxu0 %v717
        %2667 = vmatprep.subr.mxu0 %v722
        %2668 = vmatpush1.msra.mxu0 %v721
        %2669 = vmatprep.subr.mxu0 %v726
        %2670 = vmatpush1.msra.mxu0 %v725
        %2671 = vmatprep.subr.mxu0 %v730
        %2672 = vmatpush1.msra.mxu0 %v729
        %2673 = vmatprep.subr.mxu0 %v734
        %2674 = vmatpush1.msra.mxu0 %v733
        %2675 = vmatprep.subr.mxu0 %v738
        %2676 = vmatpush1.msra.mxu0 %v737
        %2677 = vmatprep.subr.mxu0 %v742
        %2678 = vmatpush1.msra.mxu0 %v741
        %2679 = vmatprep.subr.mxu0 %v746
        %2680 = vmatpush1.msra.mxu0 %v745
        %2681 = vmatprep.subr.mxu0 %v750
        %2682 = vmatpush1.msra.mxu0 %v749
        %2683 = vmatprep.subr.mxu0 %v754
        %2684 = vmatpush1.msra.mxu0 %v753
        %2685 = vmatprep.subr.mxu0 %v758
        %2686 = vmatpush1.msra.mxu0 %v757
        %2687 = vmatprep.subr.mxu0 %v762
        %2688 = vmatpush1.msra.mxu0 %v761
        %2689 = vmatprep.subr.mxu0 %v766
        %2690 = vmatpush1.msra.mxu0 %v765
        %2691 = vmatprep.subr.mxu0 %v770
        %2692 = vmatpush1.msra.mxu0 %v769
        %2693 = vmatprep.mubr.f32.mxu0 %v1704
        %2694 = vmatmul.mubr.f32.gmra.mrb[0].mxu0 %v1696
        %v2695 = vpop.f32.mrb[0].mxu0
        %v2696 = vadd.f32 %v2625, %v2695
        %v2697 = vpop.f32.mrb[0].mxu0
        %v2698 = vadd.f32 %v2627, %v2697
        %2699 = vdwg.mxu0
        %2700 = vmatprep.subr.mxu0 %v774
        %2701 = vmatpush1.msra.mxu0 %v773
        %2702 = vmatprep.subr.mxu0 %v778
        %2703 = vmatpush1.msra.mxu0 %v777
        %2704 = vmatprep.subr.mxu0 %v782
        %2705 = vmatpush1.msra.mxu0 %v781
        %2706 = vmatprep.subr.mxu0 %v786
        %2707 = vmatpush1.msra.mxu0 %v785
        %2708 = vmatprep.subr.mxu0 %v790
        %2709 = vmatpush1.msra.mxu0 %v789
        %2710 = vmatprep.subr.mxu0 %v794
        %2711 = vmatpush1.msra.mxu0 %v793
        %2712 = vmatprep.subr.mxu0 %v798
        %2713 = vmatpush1.msra.mxu0 %v797
        %2714 = vmatprep.subr.mxu0 %v802
        %2715 = vmatpush1.msra.mxu0 %v801
        %2716 = vmatprep.subr.mxu0 %v806
        %2717 = vmatpush1.msra.mxu0 %v805
        %2718 = vmatprep.subr.mxu0 %v810
        %2719 = vmatpush1.msra.mxu0 %v809
        %2720 = vmatprep.subr.mxu0 %v814
        %2721 = vmatpush1.msra.mxu0 %v813
        %2722 = vmatprep.subr.mxu0 %v818
        %2723 = vmatpush1.msra.mxu0 %v817
        %2724 = vmatprep.subr.mxu0 %v822
        %2725 = vmatpush1.msra.mxu0 %v821
        %2726 = vmatprep.subr.mxu0 %v826
        %2727 = vmatpush1.msra.mxu0 %v825
        %2728 = vmatprep.subr.mxu0 %v830
        %2729 = vmatpush1.msra.mxu0 %v829
        %2730 = vmatprep.subr.mxu0 %v834
        %2731 = vmatpush1.msra.mxu0 %v833
        %2732 = vmatprep.subr.mxu0 %v838
        %2733 = vmatpush1.msra.mxu0 %v837
        %2734 = vmatprep.subr.mxu0 %v842
        %2735 = vmatpush1.msra.mxu0 %v841
        %2736 = vmatprep.subr.mxu0 %v846
        %2737 = vmatpush1.msra.mxu0 %v845
        %2738 = vmatprep.subr.mxu0 %v850
        %2739 = vmatpush1.msra.mxu0 %v849
        %2740 = vmatprep.subr.mxu0 %v854
        %2741 = vmatpush1.msra.mxu0 %v853
        %2742 = vmatprep.subr.mxu0 %v858
        %2743 = vmatpush1.msra.mxu0 %v857
        %2744 = vmatprep.subr.mxu0 %v862
        %2745 = vmatpush1.msra.mxu0 %v861
        %2746 = vmatprep.subr.mxu0 %v866
        %2747 = vmatpush1.msra.mxu0 %v865
        %2748 = vmatprep.subr.mxu0 %v870
        %2749 = vmatpush1.msra.mxu0 %v869
        %2750 = vmatprep.subr.mxu0 %v874
        %2751 = vmatpush1.msra.mxu0 %v873
        %2752 = vmatprep.subr.mxu0 %v878
        %2753 = vmatpush1.msra.mxu0 %v877
        %2754 = vmatprep.subr.mxu0 %v882
        %2755 = vmatpush1.msra.mxu0 %v881
        %2756 = vmatprep.subr.mxu0 %v886
        %2757 = vmatpush1.msra.mxu0 %v885
        %2758 = vmatprep.subr.mxu0 %v890
        %2759 = vmatpush1.msra.mxu0 %v889
        %2760 = vmatprep.subr.mxu0 %v894
        %2761 = vmatpush1.msra.mxu0 %v893
        %2762 = vmatprep.subr.mxu0 %v898
        %2763 = vmatpush1.msra.mxu0 %v897
        %2764 = vmatprep.mubr.f32.mxu0 %v1705
        %2765 = vmatmul.mubr.f32.gmra.mrb[0].mxu0 %v1703
        %v2766 = vpop.f32.mrb[0].mxu0
        %v2767 = vadd.f32 %v2696, %v2766
        %v2768 = vpop.f32.mrb[0].mxu0
        %v2769 = vadd.f32 %v2698, %v2768
        %2770 = vdwg.mxu0
        %2771 = vmatprep.subr.mxu0 %v902
        %2772 = vmatpush1.msra.mxu0 %v901
        %2773 = vmatprep.subr.mxu0 %v906
        %2774 = vmatpush1.msra.mxu0 %v905
        %2775 = vmatprep.subr.mxu0 %v910
        %2776 = vmatpush1.msra.mxu0 %v909
        %2777 = vmatprep.subr.mxu0 %v914
        %2778 = vmatpush1.msra.mxu0 %v913
        %2779 = vmatprep.subr.mxu0 %v918
        %2780 = vmatpush1.msra.mxu0 %v917
        %2781 = vmatprep.subr.mxu0 %v922
        %2782 = vmatpush1.msra.mxu0 %v921
        %2783 = vmatprep.subr.mxu0 %v926
        %2784 = vmatpush1.msra.mxu0 %v925
        %2785 = vmatprep.subr.mxu0 %v930
        %2786 = vmatpush1.msra.mxu0 %v929
        %2787 = vmatprep.subr.mxu0 %v934
        %2788 = vmatpush1.msra.mxu0 %v933
        %2789 = vmatprep.subr.mxu0 %v938
        %2790 = vmatpush1.msra.mxu0 %v937
        %2791 = vmatprep.subr.mxu0 %v942
        %2792 = vmatpush1.msra.mxu0 %v941
        %2793 = vmatprep.subr.mxu0 %v946
        %2794 = vmatpush1.msra.mxu0 %v945
        %2795 = vmatprep.subr.mxu0 %v950
        %2796 = vmatpush1.msra.mxu0 %v949
        %2797 = vmatprep.subr.mxu0 %v954
        %2798 = vmatpush1.msra.mxu0 %v953
        %2799 = vmatprep.subr.mxu0 %v958
        %2800 = vmatpush1.msra.mxu0 %v957
        %2801 = vmatprep.subr.mxu0 %v962
        %2802 = vmatpush1.msra.mxu0 %v961
        %2803 = vmatprep.subr.mxu0 %v966
        %2804 = vmatpush1.msra.mxu0 %v965
        %2805 = vmatprep.subr.mxu0 %v970
        %2806 = vmatpush1.msra.mxu0 %v969
        %2807 = vmatprep.subr.mxu0 %v974
        %2808 = vmatpush1.msra.mxu0 %v973
        %2809 = vmatprep.subr.mxu0 %v978
        %2810 = vmatpush1.msra.mxu0 %v977
        %2811 = vmatprep.subr.mxu0 %v982
        %2812 = vmatpush1.msra.mxu0 %v981
        %2813 = vmatprep.subr.mxu0 %v986
        %2814 = vmatpush1.msra.mxu0 %v985
        %2815 = vmatprep.subr.mxu0 %v990
        %2816 = vmatpush1.msra.mxu0 %v989
        %2817 = vmatprep.subr.mxu0 %v994
        %2818 = vmatpush1.msra.mxu0 %v993
        %2819 = vmatprep.subr.mxu0 %v998
        %2820 = vmatpush1.msra.mxu0 %v997
        %2821 = vmatprep.subr.mxu0 %v1002
        %2822 = vmatpush1.msra.mxu0 %v1001
        %2823 = vmatprep.subr.mxu0 %v1006
        %2824 = vmatpush1.msra.mxu0 %v1005
        %2825 = vmatprep.subr.mxu0 %v1010
        %2826 = vmatpush1.msra.mxu0 %v1009
        %2827 = vmatprep.subr.mxu0 %v1014
        %2828 = vmatpush1.msra.mxu0 %v1013
        %2829 = vmatprep.subr.mxu0 %v1018
        %2830 = vmatpush1.msra.mxu0 %v1017
        %2831 = vmatprep.subr.mxu0 %v1022
        %2832 = vmatpush1.msra.mxu0 %v1021
        %2833 = vmatprep.subr.mxu0 %v1026
        %2834 = vmatpush1.msra.mxu0 %v1025
        %2835 = vmatprep.mubr.f32.mxu0 %v1721
        %2836 = vmatmul.mubr.f32.gmra.mrb[0].mxu0 %v1713
        %v2837 = vpop.f32.mrb[0].mxu0
        %v2838 = vadd.f32 %v2767, %v2837
        %v2839 = vpop.f32.mrb[0].mxu0
        %v2840 = vadd.f32 %v2769, %v2839
        %2841 = vdwg.mxu0
        %2842 = vmatprep.subr.mxu0 %v1030
        %2843 = vmatpush1.msra.mxu0 %v1029
        %2844 = vmatprep.subr.mxu0 %v1034
        %2845 = vmatpush1.msra.mxu0 %v1033
        %2846 = vmatprep.subr.mxu0 %v1038
        %2847 = vmatpush1.msra.mxu0 %v1037
        %2848 = vmatprep.subr.mxu0 %v1042
        %2849 = vmatpush1.msra.mxu0 %v1041
        %2850 = vmatprep.subr.mxu0 %v1046
        %2851 = vmatpush1.msra.mxu0 %v1045
        %2852 = vmatprep.subr.mxu0 %v1050
        %2853 = vmatpush1.msra.mxu0 %v1049
        %2854 = vmatprep.subr.mxu0 %v1054
        %2855 = vmatpush1.msra.mxu0 %v1053
        %2856 = vmatprep.subr.mxu0 %v1058
        %2857 = vmatpush1.msra.mxu0 %v1057
        %2858 = vmatprep.subr.mxu0 %v1062
        %2859 = vmatpush1.msra.mxu0 %v1061
        %2860 = vmatprep.subr.mxu0 %v1066
        %2861 = vmatpush1.msra.mxu0 %v1065
        %2862 = vmatprep.subr.mxu0 %v1070
        %2863 = vmatpush1.msra.mxu0 %v1069
        %2864 = vmatprep.subr.mxu0 %v1074
        %2865 = vmatpush1.msra.mxu0 %v1073
        %2866 = vmatprep.subr.mxu0 %v1078
        %2867 = vmatpush1.msra.mxu0 %v1077
        %2868 = vmatprep.subr.mxu0 %v1082
        %2869 = vmatpush1.msra.mxu0 %v1081
        %2870 = vmatprep.subr.mxu0 %v1086
        %2871 = vmatpush1.msra.mxu0 %v1085
        %2872 = vmatprep.subr.mxu0 %v1090
        %2873 = vmatpush1.msra.mxu0 %v1089
        %2874 = vmatprep.subr.mxu0 %v1094
        %2875 = vmatpush1.msra.mxu0 %v1093
        %2876 = vmatprep.subr.mxu0 %v1098
        %2877 = vmatpush1.msra.mxu0 %v1097
        %2878 = vmatprep.subr.mxu0 %v1102
        %2879 = vmatpush1.msra.mxu0 %v1101
        %2880 = vmatprep.subr.mxu0 %v1106
        %2881 = vmatpush1.msra.mxu0 %v1105
        %2882 = vmatprep.subr.mxu0 %v1110
        %2883 = vmatpush1.msra.mxu0 %v1109
        %2884 = vmatprep.subr.mxu0 %v1114
        %2885 = vmatpush1.msra.mxu0 %v1113
        %2886 = vmatprep.subr.mxu0 %v1118
        %2887 = vmatpush1.msra.mxu0 %v1117
        %2888 = vmatprep.subr.mxu0 %v1122
        %2889 = vmatpush1.msra.mxu0 %v1121
        %2890 = vmatprep.subr.mxu0 %v1126
        %2891 = vmatpush1.msra.mxu0 %v1125
        %2892 = vmatprep.subr.mxu0 %v1130
        %2893 = vmatpush1.msra.mxu0 %v1129
        %2894 = vmatprep.subr.mxu0 %v1134
        %2895 = vmatpush1.msra.mxu0 %v1133
        %2896 = vmatprep.subr.mxu0 %v1138
        %2897 = vmatpush1.msra.mxu0 %v1137
        %2898 = vmatprep.subr.mxu0 %v1142
        %2899 = vmatpush1.msra.mxu0 %v1141
        %2900 = vmatprep.subr.mxu0 %v1146
        %2901 = vmatpush1.msra.mxu0 %v1145
        %2902 = vmatprep.subr.mxu0 %v1150
        %2903 = vmatpush1.msra.mxu0 %v1149
        %2904 = vmatprep.subr.mxu0 %v1154
        %2905 = vmatpush1.msra.mxu0 %v1153
        %2906 = vmatprep.mubr.f32.mxu0 %v1722
        %2907 = vmatmul.mubr.f32.gmra.mrb[0].mxu0 %v1720
        %v2908 = vpop.f32.mrb[0].mxu0
        %v2909 = vadd.f32 %v2838, %v2908
        %v2910 = vpop.f32.mrb[0].mxu0
        %v2911 = vadd.f32 %v2840, %v2910
        %2912 = vdwg.mxu0
        %2913 = vmatprep.subr.mxu0 %v1158
        %2914 = vmatpush1.msra.mxu0 %v1157
        %2915 = vmatprep.subr.mxu0 %v1162
        %2916 = vmatpush1.msra.mxu0 %v1161
        %2917 = vmatprep.subr.mxu0 %v1166
        %2918 = vmatpush1.msra.mxu0 %v1165
        %2919 = vmatprep.subr.mxu0 %v1170
        %2920 = vmatpush1.msra.mxu0 %v1169
        %2921 = vmatprep.subr.mxu0 %v1174
        %2922 = vmatpush1.msra.mxu0 %v1173
        %2923 = vmatprep.subr.mxu0 %v1178
        %2924 = vmatpush1.msra.mxu0 %v1177
        %2925 = vmatprep.subr.mxu0 %v1182
        %2926 = vmatpush1.msra.mxu0 %v1181
        %2927 = vmatprep.subr.mxu0 %v1186
        %2928 = vmatpush1.msra.mxu0 %v1185
        %2929 = vmatprep.subr.mxu0 %v1190
        %2930 = vmatpush1.msra.mxu0 %v1189
        %2931 = vmatprep.subr.mxu0 %v1194
        %2932 = vmatpush1.msra.mxu0 %v1193
        %2933 = vmatprep.subr.mxu0 %v1198
        %2934 = vmatpush1.msra.mxu0 %v1197
        %2935 = vmatprep.subr.mxu0 %v1202
        %2936 = vmatpush1.msra.mxu0 %v1201
        %2937 = vmatprep.subr.mxu0 %v1206
        %2938 = vmatpush1.msra.mxu0 %v1205
        %2939 = vmatprep.subr.mxu0 %v1210
        %2940 = vmatpush1.msra.mxu0 %v1209
        %2941 = vmatprep.subr.mxu0 %v1214
        %2942 = vmatpush1.msra.mxu0 %v1213
        %2943 = vmatprep.subr.mxu0 %v1218
        %2944 = vmatpush1.msra.mxu0 %v1217
        %2945 = vmatprep.subr.mxu0 %v1222
        %2946 = vmatpush1.msra.mxu0 %v1221
        %2947 = vmatprep.subr.mxu0 %v1226
        %2948 = vmatpush1.msra.mxu0 %v1225
        %2949 = vmatprep.subr.mxu0 %v1230
        %2950 = vmatpush1.msra.mxu0 %v1229
        %2951 = vmatprep.subr.mxu0 %v1234
        %2952 = vmatpush1.msra.mxu0 %v1233
        %2953 = vmatprep.subr.mxu0 %v1238
        %2954 = vmatpush1.msra.mxu0 %v1237
        %2955 = vmatprep.subr.mxu0 %v1242
        %2956 = vmatpush1.msra.mxu0 %v1241
        %2957 = vmatprep.subr.mxu0 %v1246
        %2958 = vmatpush1.msra.mxu0 %v1245
        %2959 = vmatprep.subr.mxu0 %v1250
        %2960 = vmatpush1.msra.mxu0 %v1249
        %2961 = vmatprep.subr.mxu0 %v1254
        %2962 = vmatpush1.msra.mxu0 %v1253
        %2963 = vmatprep.subr.mxu0 %v1258
        %2964 = vmatpush1.msra.mxu0 %v1257
        %2965 = vmatprep.subr.mxu0 %v1262
        %2966 = vmatpush1.msra.mxu0 %v1261
        %2967 = vmatprep.subr.mxu0 %v1266
        %2968 = vmatpush1.msra.mxu0 %v1265
        %2969 = vmatprep.subr.mxu0 %v1270
        %2970 = vmatpush1.msra.mxu0 %v1269
        %2971 = vmatprep.subr.mxu0 %v1274
        %2972 = vmatpush1.msra.mxu0 %v1273
        %2973 = vmatprep.subr.mxu0 %v1278
        %2974 = vmatpush1.msra.mxu0 %v1277
        %2975 = vmatprep.subr.mxu0 %v1282
        %2976 = vmatpush1.msra.mxu0 %v1281
        %2977 = vmatprep.mubr.f32.mxu0 %v1738
        %2978 = vmatmul.mubr.f32.gmra.mrb[0].mxu0 %v1730
        %v2979 = vpop.f32.mrb[0].mxu0
        %v2980 = vadd.f32 %v2909, %v2979
        %v2981 = vpop.f32.mrb[0].mxu0
        %v2982 = vadd.f32 %v2911, %v2981
        %2983 = vdwg.mxu0
        %2984 = vmatprep.subr.mxu0 %v1286
        %2985 = vmatpush1.msra.mxu0 %v1285
        %2986 = vmatprep.subr.mxu0 %v1290
        %2987 = vmatpush1.msra.mxu0 %v1289
        %2988 = vmatprep.subr.mxu0 %v1294
        %2989 = vmatpush1.msra.mxu0 %v1293
        %2990 = vmatprep.subr.mxu0 %v1298
        %2991 = vmatpush1.msra.mxu0 %v1297
        %2992 = vmatprep.subr.mxu0 %v1302
        %2993 = vmatpush1.msra.mxu0 %v1301
        %2994 = vmatprep.subr.mxu0 %v1306
        %2995 = vmatpush1.msra.mxu0 %v1305
        %2996 = vmatprep.subr.mxu0 %v1310
        %2997 = vmatpush1.msra.mxu0 %v1309
        %2998 = vmatprep.subr.mxu0 %v1314
        %2999 = vmatpush1.msra.mxu0 %v1313
        %3000 = vmatprep.subr.mxu0 %v1318
        %3001 = vmatpush1.msra.mxu0 %v1317
        %3002 = vmatprep.subr.mxu0 %v1322
        %3003 = vmatpush1.msra.mxu0 %v1321
        %3004 = vmatprep.subr.mxu0 %v1326
        %3005 = vmatpush1.msra.mxu0 %v1325
        %3006 = vmatprep.subr.mxu0 %v1330
        %3007 = vmatpush1.msra.mxu0 %v1329
        %3008 = vmatprep.subr.mxu0 %v1334
        %3009 = vmatpush1.msra.mxu0 %v1333
        %3010 = vmatprep.subr.mxu0 %v1338
        %3011 = vmatpush1.msra.mxu0 %v1337
        %3012 = vmatprep.subr.mxu0 %v1342
        %3013 = vmatpush1.msra.mxu0 %v1341
        %3014 = vmatprep.subr.mxu0 %v1346
        %3015 = vmatpush1.msra.mxu0 %v1345
        %3016 = vmatprep.subr.mxu0 %v1350
        %3017 = vmatpush1.msra.mxu0 %v1349
        %3018 = vmatprep.subr.mxu0 %v1354
        %3019 = vmatpush1.msra.mxu0 %v1353
        %3020 = vmatprep.subr.mxu0 %v1358
        %3021 = vmatpush1.msra.mxu0 %v1357
        %3022 = vmatprep.subr.mxu0 %v1362
        %3023 = vmatpush1.msra.mxu0 %v1361
        %3024 = vmatprep.subr.mxu0 %v1366
        %3025 = vmatpush1.msra.mxu0 %v1365
        %3026 = vmatprep.subr.mxu0 %v1370
        %3027 = vmatpush1.msra.mxu0 %v1369
        %3028 = vmatprep.subr.mxu0 %v1374
        %3029 = vmatpush1.msra.mxu0 %v1373
        %3030 = vmatprep.subr.mxu0 %v1378
        %3031 = vmatpush1.msra.mxu0 %v1377
        %3032 = vmatprep.subr.mxu0 %v1382
        %3033 = vmatpush1.msra.mxu0 %v1381
        %3034 = vmatprep.subr.mxu0 %v1386
        %3035 = vmatpush1.msra.mxu0 %v1385
        %3036 = vmatprep.subr.mxu0 %v1390
        %3037 = vmatpush1.msra.mxu0 %v1389
        %3038 = vmatprep.subr.mxu0 %v1394
        %3039 = vmatpush1.msra.mxu0 %v1393
        %3040 = vmatprep.subr.mxu0 %v1398
        %3041 = vmatpush1.msra.mxu0 %v1397
        %3042 = vmatprep.subr.mxu0 %v1402
        %3043 = vmatpush1.msra.mxu0 %v1401
        %3044 = vmatprep.subr.mxu0 %v1406
        %3045 = vmatpush1.msra.mxu0 %v1405
        %3046 = vmatprep.subr.mxu0 %v1410
        %3047 = vmatpush1.msra.mxu0 %v1409
        %3048 = vmatprep.mubr.f32.mxu0 %v1739
        %3049 = vmatmul.mubr.f32.gmra.mrb[0].mxu0 %v1737
        %v3050 = vpop.f32.mrb[0].mxu0
        %v3051 = vadd.f32 %v2980, %v3050
        %v3052 = vpop.f32.mrb[0].mxu0
        %v3053 = vadd.f32 %v2982, %v3052
        %3054 = vdwg.mxu0
        %3055 = vmatprep.subr.mxu0 %v1414
        %3056 = vmatpush1.msra.mxu0 %v1413
        %3057 = vmatprep.subr.mxu0 %v1418
        %3058 = vmatpush1.msra.mxu0 %v1417
        %3059 = vmatprep.subr.mxu0 %v1422
        %3060 = vmatpush1.msra.mxu0 %v1421
        %3061 = vmatprep.subr.mxu0 %v1426
        %3062 = vmatpush1.msra.mxu0 %v1425
        %3063 = vmatprep.subr.mxu0 %v1430
        %3064 = vmatpush1.msra.mxu0 %v1429
        %3065 = vmatprep.subr.mxu0 %v1434
        %3066 = vmatpush1.msra.mxu0 %v1433
        %3067 = vmatprep.subr.mxu0 %v1438
        %3068 = vmatpush1.msra.mxu0 %v1437
        %3069 = vmatprep.subr.mxu0 %v1442
        %3070 = vmatpush1.msra.mxu0 %v1441
        %3071 = vmatprep.subr.mxu0 %v1446
        %3072 = vmatpush1.msra.mxu0 %v1445
        %3073 = vmatprep.subr.mxu0 %v1450
        %3074 = vmatpush1.msra.mxu0 %v1449
        %3075 = vmatprep.subr.mxu0 %v1454
        %3076 = vmatpush1.msra.mxu0 %v1453
        %3077 = vmatprep.subr.mxu0 %v1458
        %3078 = vmatpush1.msra.mxu0 %v1457
        %3079 = vmatprep.subr.mxu0 %v1462
        %3080 = vmatpush1.msra.mxu0 %v1461
        %3081 = vmatprep.subr.mxu0 %v1466
        %3082 = vmatpush1.msra.mxu0 %v1465
        %3083 = vmatprep.subr.mxu0 %v1470
        %3084 = vmatpush1.msra.mxu0 %v1469
        %3085 = vmatprep.subr.mxu0 %v1474
        %3086 = vmatpush1.msra.mxu0 %v1473
        %3087 = vmatprep.subr.mxu0 %v1478
        %3088 = vmatpush1.msra.mxu0 %v1477
        %3089 = vmatprep.subr.mxu0 %v1482
        %3090 = vmatpush1.msra.mxu0 %v1481
        %3091 = vmatprep.subr.mxu0 %v1486
        %3092 = vmatpush1.msra.mxu0 %v1485
        %3093 = vmatprep.subr.mxu0 %v1490
        %3094 = vmatpush1.msra.mxu0 %v1489
        %3095 = vmatprep.subr.mxu0 %v1494
        %3096 = vmatpush1.msra.mxu0 %v1493
        %3097 = vmatprep.subr.mxu0 %v1498
        %3098 = vmatpush1.msra.mxu0 %v1497
        %3099 = vmatprep.subr.mxu0 %v1502
        %3100 = vmatpush1.msra.mxu0 %v1501
        %3101 = vmatprep.subr.mxu0 %v1506
        %3102 = vmatpush1.msra.mxu0 %v1505
        %3103 = vmatprep.subr.mxu0 %v1510
        %3104 = vmatpush1.msra.mxu0 %v1509
        %3105 = vmatprep.subr.mxu0 %v1514
        %3106 = vmatpush1.msra.mxu0 %v1513
        %3107 = vmatprep.subr.mxu0 %v1518
        %3108 = vmatpush1.msra.mxu0 %v1517
        %3109 = vmatprep.subr.mxu0 %v1522
        %3110 = vmatpush1.msra.mxu0 %v1521
        %3111 = vmatprep.subr.mxu0 %v1526
        %3112 = vmatpush1.msra.mxu0 %v1525
        %3113 = vmatprep.subr.mxu0 %v1530
        %3114 = vmatpush1.msra.mxu0 %v1529
        %3115 = vmatprep.subr.mxu0 %v1534
        %3116 = vmatpush1.msra.mxu0 %v1533
        %3117 = vmatprep.subr.mxu0 %v1538
        %3118 = vmatpush1.msra.mxu0 %v1537
        %3119 = vmatprep.mubr.f32.mxu0 %v1755
        %3120 = vmatmul.mubr.f32.gmra.mrb[0].mxu0 %v1747
        %v3121 = vpop.f32.mrb[0].mxu0
        %v3122 = vadd.f32 %v3051, %v3121
        %v3123 = vpop.f32.mrb[0].mxu0
        %v3124 = vadd.f32 %v3053, %v3123
        %3125 = vdwg.mxu0
        %3126 = vmatprep.subr.mxu0 %v1542
        %3127 = vmatpush1.msra.mxu0 %v1541
        %3128 = vmatprep.subr.mxu0 %v1546
        %3129 = vmatpush1.msra.mxu0 %v1545
        %3130 = vmatprep.subr.mxu0 %v1550
        %3131 = vmatpush1.msra.mxu0 %v1549
        %3132 = vmatprep.subr.mxu0 %v1554
        %3133 = vmatpush1.msra.mxu0 %v1553
        %3134 = vmatprep.subr.mxu0 %v1558
        %3135 = vmatpush1.msra.mxu0 %v1557
        %3136 = vmatprep.subr.mxu0 %v1562
        %3137 = vmatpush1.msra.mxu0 %v1561
        %3138 = vmatprep.subr.mxu0 %v1566
        %3139 = vmatpush1.msra.mxu0 %v1565
        %3140 = vmatprep.subr.mxu0 %v1570
        %3141 = vmatpush1.msra.mxu0 %v1569
        %3142 = vmatprep.subr.mxu0 %v1574
        %3143 = vmatpush1.msra.mxu0 %v1573
        %3144 = vmatprep.subr.mxu0 %v1578
        %3145 = vmatpush1.msra.mxu0 %v1577
        %3146 = vmatprep.subr.mxu0 %v1582
        %3147 = vmatpush1.msra.mxu0 %v1581
        %3148 = vmatprep.subr.mxu0 %v1586
        %3149 = vmatpush1.msra.mxu0 %v1585
        %3150 = vmatprep.subr.mxu0 %v1590
        %3151 = vmatpush1.msra.mxu0 %v1589
        %3152 = vmatprep.subr.mxu0 %v1594
        %3153 = vmatpush1.msra.mxu0 %v1593
        %3154 = vmatprep.subr.mxu0 %v1598
        %3155 = vmatpush1.msra.mxu0 %v1597
        %3156 = vmatprep.subr.mxu0 %v1602
        %3157 = vmatpush1.msra.mxu0 %v1601
        %3158 = vmatprep.subr.mxu0 %v1606
        %3159 = vmatpush1.msra.mxu0 %v1605
        %3160 = vmatprep.subr.mxu0 %v1610
        %3161 = vmatpush1.msra.mxu0 %v1609
        %3162 = vmatprep.subr.mxu0 %v1614
        %3163 = vmatpush1.msra.mxu0 %v1613
        %3164 = vmatprep.subr.mxu0 %v1618
        %3165 = vmatpush1.msra.mxu0 %v1617
        %3166 = vmatprep.subr.mxu0 %v1622
        %3167 = vmatpush1.msra.mxu0 %v1621
        %3168 = vmatprep.subr.mxu0 %v1626
        %3169 = vmatpush1.msra.mxu0 %v1625
        %3170 = vmatprep.subr.mxu0 %v1630
        %3171 = vmatpush1.msra.mxu0 %v1629
        %3172 = vmatprep.subr.mxu0 %v1634
        %3173 = vmatpush1.msra.mxu0 %v1633
        %3174 = vmatprep.subr.mxu0 %v1638
        %3175 = vmatpush1.msra.mxu0 %v1637
        %3176 = vmatprep.subr.mxu0 %v1642
        %3177 = vmatpush1.msra.mxu0 %v1641
        %3178 = vmatprep.subr.mxu0 %v1646
        %3179 = vmatpush1.msra.mxu0 %v1645
        %3180 = vmatprep.subr.mxu0 %v1650
        %3181 = vmatpush1.msra.mxu0 %v1649
        %3182 = vmatprep.subr.mxu0 %v1654
        %3183 = vmatpush1.msra.mxu0 %v1653
        %3184 = vmatprep.subr.mxu0 %v1658
        %3185 = vmatpush1.msra.mxu0 %v1657
        %3186 = vmatprep.subr.mxu0 %v1662
        %3187 = vmatpush1.msra.mxu0 %v1661
        %3188 = vmatprep.subr.mxu0 %v1666
        %3189 = vmatpush1.msra.mxu0 %v1665
        %3190 = vmatprep.mubr.f32.mxu0 %v1756
        %3191 = vmatmul.mubr.f32.gmra.mrb[0].mxu0 %v1754
        %v3192 = vpop.f32.mrb[0].mxu0
        %v3193 = vadd.f32 %v3122, %v3192
        %v3194 = vpop.f32.mrb[0].mxu0
        %v3195 = vadd.f32 %v3124, %v3194
        %3196 = vdwg.mxu0
        %v3201 = vcombine.low %v2483, %v2485
        %v3202 = vcombine.low %v3193, %v3195
        %v3204 = vunpack.c.l.s4 1983009808
        %v3205 = vunpack.c.0.s8 %v3204
        %v3206 = vlaneseq
        %v3207 = vshrl.u32 %v3206, 7
        %v3208 = vsub.s32 %v3205, %v3207
        %v3209 = vrot.slane %v3201, %v3208
        %v3211 = vunpack.c.l.s4 1983009808
        %v3212 = vunpack.c.0.s8 %v3211
        %v3213 = vlaneseq
        %v3214 = vshrl.u32 %v3213, 7
        %v3215 = vsub.s32 %v3212, %v3214
        %v3216 = vrot.slane %v3202, %v3215
        %v3217 = vcombine.low %v3209, %v3216
        %v3219 = vadd.f32 %v381, %v3217
        %3220 = vst [vmem:[#allocation2] sm:$0xff] %v3219
        %p3221 = scmp.eq.s32.totalorder %s25, 3
        // Predicated region
        $region77: #{simple_mlp_forward.1} parent=47 // pred_check
          %p3222 = pneg %p3221
        $region78: #{simple_mlp_forward.1} parent=47 // pred_check_branch
          %3224 = sbr.rel (%p3222) target = $region80
        $region79: #{simple_mlp_forward.1} parent=47 // pred_region
          %v3225 = vld [vmem:[#allocation2] sm:$0xff]
          %v3226 = vld [vmem:[#allocation6] sm:$0xf]
          %v3228 = vlaneseq
          %v3229 = vshrl.u32 %v3228, 7
          %v3230 = vsub.s32 0, %v3229
          %v3231 = vrot.slane %v3226, %v3230
          %v3232 = vlaneseq
          %v3233 = vshrl.u32 %v3232, 7
          %v3234 = vsub.s32 1, %v3233
          %v3235 = vrot.slane %v3226, %v3234
          %v3236 = vlaneseq
          %v3237 = vshrl.u32 %v3236, 7
          %v3238 = vsub.s32 2, %v3237
          %v3239 = vrot.slane %v3226, %v3238
          %v3240 = vlaneseq
          %v3241 = vshrl.u32 %v3240, 7
          %v3242 = vsub.s32 3, %v3241
          %v3243 = vrot.slane %v3226, %v3242
          %v3244 = vcombine.low %v3231, %v3235
          %v3245 = vcombine.low %v3239, %v3243
          %v3247 = vunpack.c.l.s4 1983009808
          %v3248 = vunpack.c.0.s8 %v3247
          %v3249 = vlaneseq
          %v3250 = vshrl.u32 %v3249, 7
          %v3251 = vsub.s32 %v3248, %v3250
          %v3252 = vrot.slane %v3244, %v3251
          %v3254 = vunpack.c.l.s4 1983009808
          %v3255 = vunpack.c.0.s8 %v3254
          %v3256 = vlaneseq
          %v3257 = vshrl.u32 %v3256, 7
          %v3258 = vsub.s32 %v3255, %v3257
          %v3259 = vrot.slane %v3245, %v3258
          %v3260 = vcombine.low %v3252, %v3259
          %v3262 = vadd.f32 %v3225, %v3260
          %v3263 = vld [vmem:[#allocation8] sm:$0xff]
          %v3264 = vld [vmem:[#allocation8 + $0x8] sm:$0xff]
          %v3265 = vld [vmem:[#allocation8 + $0x10] sm:$0xff]
          %v3266 = vld [vmem:[#allocation8 + $0x18] sm:$0xff]
          %v3267 = vld [vmem:[#allocation8 + $0x20] sm:$0xff]
          %v3268 = vld [vmem:[#allocation8 + $0x28] sm:$0xff]
          %v3269 = vld [vmem:[#allocation8 + $0x30] sm:$0xff]
          %v3270 = vld [vmem:[#allocation8 + $0x38] sm:$0xff]
          %v3271 = vld [vmem:[#allocation8 + $0x40] sm:$0xff]
          %v3272 = vld [vmem:[#allocation8 + $0x48] sm:$0xff]
          %v3273 = vld [vmem:[#allocation8 + $0x50] sm:$0xff]
          %v3274 = vld [vmem:[#allocation8 + $0x58] sm:$0xff]
          %v3275 = vld [vmem:[#allocation8 + $0x60] sm:$0xff]
          %v3276 = vld [vmem:[#allocation8 + $0x68] sm:$0xff]
          %v3277 = vld [vmem:[#allocation8 + $0x70] sm:$0xff]
          %v3278 = vld [vmem:[#allocation8 + $0x78] sm:$0xff]
          %v3279 = vld [vmem:[#allocation8 + $0x80] sm:$0xff]
          %v3280 = vld [vmem:[#allocation8 + $0x88] sm:$0xff]
          %v3281 = vld [vmem:[#allocation8 + $0x90] sm:$0xff]
          %v3282 = vld [vmem:[#allocation8 + $0x98] sm:$0xff]
          %v3283 = vld [vmem:[#allocation8 + $0xa0] sm:$0xff]
          %v3284 = vld [vmem:[#allocation8 + $0xa8] sm:$0xff]
          %v3285 = vld [vmem:[#allocation8 + $0xb0] sm:$0xff]
          %v3286 = vld [vmem:[#allocation8 + $0xb8] sm:$0xff]
          %v3287 = vld [vmem:[#allocation8 + $0xc0] sm:$0xff]
          %v3288 = vld [vmem:[#allocation8 + $0xc8] sm:$0xff]
          %v3289 = vld [vmem:[#allocation8 + $0xd0] sm:$0xff]
          %v3290 = vld [vmem:[#allocation8 + $0xd8] sm:$0xff]
          %v3291 = vld [vmem:[#allocation8 + $0xe0] sm:$0xff]
          %v3292 = vld [vmem:[#allocation8 + $0xe8] sm:$0xff]
          %v3293 = vld [vmem:[#allocation8 + $0xf0] sm:$0xff]
          %v3294 = vld [vmem:[#allocation8 + $0xf8] sm:$0xff]
          %v3295 = vld [vmem:[#allocation8 + $0x100] sm:$0xff]
          %v3296 = vld [vmem:[#allocation8 + $0x108] sm:$0xff]
          %v3297 = vld [vmem:[#allocation8 + $0x110] sm:$0xff]
          %v3298 = vld [vmem:[#allocation8 + $0x118] sm:$0xff]
          %v3299 = vld [vmem:[#allocation8 + $0x120] sm:$0xff]
          %v3300 = vld [vmem:[#allocation8 + $0x128] sm:$0xff]
          %v3301 = vld [vmem:[#allocation8 + $0x130] sm:$0xff]
          %v3302 = vld [vmem:[#allocation8 + $0x138] sm:$0xff]
          %v3303 = vld [vmem:[#allocation8 + $0x140] sm:$0xff]
          %v3304 = vld [vmem:[#allocation8 + $0x148] sm:$0xff]
          %v3305 = vld [vmem:[#allocation8 + $0x150] sm:$0xff]
          %v3306 = vld [vmem:[#allocation8 + $0x158] sm:$0xff]
          %v3307 = vld [vmem:[#allocation8 + $0x160] sm:$0xff]
          %v3308 = vld [vmem:[#allocation8 + $0x168] sm:$0xff]
          %v3309 = vld [vmem:[#allocation8 + $0x170] sm:$0xff]
          %v3310 = vld [vmem:[#allocation8 + $0x178] sm:$0xff]
          %v3311 = vld [vmem:[#allocation8 + $0x180] sm:$0xff]
          %v3312 = vld [vmem:[#allocation8 + $0x188] sm:$0xff]
          %v3313 = vld [vmem:[#allocation8 + $0x190] sm:$0xff]
          %v3314 = vld [vmem:[#allocation8 + $0x198] sm:$0xff]
          %v3315 = vld [vmem:[#allocation8 + $0x1a0] sm:$0xff]
          %v3316 = vld [vmem:[#allocation8 + $0x1a8] sm:$0xff]
          %v3317 = vld [vmem:[#allocation8 + $0x1b0] sm:$0xff]
          %v3318 = vld [vmem:[#allocation8 + $0x1b8] sm:$0xff]
          %v3319 = vld [vmem:[#allocation8 + $0x1c0] sm:$0xff]
          %v3320 = vld [vmem:[#allocation8 + $0x1c8] sm:$0xff]
          %v3321 = vld [vmem:[#allocation8 + $0x1d0] sm:$0xff]
          %v3322 = vld [vmem:[#allocation8 + $0x1d8] sm:$0xff]
          %v3323 = vld [vmem:[#allocation8 + $0x1e0] sm:$0xff]
          %v3324 = vld [vmem:[#allocation8 + $0x1e8] sm:$0xff]
          %v3325 = vld [vmem:[#allocation8 + $0x1f0] sm:$0xff]
          %v3326 = vld [vmem:[#allocation8 + $0x1f8] sm:$0xff]
          %v3327 = vld [vmem:[#allocation9] sm:$0x1]
          %v3329 = vlaneseq
          %v3330 = vshrl.u32 %v3329, 7
          %v3331 = vsub.s32 0, %v3330
          %v3332 = vrot.slane %v3327, %v3331
          %v3335 = vcombine.high %v3262, %v3262
          %v3337 = vunpack.c.l.s4 1983009808
          %v3338 = vunpack.c.0.s8 %v3337
          %v3339 = vlaneseq
          %v3340 = vshrl.u32 %v3339, 7
          %v3341 = vsub.s32 %v3338, %v3340
          %v3342 = vrot.slane %v3262, %v3341
          %v3344 = vunpack.c.l.s4 1983009808
          %v3345 = vunpack.c.0.s8 %v3344
          %v3346 = vlaneseq
          %v3347 = vshrl.u32 %v3346, 7
          %v3348 = vsub.s32 %v3345, %v3347
          %v3349 = vrot.slane %v3335, %v3348
          %v3350 = vcombine.high %v3342, %v3342
          %v3351 = vcombine.high %v3349, %v3349
          %3356 = vmatprep.subr.mxu0 0.0
          %3357 = vmatpush1.msra.mxu0 %v3263
          %3358 = vmatprep.subr.mxu0 0.0
          %3359 = vmatpush1.msra.mxu0 %v3264
          %3360 = vmatprep.subr.mxu0 0.0
          %3361 = vmatpush1.msra.mxu0 %v3265
          %3362 = vmatprep.subr.mxu0 0.0
          %3363 = vmatpush1.msra.mxu0 %v3266
          %3364 = vmatprep.subr.mxu0 0.0
          %3365 = vmatpush1.msra.mxu0 %v3267
          %3366 = vmatprep.subr.mxu0 0.0
          %3367 = vmatpush1.msra.mxu0 %v3268
          %3368 = vmatprep.subr.mxu0 0.0
          %3369 = vmatpush1.msra.mxu0 %v3269
          %3370 = vmatprep.subr.mxu0 0.0
          %3371 = vmatpush1.msra.mxu0 %v3270
          %3372 = vmatprep.subr.mxu0 0.0
          %3373 = vmatpush1.msra.mxu0 %v3271
          %3374 = vmatprep.subr.mxu0 0.0
          %3375 = vmatpush1.msra.mxu0 %v3272
          %3376 = vmatprep.subr.mxu0 0.0
          %3377 = vmatpush1.msra.mxu0 %v3273
          %3378 = vmatprep.subr.mxu0 0.0
          %3379 = vmatpush1.msra.mxu0 %v3274
          %3380 = vmatprep.subr.mxu0 0.0
          %3381 = vmatpush1.msra.mxu0 %v3275
          %3382 = vmatprep.subr.mxu0 0.0
          %3383 = vmatpush1.msra.mxu0 %v3276
          %3384 = vmatprep.subr.mxu0 0.0
          %3385 = vmatpush1.msra.mxu0 %v3277
          %3386 = vmatprep.subr.mxu0 0.0
          %3387 = vmatpush1.msra.mxu0 %v3278
          %3388 = vmatprep.subr.mxu0 0.0
          %3389 = vmatpush1.msra.mxu0 %v3279
          %3390 = vmatprep.subr.mxu0 0.0
          %3391 = vmatpush1.msra.mxu0 %v3280
          %3392 = vmatprep.subr.mxu0 0.0
          %3393 = vmatpush1.msra.mxu0 %v3281
          %3394 = vmatprep.subr.mxu0 0.0
          %3395 = vmatpush1.msra.mxu0 %v3282
          %3396 = vmatprep.subr.mxu0 0.0
          %3397 = vmatpush1.msra.mxu0 %v3283
          %3398 = vmatprep.subr.mxu0 0.0
          %3399 = vmatpush1.msra.mxu0 %v3284
          %3400 = vmatprep.subr.mxu0 0.0
          %3401 = vmatpush1.msra.mxu0 %v3285
          %3402 = vmatprep.subr.mxu0 0.0
          %3403 = vmatpush1.msra.mxu0 %v3286
          %3404 = vmatprep.subr.mxu0 0.0
          %3405 = vmatpush1.msra.mxu0 %v3287
          %3406 = vmatprep.subr.mxu0 0.0
          %3407 = vmatpush1.msra.mxu0 %v3288
          %3408 = vmatprep.subr.mxu0 0.0
          %3409 = vmatpush1.msra.mxu0 %v3289
          %3410 = vmatprep.subr.mxu0 0.0
          %3411 = vmatpush1.msra.mxu0 %v3290
          %3412 = vmatprep.subr.mxu0 0.0
          %3413 = vmatpush1.msra.mxu0 %v3291
          %3414 = vmatprep.subr.mxu0 0.0
          %3415 = vmatpush1.msra.mxu0 %v3292
          %3416 = vmatprep.subr.mxu0 0.0
          %3417 = vmatpush1.msra.mxu0 %v3293
          %3418 = vmatprep.subr.mxu0 0.0
          %3419 = vmatpush1.msra.mxu0 %v3294
          %3420 = vmatprep.mubr.f32.mxu0 %v3350
          %3421 = vmatmul.mubr.f32.gmra.mrb[0].mxu0 %v3342
          %v3422 = vpop.f32.mrb[0].mxu0
          %v3423 = vadd.f32 %v3332, %v3422
          %v3424 = vpop.f32.mrb[0].mxu0
          %3425 = vdwg.mxu0
          %3426 = vmatprep.subr.mxu0 0.0
          %3427 = vmatpush1.msra.mxu0 %v3295
          %3428 = vmatprep.subr.mxu0 0.0
          %3429 = vmatpush1.msra.mxu0 %v3296
          %3430 = vmatprep.subr.mxu0 0.0
          %3431 = vmatpush1.msra.mxu0 %v3297
          %3432 = vmatprep.subr.mxu0 0.0
          %3433 = vmatpush1.msra.mxu0 %v3298
          %3434 = vmatprep.subr.mxu0 0.0
          %3435 = vmatpush1.msra.mxu0 %v3299
          %3436 = vmatprep.subr.mxu0 0.0
          %3437 = vmatpush1.msra.mxu0 %v3300
          %3438 = vmatprep.subr.mxu0 0.0
          %3439 = vmatpush1.msra.mxu0 %v3301
          %3440 = vmatprep.subr.mxu0 0.0
          %3441 = vmatpush1.msra.mxu0 %v3302
          %3442 = vmatprep.subr.mxu0 0.0
          %3443 = vmatpush1.msra.mxu0 %v3303
          %3444 = vmatprep.subr.mxu0 0.0
          %3445 = vmatpush1.msra.mxu0 %v3304
          %3446 = vmatprep.subr.mxu0 0.0
          %3447 = vmatpush1.msra.mxu0 %v3305
          %3448 = vmatprep.subr.mxu0 0.0
          %3449 = vmatpush1.msra.mxu0 %v3306
          %3450 = vmatprep.subr.mxu0 0.0
          %3451 = vmatpush1.msra.mxu0 %v3307
          %3452 = vmatprep.subr.mxu0 0.0
          %3453 = vmatpush1.msra.mxu0 %v3308
          %3454 = vmatprep.subr.mxu0 0.0
          %3455 = vmatpush1.msra.mxu0 %v3309
          %3456 = vmatprep.subr.mxu0 0.0
          %3457 = vmatpush1.msra.mxu0 %v3310
          %3458 = vmatprep.subr.mxu0 0.0
          %3459 = vmatpush1.msra.mxu0 %v3311
          %3460 = vmatprep.subr.mxu0 0.0
          %3461 = vmatpush1.msra.mxu0 %v3312
          %3462 = vmatprep.subr.mxu0 0.0
          %3463 = vmatpush1.msra.mxu0 %v3313
          %3464 = vmatprep.subr.mxu0 0.0
          %3465 = vmatpush1.msra.mxu0 %v3314
          %3466 = vmatprep.subr.mxu0 0.0
          %3467 = vmatpush1.msra.mxu0 %v3315
          %3468 = vmatprep.subr.mxu0 0.0
          %3469 = vmatpush1.msra.mxu0 %v3316
          %3470 = vmatprep.subr.mxu0 0.0
          %3471 = vmatpush1.msra.mxu0 %v3317
          %3472 = vmatprep.subr.mxu0 0.0
          %3473 = vmatpush1.msra.mxu0 %v3318
          %3474 = vmatprep.subr.mxu0 0.0
          %3475 = vmatpush1.msra.mxu0 %v3319
          %3476 = vmatprep.subr.mxu0 0.0
          %3477 = vmatpush1.msra.mxu0 %v3320
          %3478 = vmatprep.subr.mxu0 0.0
          %3479 = vmatpush1.msra.mxu0 %v3321
          %3480 = vmatprep.subr.mxu0 0.0
          %3481 = vmatpush1.msra.mxu0 %v3322
          %3482 = vmatprep.subr.mxu0 0.0
          %3483 = vmatpush1.msra.mxu0 %v3323
          %3484 = vmatprep.subr.mxu0 0.0
          %3485 = vmatpush1.msra.mxu0 %v3324
          %3486 = vmatprep.subr.mxu0 0.0
          %3487 = vmatpush1.msra.mxu0 %v3325
          %3488 = vmatprep.subr.mxu0 0.0
          %3489 = vmatpush1.msra.mxu0 %v3326
          %3490 = vmatprep.mubr.f32.mxu0 %v3351
          %3491 = vmatmul.mubr.f32.gmra.mrb[0].mxu0 %v3349
          %v3492 = vpop.f32.mrb[0].mxu0
          %v3493 = vadd.f32 %v3423, %v3492
          %v3494 = vpop.f32.mrb[0].mxu0
          %3495 = vdwg.mxu0
          %v3496 = vld [vmem:[#allocation11] sm:$0xff]
          %v3497 = vld [vmem:[#allocation11 + $0x8] sm:$0xff]
          %v3498 = vld [vmem:[#allocation11 + $0x10] sm:$0xff]
          %v3499 = vld [vmem:[#allocation11 + $0x18] sm:$0xff]
          %v3500 = vld [vmem:[#allocation11 + $0x20] sm:$0xff]
          %v3501 = vld [vmem:[#allocation11 + $0x28] sm:$0xff]
          %v3502 = vld [vmem:[#allocation11 + $0x30] sm:$0xff]
          %v3503 = vld [vmem:[#allocation11 + $0x38] sm:$0xff]
          %v3504 = vld [vmem:[#allocation11 + $0x40] sm:$0xff]
          %v3505 = vld [vmem:[#allocation11 + $0x48] sm:$0xff]
          %v3506 = vld [vmem:[#allocation11 + $0x50] sm:$0xff]
          %v3507 = vld [vmem:[#allocation11 + $0x58] sm:$0xff]
          %v3508 = vld [vmem:[#allocation11 + $0x60] sm:$0xff]
          %v3509 = vld [vmem:[#allocation11 + $0x68] sm:$0xff]
          %v3510 = vld [vmem:[#allocation11 + $0x70] sm:$0xff]
          %v3511 = vld [vmem:[#allocation11 + $0x78] sm:$0xff]
          %v3512 = vld [vmem:[#allocation12] sm:$0x1]
          %v3514 = vlaneseq
          %v3515 = vshrl.u32 %v3514, 7
          %v3516 = vsub.s32 0, %v3515
          %v3517 = vrot.slane %v3512, %v3516
          %3519 = vmatprep.subr.mxu0 0.0
          %3520 = vmatpush1.msra.mxu0 %v3496
          %3521 = vmatprep.subr.mxu0 0.0
          %3522 = vmatpush1.msra.mxu0 %v3497
          %3523 = vmatprep.subr.mxu0 0.0
          %3524 = vmatpush1.msra.mxu0 %v3498
          %3525 = vmatprep.subr.mxu0 0.0
          %3526 = vmatpush1.msra.mxu0 %v3499
          %3527 = vmatprep.subr.mxu0 0.0
          %3528 = vmatpush1.msra.mxu0 %v3500
          %3529 = vmatprep.subr.mxu0 0.0
          %3530 = vmatpush1.msra.mxu0 %v3501
          %3531 = vmatprep.subr.mxu0 0.0
          %3532 = vmatpush1.msra.mxu0 %v3502
          %3533 = vmatprep.subr.mxu0 0.0
          %3534 = vmatpush1.msra.mxu0 %v3503
          %3535 = vmatprep.subr.mxu0 0.0
          %3536 = vmatpush1.msra.mxu0 %v3504
          %3537 = vmatprep.subr.mxu0 0.0
          %3538 = vmatpush1.msra.mxu0 %v3505
          %3539 = vmatprep.subr.mxu0 0.0
          %3540 = vmatpush1.msra.mxu0 %v3506
          %3541 = vmatprep.subr.mxu0 0.0
          %3542 = vmatpush1.msra.mxu0 %v3507
          %3543 = vmatprep.subr.mxu0 0.0
          %3544 = vmatpush1.msra.mxu0 %v3508
          %3545 = vmatprep.subr.mxu0 0.0
          %3546 = vmatpush1.msra.mxu0 %v3509
          %3547 = vmatprep.subr.mxu0 0.0
          %3548 = vmatpush1.msra.mxu0 %v3510
          %3549 = vmatprep.subr.mxu0 0.0
          %3550 = vmatpush1.msra.mxu0 %v3511
          %3551 = vmatprep.subr.mxu0 0.0
          %3552 = vmatpush1.msra.mxu0 0.0
          %3553 = vmatprep.subr.mxu0 0.0
          %3554 = vmatpush1.msra.mxu0 0.0
          %3555 = vmatprep.subr.mxu0 0.0
          %3556 = vmatpush1.msra.mxu0 0.0
          %3557 = vmatprep.subr.mxu0 0.0
          %3558 = vmatpush1.msra.mxu0 0.0
          %3559 = vmatprep.subr.mxu0 0.0
          %3560 = vmatpush1.msra.mxu0 0.0
          %3561 = vmatprep.subr.mxu0 0.0
          %3562 = vmatpush1.msra.mxu0 0.0
          %3563 = vmatprep.subr.mxu0 0.0
          %3564 = vmatpush1.msra.mxu0 0.0
          %3565 = vmatprep.subr.mxu0 0.0
          %3566 = vmatpush1.msra.mxu0 0.0
          %3567 = vmatprep.subr.mxu0 0.0
          %3568 = vmatpush1.msra.mxu0 0.0
          %3569 = vmatprep.subr.mxu0 0.0
          %3570 = vmatpush1.msra.mxu0 0.0
          %3571 = vmatprep.subr.mxu0 0.0
          %3572 = vmatpush1.msra.mxu0 0.0
          %3573 = vmatprep.subr.mxu0 0.0
          %3574 = vmatpush1.msra.mxu0 0.0
          %3575 = vmatprep.subr.mxu0 0.0
          %3576 = vmatpush1.msra.mxu0 0.0
          %3577 = vmatprep.subr.mxu0 0.0
          %3578 = vmatpush1.msra.mxu0 0.0
          %3579 = vmatprep.subr.mxu0 0.0
          %3580 = vmatpush1.msra.mxu0 0.0
          %3581 = vmatprep.subr.mxu0 0.0
          %3582 = vmatpush1.msra.mxu0 0.0
          %3583 = vmatprep.mubr.f32.mxu0 0.0
          %3584 = vmatmul.mubr.f32.gmra.mrb[0].mxu0 %v3493
          %v3585 = vpop.f32.mrb[0].mxu0
          %v3586 = vadd.f32 %v3517, %v3585
          %v3587 = vpop.f32.mrb[0].mxu0
          %3588 = vdwg.mxu0
          %3589 = vst [vmem:[#allocation14] sm:$0x3] %v3586
        $region80: #{simple_mlp_forward.1} parent=47 // pred_fallthru
          _
        // Predicated region
        $region81: #{simple_mlp_forward.1} parent=47 // pred_check
          %p3590 = pneg %p195
        $region82: #{simple_mlp_forward.1} parent=47 // pred_check_branch
          %3592 = sbr.rel (%p3590) target = $region84
        $region83: #{simple_mlp_forward.1} parent=47 // pred_region
          %s3594 = ssub.s32 32, 32
          %3595 = vsyncadd [#allocation5], %s3594
          %s3597 = sshll.u32 [#allocation14], 4
          %s3598 = int_to_ptr.vmem [resolvable:$true] %s3597
          %3600 = dma.vmem_to_hbm [thread:$0]  %s3598, 32, %s7, [#allocation5]
        $region84: #{simple_mlp_forward.1} parent=47 // pred_fallthru
          _
        // Predicated region
        $region85: #{simple_mlp_forward.1} parent=47 // pred_check
          %p3601 = pneg %p195
        $region86: #{simple_mlp_forward.1} parent=47 // pred_check_branch
          %3603 = sbr.rel (%p3601) target = $region88
        $region87: #{simple_mlp_forward.1} parent=47 // pred_region
          %3604 = dma.done [#allocation5], 32
        $region88: #{simple_mlp_forward.1} parent=47 // pred_fallthru
          _
      $region48: #{simple_mlp_forward.1} parent=5 // pred_fallthru
        _
      %p3605 = scmp.le.s32.totalorder 2, %s20
      // Predicated region
      $region89: #{simple_mlp_forward.1} parent=5 // pred_check
        %p3606 = pneg %p3605
      $region90: #{simple_mlp_forward.1} parent=5 // pred_check_branch
        %3608 = sbr.rel (%p3606) target = $region92
      $region91: #{simple_mlp_forward.1} parent=5 // pred_region
        %s3609 = ssub.s32 %s20, 2
      $region92: #{simple_mlp_forward.1} parent=5 // pred_fallthru
        _
    $region6: #{simple_mlp_forward.1} parent=1 // loop_footer
      %s24 = sadd.s32 1, %s20
    $region7: #{simple_mlp_forward.1} parent=1 // loop_footer_branch
      %19 = sbr.rel target = $region3
    $region8: #{simple_mlp_forward.1} parent=1 // loop_exit
      _
    %3610 = vsyncpa [#allocation4], 1
    %s3611 = scalar_lea.sflag [#allocation4], 1
    %3612 = vsyncpa %s3611, 1
    %3613 = vsyncpa [#allocation7], 1
    %3614 = vsyncpa [#allocation10], 1
    %3615 = vsyncpa [#allocation13], 1
    %3616 = vsyncpa [#allocation5], 1
    %s3617 = scalar_lea.sflag [#allocation5], 1
    %3618 = vsyncpa %s3617, 1

</llo_original>
